<compile_context>
chip_gen: v6e
topology: v6e:2x2x1
jax: 0.10.0
libtpu: 0.0.40
codegen_flags: <defaults>
</compile_context>

<pallas_src>
import numpy as np

import jax
import jax.numpy as jnp
from jax.experimental import pallas as pl
from jax.experimental.pallas import tpu as pltpu

# ----------------------------- configuration --------------------------------
B = 2            # batch
C = 4            # input channels
IMG = 16         # spatial size (H = W)
PATCH = 8        # patch size -> seq_len = (16/8)^2 = 4
HIDDEN = 32      # hidden_dim
FF = 64          # ff_dim
NHEAD = 4        # heads (head_dim = 8)
NLAYER = 2       # encoder layers
NCLASS = 10
SEQ = (IMG // PATCH) ** 2            # 4
S1 = SEQ + 1                         # tokens per image (CLS + patches) = 5
T = B * S1                           # real token rows = 10
TPAD = 16                            # padded token rows (tile friendly)
NFEAT = PATCH * PATCH * C            # 256
DH = HIDDEN // NHEAD                 # 8
EPS = 1e-5
LOGIT_PAD = 128                      # lane-dense head output width
OUT_ROWS = 8                         # head computed on first 8 (aligned) rows
NEG = -1e30                          # cross-batch attention mask value

# ----------------------- packed parameter buffer layouts --------------------
# Weight buffer (bf16), (W_ROWS, 128); every block starts on a 16-row boundary
# (bf16 sublane tile) and occupies lanes [0:width).
W_PROJ = 0                                     # (NFEAT, HIDDEN)
W_LAYER0 = NFEAT                               # 256
W_QKV, W_WO, W_W1, W_W2 = 0, HIDDEN, 2 * HIDDEN, 3 * HIDDEN   # per-layer offsets
W_LSTRIDE = 3 * HIDDEN + FF                    # 160 rows per layer
W_HEAD = W_LAYER0 + NLAYER * W_LSTRIDE         # 576
W_HW1, W_HW2 = 0, HIDDEN
W_ROWS = W_HEAD + HIDDEN + FF                  # 672

# Vector/constant buffer (f32), (V_ROWS, 128); blocks start on 8-row boundaries.
V_BIAS = 0                                     # (TPAD, HIDDEN) folded CLS+pos+proj bias
V_MASK = TPAD                                  # (TPAD, TPAD) additive attention mask
V_LAYER0 = 2 * TPAD                            # 32; 8 rows per layer:
#   +0 ln1_w, +1 ln1_b, +2 bqkv, +3 bo, +4 ln2_w, +5 ln2_b, +6 b1, +7 b2
V_HEAD = V_LAYER0 + NLAYER * 8                 # 48; +0 ln_w, +1 ln_b, +2 hb1, +3 hb2
V_ROWS = V_HEAD + 8                            # 56


def _gelu_exact(x):
    # PyTorch F.gelu(approximate='none'): 0.5*x*(1+erf(x/sqrt(2)))
    return 0.5 * x * (1.0 + jax.lax.erf(x * 0.7071067811865476))


def _layer_norm(v, w, b):
    mu = jnp.mean(v, axis=-1, keepdims=True)
    var = jnp.mean((v - mu) ** 2, axis=-1, keepdims=True)
    return (v - mu) * jax.lax.rsqrt(var + EPS) * w + b


# ------------------------------ fused Pallas kernel --------------------------
def _vit_kernel(x_ref, w_ref, v_ref, o_ref):
    f32 = jnp.float32
    bf16 = jnp.bfloat16

    def wmat(r0, nrows, ncols):          # bf16 weight-slab slice (static view)
        return w_ref[r0:r0 + nrows, 0:ncols]

    def vrow(r, ncols):                  # (1, ncols) f32 vector
        return v_ref[r:r + 1, 0:ncols]

    # ---- patch embedding; CLS token / pos-emb / proj bias folded into slab --
    x = jnp.dot(x_ref[...].astype(bf16), wmat(W_PROJ, NFEAT, HIDDEN),
                preferred_element_type=f32)
    x = x + v_ref[V_BIAS:V_BIAS + TPAD, 0:HIDDEN]                   # (TPAD, D) f32
    mask = v_ref[V_MASK:V_MASK + TPAD, 0:TPAD]                      # (TPAD, TPAD)

    # per-head lane masks (constants; hoisted out of the layer loop)
    lane = jax.lax.broadcasted_iota(jnp.int32, (1, HIDDEN), 1)
    head_sel = [((lane >= hd * DH) & (lane < (hd + 1) * DH)).astype(f32)
                for hd in range(NHEAD)]

    for l in range(NLAYER):
        wb = W_LAYER0 + l * W_LSTRIDE
        vb = V_LAYER0 + l * 8
        ln1w, ln1b = vrow(vb + 0, HIDDEN), vrow(vb + 1, HIDDEN)
        bqkv = vrow(vb + 2, 3 * HIDDEN)
        bo = vrow(vb + 3, HIDDEN)
        ln2w, ln2b = vrow(vb + 4, HIDDEN), vrow(vb + 5, HIDDEN)
        b1 = vrow(vb + 6, FF)
        b2 = vrow(vb + 7, HIDDEN)

        # ---- self-attention (norm_first); 2-D lane-dense formulation -------
        h1 = _layer_norm(x, ln1w, ln1b)
        qkv = jnp.dot(h1.astype(bf16), wmat(wb + W_QKV, HIDDEN, 3 * HIDDEN),
                      preferred_element_type=f32) + bqkv            # (TPAD, 96)
        v_all = qkv[:, 2 * HIDDEN:3 * HIDDEN]                       # (TPAD, 32)
        ctx = jnp.zeros((TPAD, HIDDEN), f32)
        for hd in range(NHEAD):
            lo = hd * DH
            q_h = qkv[:, lo:lo + DH]                                # (TPAD, 8)
            k_h = qkv[:, HIDDEN + lo:HIDDEN + lo + DH]              # (TPAD, 8)
            # 1/sqrt(dh) is folded into the Q weights/bias at pack time.
            s = jax.lax.dot_general(q_h, k_h, (((1,), (1,)), ((), ())),
                                    preferred_element_type=f32) + mask
            s = s - jnp.max(s, axis=-1, keepdims=True)
            p = jnp.exp(s)
            p = p * pl.reciprocal(jnp.sum(p, axis=-1, keepdims=True), approx=True)
            # lane-dense accumulation: keep only this head's output lanes
            ctx = ctx + jnp.dot(p, v_all, preferred_element_type=f32) * head_sel[hd]
        attn = jnp.dot(ctx.astype(bf16), wmat(wb + W_WO, HIDDEN, HIDDEN),
                       preferred_element_type=f32) + bo
        x = x + attn                                   # residual (dropout=identity)

        # ---- feed-forward (norm_first) --------------------------------------
        h2 = _layer_norm(x, ln2w, ln2b)
        ff = jnp.dot(h2.astype(bf16), wmat(wb + W_W1, HIDDEN, FF),
                     preferred_element_type=f32) + b1
        ff = _gelu_exact(ff)
        ff = jnp.dot(ff.astype(bf16), wmat(wb + W_W2, FF, HIDDEN),
                     preferred_element_type=f32) + b2
        x = x + ff                                     # residual (dropout=identity)

    # ---- final LayerNorm + MLP head on the first 8 (aligned) rows ----------
    # CLS tokens live in rows 0..B-1, so logits land in a contiguous corner.
    xh = x[0:OUT_ROWS, :]
    h = _layer_norm(xh, vrow(V_HEAD + 0, HIDDEN), vrow(V_HEAD + 1, HIDDEN))
    h = jnp.dot(h.astype(bf16), wmat(W_HEAD + W_HW1, HIDDEN, FF),
                preferred_element_type=f32) + vrow(V_HEAD + 2, FF)
    h = _gelu_exact(h)                                 # dropout = identity
    # lane-dense (8, 128) output slab; hw2 zero-padded beyond NCLASS
    o_ref[...] = jnp.dot(h.astype(bf16), wmat(W_HEAD + W_HW2, FF, LOGIT_PAD),
                         preferred_element_type=f32) + vrow(V_HEAD + 3, LOGIT_PAD)


def _full_spec(shape):
    nd = len(shape)
    return pl.BlockSpec(shape, lambda i, _nd=nd: (0,) * _nd)


def vit_fused_pallas(x_in, wbuf, vbuf):
    return pl.pallas_call(
        _vit_kernel,
        out_shape=jax.ShapeDtypeStruct((OUT_ROWS, LOGIT_PAD), jnp.float32),
        grid=(1,),
        in_specs=[_full_spec(x_in.shape), _full_spec(wbuf.shape),
                  _full_spec(vbuf.shape)],
        out_specs=_full_spec((OUT_ROWS, LOGIT_PAD)),
        compiler_params=pltpu.CompilerParams(dimension_semantics=("arbitrary",)),
    )(x_in, wbuf, vbuf)


# --------------------- one-time (hoisted) parameter packing ------------------
def pack_params(params):
    """Fold the 1/sqrt(dh) scale into the Q projection, fold CLS/pos-emb/proj
    bias into one additive slab, build the block-diagonal batch attention
    mask, and pack everything into two contiguous buffers (bf16 weights +
    f32 vectors/constants).  Called once, outside the training step."""
    scale = 1.0 / (DH ** 0.5)

    wbuf = jnp.zeros((W_ROWS, 128), jnp.float32)
    vbuf = jnp.zeros((V_ROWS, 128), jnp.float32)

    def put(buf, r, mat):
        rows, cols = mat.shape
        return buf.at[r:r + rows, 0:cols].set(mat)

    wbuf = put(wbuf, W_PROJ, params["proj_w"])

    for l, lp in enumerate(params["layers"]):
        (ln1w, ln1b, wqkv, bqkv, wo, bo, ln2w, ln2b, w1, b1, w2, b2) = lp
        wqkv = wqkv.at[:, 0:HIDDEN].multiply(scale)     # fold softmax scale into Q
        bqkv = bqkv.at[:, 0:HIDDEN].multiply(scale)
        wb = W_LAYER0 + l * W_LSTRIDE
        wbuf = put(wbuf, wb + W_QKV, wqkv)
        wbuf = put(wbuf, wb + W_WO, wo)
        wbuf = put(wbuf, wb + W_W1, w1)
        wbuf = put(wbuf, wb + W_W2, w2)
        vb = V_LAYER0 + l * 8
        for off, vec in enumerate((ln1w, ln1b, bqkv, bo, ln2w, ln2b, b1, b2)):
            vbuf = put(vbuf, vb + off, vec)

    lnw, lnb, hw1, hb1, hw2, hb2 = params["head"]
    hw2p = jnp.zeros((FF, LOGIT_PAD), jnp.float32).at[:, :NCLASS].set(hw2)
    hb2p = jnp.zeros((1, LOGIT_PAD), jnp.float32).at[:, :NCLASS].set(hb2)
    wbuf = put(wbuf, W_HEAD + W_HW1, hw1)
    wbuf = put(wbuf, W_HEAD + W_HW2, hw2p)
    for off, vec in enumerate((lnw, lnb, hb1, hb2p)):
        vbuf = put(vbuf, V_HEAD + off, vec)

    # folded additive token bias: CLS rows first, then per-batch patch rows,
    # zeros in padding rows
    cls_bias = params["class_token"] + params["pos_emb"][0:1, :]      # (1, D)
    patch_bias = params["proj_b"] + params["pos_emb"][1:, :]          # (SEQ, D)
    bias_tok = jnp.zeros((TPAD, HIDDEN), jnp.float32)
    bias_tok = bias_tok.at[0:B].set(jnp.tile(cls_bias, (B, 1)))
    bias_tok = bias_tok.at[B:B + B * SEQ].set(jnp.tile(patch_bias, (B, 1)))
    vbuf = vbuf.at[V_BIAS:V_BIAS + TPAD, 0:HIDDEN].set(bias_tok)

    # block-diagonal batch mask (padding rows form their own group -> no NaNs)
    group = np.full((TPAD,), B, dtype=np.int32)
    group[0:B] = np.arange(B)
    group[B:B + B * SEQ] = np.repeat(np.arange(B), SEQ)
    mask = np.where(group[:, None] == group[None, :], 0.0, NEG).astype(np.float32)
    vbuf = vbuf.at[V_MASK:V_MASK + TPAD, 0:TPAD].set(jnp.asarray(mask))

    return wbuf.astype(jnp.bfloat16), vbuf


# ------------------------------ model pieces ---------------------------------
def patch_partition(x, patch):
    b, c, h, w = x.shape
    x = x.reshape(b, c, h // patch, patch, w // patch, patch)
    x = jnp.transpose(x, (0, 2, 4, 3, 5, 1))
    return x.reshape(b, (h // patch) * (w // patch), patch * patch * c)


def init_params(key):
    def nrm(k, shape, scale=0.02):
        return (scale * jax.random.normal(k, shape)).astype(jnp.float32)

    keys = jax.random.split(key, 8 + NLAYER)
    params = {
        "class_token": nrm(keys[0], (1, HIDDEN)),               # Embedding(1, D)
        "pos_emb": nrm(keys[1], (SEQ + 1, HIDDEN)),              # Embedding(S+1, D)
        "proj_w": nrm(keys[2], (NFEAT, HIDDEN)),                 # Linear(F, D), (in,out)
        "proj_b": jnp.zeros((1, HIDDEN), jnp.float32),
        "head": (
            jnp.ones((1, HIDDEN), jnp.float32),                  # final LayerNorm weight
            jnp.zeros((1, HIDDEN), jnp.float32),                 # final LayerNorm bias
            nrm(keys[3], (HIDDEN, FF)),                          # head Linear1 (in,out)
            jnp.zeros((1, FF), jnp.float32),
            nrm(keys[4], (FF, NCLASS)),                          # head Linear2 (in,out)
            jnp.zeros((1, NCLASS), jnp.float32),
        ),
        "layers": [],
    }
    for li in range(NLAYER):
        lk = jax.random.split(keys[8 + li], 4)
        params["layers"].append((
            jnp.ones((1, HIDDEN), jnp.float32),                  # ln1 w
            jnp.zeros((1, HIDDEN), jnp.float32),                 # ln1 b
            nrm(lk[0], (HIDDEN, 3 * HIDDEN)),                    # in_proj (qkv), (in,out)
            jnp.zeros((1, 3 * HIDDEN), jnp.float32),             # in_proj bias
            nrm(lk[1], (HIDDEN, HIDDEN)),                        # out_proj, (in,out)
            jnp.zeros((1, HIDDEN), jnp.float32),
            jnp.ones((1, HIDDEN), jnp.float32),                  # ln2 w
            jnp.zeros((1, HIDDEN), jnp.float32),                 # ln2 b
            nrm(lk[2], (HIDDEN, FF)),                            # ffn linear1, (in,out)
            jnp.zeros((1, FF), jnp.float32),
            nrm(lk[3], (FF, HIDDEN)),                            # ffn linear2, (in,out)
            jnp.zeros((1, HIDDEN), jnp.float32),
        ))
    return params


def vit_forward(images, labels, wbuf, vbuf):
    patches = patch_partition(images, PATCH)                     # (B, SEQ, NFEAT)
    # token rows: [CLS_0, CLS_1, patches_0, patches_1, zero padding]
    x_in = jnp.zeros((TPAD, NFEAT), jnp.float32)
    x_in = x_in.at[B:B + B * SEQ].set(patches.reshape(B * SEQ, NFEAT))

    out = vit_fused_pallas(x_in, wbuf, vbuf)                     # (8, 128)
    logits = out[:B, :NCLASS]                                    # contiguous corner

    # CrossEntropyLoss (mean) + argmax; tiny tensor, kept as JAX glue.
    log_z = jax.scipy.special.logsumexp(logits, axis=1)
    picked = jnp.take_along_axis(logits, labels[:, None], axis=1)[:, 0]
    loss = jnp.mean(log_z - picked)
    preds = jnp.argmax(logits, axis=1)
    return loss, preds


# ---------------------------------- main -------------------------------------
if __name__ == "__main__":
    key = jax.random.PRNGKey(0)
    kp, kx, kl = jax.random.split(key, 3)
    params = init_params(kp)
    wbuf, vbuf = pack_params(params)          # hoisted one-time parameter prep
    images = jax.random.normal(kx, (B, C, IMG, IMG), dtype=jnp.float32)   # NCHW
    labels = jax.random.randint(kl, (B,), 0, NCLASS, dtype=jnp.int32)

    loss, preds = jax.jit(vit_forward)(images, labels, wbuf, vbuf)
    jax.block_until_ready((loss, preds))
    # TODO(synk): dropout layers are treated as identity (eval-mode semantics).
    print("KERNEL_OK")
</pallas_src>

<mosaic_0001>
module attributes {stable_mosaic.version = 11 : i64} {
  func.func @_vit_kernel(%arg0: i32, %arg1: memref<16x256xf32, #tpu.memory_space<vmem>>, %arg2: memref<672x128xbf16, #tpu.memory_space<vmem>>, %arg3: memref<56x128xf32, #tpu.memory_space<vmem>>, %arg4: memref<8x128xf32, #tpu.memory_space<vmem>>) attributes {dimension_semantics = [#tpu.dimension_semantics<arbitrary>], iteration_bounds = array<i64: 1>, scalar_prefetch = 0 : i64, scratch_operands = 0 : i64, tpu.core_type = #tpu.core_type<tc>, window_params = [{pipeline_mode = #tpu.pipeline_mode<synchronous>, transform_indices = @transform_0, window_bounds = array<i64: 16, 256>}, {pipeline_mode = #tpu.pipeline_mode<synchronous>, transform_indices = @transform_1, window_bounds = array<i64: 672, 128>}, {pipeline_mode = #tpu.pipeline_mode<synchronous>, transform_indices = @transform_2, window_bounds = array<i64: 56, 128>}, {pipeline_mode = #tpu.pipeline_mode<synchronous>, transform_indices = @transform_3, window_bounds = array<i64: 8, 128>}]} {
    %c0 = arith.constant 0 : index
    %c0_0 = arith.constant 0 : index
    %0 = vector.load %arg1[%c0, %c0_0] : memref<16x256xf32, #tpu.memory_space<vmem>>, vector<16x256xf32>
    %1 = arith.truncf %0 : vector<16x256xf32> to vector<16x256xbf16>
    %c0_1 = arith.constant 0 : index
    %c0_2 = arith.constant 0 : index
    %2 = vector.load %arg2[%c0_1, %c0_2] : memref<672x128xbf16, #tpu.memory_space<vmem>>, vector<256x32xbf16>
    %cst = arith.constant dense<0.000000e+00> : vector<16x32xf32>
    %3 = tpu.matmul %1, %2, %cst {dimension_numbers = #tpu.dot_dimension_numbers<[1], [0], [0], [1], [0, 0, 1, 1], [], []>} : vector<16x256xbf16>, vector<256x32xbf16>, vector<16x32xf32> -> vector<16x32xf32>
    %c0_3 = arith.constant 0 : index
    %c0_4 = arith.constant 0 : index
    %4 = vector.load %arg3[%c0_3, %c0_4] : memref<56x128xf32, #tpu.memory_space<vmem>>, vector<16x32xf32>
    %5 = arith.addf %3, %4 : vector<16x32xf32>
    %c16 = arith.constant 16 : index
    %c0_5 = arith.constant 0 : index
    %6 = vector.load %arg3[%c16, %c0_5] : memref<56x128xf32, #tpu.memory_space<vmem>>, vector<16x16xf32>
    %7 = tpu.iota {dimensions = array<i32: 1>} : vector<1x32xi32>
    %c0_i32 = arith.constant 0 : i32
    %8 = vector.broadcast %c0_i32 : i32 to vector<1x32xi32>
    %9 = arith.cmpi sge, %7, %8 : vector<1x32xi32>
    %c8_i32 = arith.constant 8 : i32
    %10 = vector.broadcast %c8_i32 : i32 to vector<1x32xi32>
    %11 = arith.cmpi slt, %7, %10 : vector<1x32xi32>
    %12 = arith.andi %9, %11 : vector<1x32xi1>
    %13 = arith.extui %12 : vector<1x32xi1> to vector<1x32xi32>
    %14 = arith.sitofp %13 : vector<1x32xi32> to vector<1x32xf32>
    %c8_i32_6 = arith.constant 8 : i32
    %15 = vector.broadcast %c8_i32_6 : i32 to vector<1x32xi32>
    %16 = arith.cmpi sge, %7, %15 : vector<1x32xi32>
    %c16_i32 = arith.constant 16 : i32
    %17 = vector.broadcast %c16_i32 : i32 to vector<1x32xi32>
    %18 = arith.cmpi slt, %7, %17 : vector<1x32xi32>
    %19 = arith.andi %16, %18 : vector<1x32xi1>
    %20 = arith.extui %19 : vector<1x32xi1> to vector<1x32xi32>
    %21 = arith.sitofp %20 : vector<1x32xi32> to vector<1x32xf32>
    %c16_i32_7 = arith.constant 16 : i32
    %22 = vector.broadcast %c16_i32_7 : i32 to vector<1x32xi32>
    %23 = arith.cmpi sge, %7, %22 : vector<1x32xi32>
    %c24_i32 = arith.constant 24 : i32
    %24 = vector.broadcast %c24_i32 : i32 to vector<1x32xi32>
    %25 = arith.cmpi slt, %7, %24 : vector<1x32xi32>
    %26 = arith.andi %23, %25 : vector<1x32xi1>
    %27 = arith.extui %26 : vector<1x32xi1> to vector<1x32xi32>
    %28 = arith.sitofp %27 : vector<1x32xi32> to vector<1x32xf32>
    %c24_i32_8 = arith.constant 24 : i32
    %29 = vector.broadcast %c24_i32_8 : i32 to vector<1x32xi32>
    %30 = arith.cmpi sge, %7, %29 : vector<1x32xi32>
    %c32_i32 = arith.constant 32 : i32
    %31 = vector.broadcast %c32_i32 : i32 to vector<1x32xi32>
    %32 = arith.cmpi slt, %7, %31 : vector<1x32xi32>
    %33 = arith.andi %30, %32 : vector<1x32xi1>
    %34 = arith.extui %33 : vector<1x32xi1> to vector<1x32xi32>
    %35 = arith.sitofp %34 : vector<1x32xi32> to vector<1x32xf32>
    %c32 = arith.constant 32 : index
    %c0_9 = arith.constant 0 : index
    %36 = vector.load %arg3[%c32, %c0_9] : memref<56x128xf32, #tpu.memory_space<vmem>>, vector<1x32xf32>
    %c33 = arith.constant 33 : index
    %c0_10 = arith.constant 0 : index
    %37 = vector.load %arg3[%c33, %c0_10] : memref<56x128xf32, #tpu.memory_space<vmem>>, vector<1x32xf32>
    %c34 = arith.constant 34 : index
    %c0_11 = arith.constant 0 : index
    %38 = vector.load %arg3[%c34, %c0_11] : memref<56x128xf32, #tpu.memory_space<vmem>>, vector<1x96xf32>
    %c35 = arith.constant 35 : index
    %c0_12 = arith.constant 0 : index
    %39 = vector.load %arg3[%c35, %c0_12] : memref<56x128xf32, #tpu.memory_space<vmem>>, vector<1x32xf32>
    %c36 = arith.constant 36 : index
    %c0_13 = arith.constant 0 : index
    %40 = vector.load %arg3[%c36, %c0_13] : memref<56x128xf32, #tpu.memory_space<vmem>>, vector<1x32xf32>
    %c37 = arith.constant 37 : index
    %c0_14 = arith.constant 0 : index
    %41 = vector.load %arg3[%c37, %c0_14] : memref<56x128xf32, #tpu.memory_space<vmem>>, vector<1x32xf32>
    %c38 = arith.constant 38 : index
    %c0_15 = arith.constant 0 : index
    %42 = vector.load %arg3[%c38, %c0_15] : memref<56x128xf32, #tpu.memory_space<vmem>>, vector<1x64xf32>
    %c39 = arith.constant 39 : index
    %c0_16 = arith.constant 0 : index
    %43 = vector.load %arg3[%c39, %c0_16] : memref<56x128xf32, #tpu.memory_space<vmem>>, vector<1x32xf32>
    %cst_17 = arith.constant dense<0.000000e+00> : vector<16xf32>
    %44 = vector.multi_reduction <add>, %5, %cst_17 [1] : vector<16x32xf32> to vector<16xf32>
    %45 = vector.shape_cast %44 : vector<16xf32> to vector<16x1xf32>
    %cst_18 = arith.constant 3.200000e+01 : f32
    %46 = vector.broadcast %cst_18 : f32 to vector<16x1xf32>
    %47 = arith.divf %45, %46 : vector<16x1xf32>
    %48 = vector.broadcast %47 : vector<16x1xf32> to vector<16x32xf32>
    %49 = arith.subf %5, %48 : vector<16x32xf32>
    %50 = arith.mulf %49, %49 : vector<16x32xf32>
    %cst_19 = arith.constant dense<0.000000e+00> : vector<16xf32>
    %51 = vector.multi_reduction <add>, %50, %cst_19 [1] : vector<16x32xf32> to vector<16xf32>
    %52 = vector.shape_cast %51 : vector<16xf32> to vector<16x1xf32>
    %cst_20 = arith.constant 3.200000e+01 : f32
    %53 = vector.broadcast %cst_20 : f32 to vector<16x1xf32>
    %54 = arith.divf %52, %53 : vector<16x1xf32>
    %55 = vector.broadcast %47 : vector<16x1xf32> to vector<16x32xf32>
    %56 = arith.subf %5, %55 : vector<16x32xf32>
    %cst_21 = arith.constant 9.99999974E-6 : f32
    %57 = vector.broadcast %cst_21 : f32 to vector<16x1xf32>
    %58 = arith.addf %54, %57 : vector<16x1xf32>
    %59 = math.rsqrt %58 : vector<16x1xf32>
    %60 = vector.broadcast %59 : vector<16x1xf32> to vector<16x32xf32>
    %61 = arith.mulf %56, %60 : vector<16x32xf32>
    %62 = vector.broadcast %36 : vector<1x32xf32> to vector<16x32xf32>
    %63 = arith.mulf %61, %62 : vector<16x32xf32>
    %64 = vector.broadcast %37 : vector<1x32xf32> to vector<16x32xf32>
    %65 = arith.addf %63, %64 : vector<16x32xf32>
    %66 = arith.truncf %65 : vector<16x32xf32> to vector<16x32xbf16>
    %c256 = arith.constant 256 : index
    %c0_22 = arith.constant 0 : index
    %67 = vector.load %arg2[%c256, %c0_22] : memref<672x128xbf16, #tpu.memory_space<vmem>>, vector<32x96xbf16>
    %cst_23 = arith.constant dense<0.000000e+00> : vector<16x96xf32>
    %68 = tpu.matmul %66, %67, %cst_23 {dimension_numbers = #tpu.dot_dimension_numbers<[1], [0], [0], [1], [0, 0, 1, 1], [], []>} : vector<16x32xbf16>, vector<32x96xbf16>, vector<16x96xf32> -> vector<16x96xf32>
    %69 = vector.broadcast %38 : vector<1x96xf32> to vector<16x96xf32>
    %70 = arith.addf %68, %69 : vector<16x96xf32>
    %71 = vector.extract_strided_slice %70 {offsets = [0, 64], sizes = [16, 32], strides = [1, 1]} : vector<16x96xf32> to vector<16x32xf32>
    %cst_24 = arith.constant 0.000000e+00 : f32
    %72 = vector.broadcast %cst_24 : f32 to vector<16x32xf32>
    %73 = vector.extract_strided_slice %70 {offsets = [0, 0], sizes = [16, 8], strides = [1, 1]} : vector<16x96xf32> to vector<16x8xf32>
    %74 = vector.extract_strided_slice %70 {offsets = [0, 32], sizes = [16, 8], strides = [1, 1]} : vector<16x96xf32> to vector<16x8xf32>
    %cst_25 = arith.constant dense<0.000000e+00> : vector<16x16xf32>
    %75 = tpu.matmul %73, %74, %cst_25 {dimension_numbers = #tpu.dot_dimension_numbers<[1], [1], [0], [0], [0, 0, 1, 0], [], []>} : vector<16x8xf32>, vector<16x8xf32>, vector<16x16xf32> -> vector<16x16xf32>
    %76 = arith.addf %75, %6 : vector<16x16xf32>
    %cst_26 = arith.constant dense<0xFF800000> : vector<16xf32>
    %77 = vector.multi_reduction <maximumf>, %76, %cst_26 [1] : vector<16x16xf32> to vector<16xf32>
    %78 = vector.shape_cast %77 : vector<16xf32> to vector<16x1xf32>
    %79 = vector.broadcast %78 : vector<16x1xf32> to vector<16x16xf32>
    %80 = arith.subf %76, %79 : vector<16x16xf32>
    %81 = math.exp %80 : vector<16x16xf32>
    %cst_27 = arith.constant dense<0.000000e+00> : vector<16xf32>
    %82 = vector.multi_reduction <add>, %81, %cst_27 [1] : vector<16x16xf32> to vector<16xf32>
    %83 = vector.shape_cast %82 : vector<16xf32> to vector<16x1xf32>
    %84 = tpu.reciprocal %83 {approx = true} : vector<16x1xf32> -> vector<16x1xf32>
    %85 = vector.broadcast %84 : vector<16x1xf32> to vector<16x16xf32>
    %86 = arith.mulf %81, %85 : vector<16x16xf32>
    %cst_28 = arith.constant dense<0.000000e+00> : vector<16x32xf32>
    %87 = tpu.matmul %86, %71, %cst_28 {dimension_numbers = #tpu.dot_dimension_numbers<[1], [0], [0], [1], [0, 0, 1, 1], [], []>} : vector<16x16xf32>, vector<16x32xf32>, vector<16x32xf32> -> vector<16x32xf32>
    %88 = vector.broadcast %14 : vector<1x32xf32> to vector<16x32xf32>
    %89 = arith.mulf %87, %88 : vector<16x32xf32>
    %90 = arith.addf %72, %89 : vector<16x32xf32>
    %91 = vector.extract_strided_slice %70 {offsets = [0, 8], sizes = [16, 8], strides = [1, 1]} : vector<16x96xf32> to vector<16x8xf32>
    %92 = vector.extract_strided_slice %70 {offsets = [0, 40], sizes = [16, 8], strides = [1, 1]} : vector<16x96xf32> to vector<16x8xf32>
    %cst_29 = arith.constant dense<0.000000e+00> : vector<16x16xf32>
    %93 = tpu.matmul %91, %92, %cst_29 {dimension_numbers = #tpu.dot_dimension_numbers<[1], [1], [0], [0], [0, 0, 1, 0], [], []>} : vector<16x8xf32>, vector<16x8xf32>, vector<16x16xf32> -> vector<16x16xf32>
    %94 = arith.addf %93, %6 : vector<16x16xf32>
    %cst_30 = arith.constant dense<0xFF800000> : vector<16xf32>
    %95 = vector.multi_reduction <maximumf>, %94, %cst_30 [1] : vector<16x16xf32> to vector<16xf32>
    %96 = vector.shape_cast %95 : vector<16xf32> to vector<16x1xf32>
    %97 = vector.broadcast %96 : vector<16x1xf32> to vector<16x16xf32>
    %98 = arith.subf %94, %97 : vector<16x16xf32>
    %99 = math.exp %98 : vector<16x16xf32>
    %cst_31 = arith.constant dense<0.000000e+00> : vector<16xf32>
    %100 = vector.multi_reduction <add>, %99, %cst_31 [1] : vector<16x16xf32> to vector<16xf32>
    %101 = vector.shape_cast %100 : vector<16xf32> to vector<16x1xf32>
    %102 = tpu.reciprocal %101 {approx = true} : vector<16x1xf32> -> vector<16x1xf32>
    %103 = vector.broadcast %102 : vector<16x1xf32> to vector<16x16xf32>
    %104 = arith.mulf %99, %103 : vector<16x16xf32>
    %cst_32 = arith.constant dense<0.000000e+00> : vector<16x32xf32>
    %105 = tpu.matmul %104, %71, %cst_32 {dimension_numbers = #tpu.dot_dimension_numbers<[1], [0], [0], [1], [0, 0, 1, 1], [], []>} : vector<16x16xf32>, vector<16x32xf32>, vector<16x32xf32> -> vector<16x32xf32>
    %106 = vector.broadcast %21 : vector<1x32xf32> to vector<16x32xf32>
    %107 = arith.mulf %105, %106 : vector<16x32xf32>
    %108 = arith.addf %90, %107 : vector<16x32xf32>
    %109 = vector.extract_strided_slice %70 {offsets = [0, 16], sizes = [16, 8], strides = [1, 1]} : vector<16x96xf32> to vector<16x8xf32>
    %110 = vector.extract_strided_slice %70 {offsets = [0, 48], sizes = [16, 8], strides = [1, 1]} : vector<16x96xf32> to vector<16x8xf32>
    %cst_33 = arith.constant dense<0.000000e+00> : vector<16x16xf32>
    %111 = tpu.matmul %109, %110, %cst_33 {dimension_numbers = #tpu.dot_dimension_numbers<[1], [1], [0], [0], [0, 0, 1, 0], [], []>} : vector<16x8xf32>, vector<16x8xf32>, vector<16x16xf32> -> vector<16x16xf32>
    %112 = arith.addf %111, %6 : vector<16x16xf32>
    %cst_34 = arith.constant dense<0xFF800000> : vector<16xf32>
    %113 = vector.multi_reduction <maximumf>, %112, %cst_34 [1] : vector<16x16xf32> to vector<16xf32>
    %114 = vector.shape_cast %113 : vector<16xf32> to vector<16x1xf32>
    %115 = vector.broadcast %114 : vector<16x1xf32> to vector<16x16xf32>
    %116 = arith.subf %112, %115 : vector<16x16xf32>
    %117 = math.exp %116 : vector<16x16xf32>
    %cst_35 = arith.constant dense<0.000000e+00> : vector<16xf32>
    %118 = vector.multi_reduction <add>, %117, %cst_35 [1] : vector<16x16xf32> to vector<16xf32>
    %119 = vector.shape_cast %118 : vector<16xf32> to vector<16x1xf32>
    %120 = tpu.reciprocal %119 {approx = true} : vector<16x1xf32> -> vector<16x1xf32>
    %121 = vector.broadcast %120 : vector<16x1xf32> to vector<16x16xf32>
    %122 = arith.mulf %117, %121 : vector<16x16xf32>
    %cst_36 = arith.constant dense<0.000000e+00> : vector<16x32xf32>
    %123 = tpu.matmul %122, %71, %cst_36 {dimension_numbers = #tpu.dot_dimension_numbers<[1], [0], [0], [1], [0, 0, 1, 1], [], []>} : vector<16x16xf32>, vector<16x32xf32>, vector<16x32xf32> -> vector<16x32xf32>
    %124 = vector.broadcast %28 : vector<1x32xf32> to vector<16x32xf32>
    %125 = arith.mulf %123, %124 : vector<16x32xf32>
    %126 = arith.addf %108, %125 : vector<16x32xf32>
    %127 = vector.extract_strided_slice %70 {offsets = [0, 24], sizes = [16, 8], strides = [1, 1]} : vector<16x96xf32> to vector<16x8xf32>
    %128 = vector.extract_strided_slice %70 {offsets = [0, 56], sizes = [16, 8], strides = [1, 1]} : vector<16x96xf32> to vector<16x8xf32>
    %cst_37 = arith.constant dense<0.000000e+00> : vector<16x16xf32>
    %129 = tpu.matmul %127, %128, %cst_37 {dimension_numbers = #tpu.dot_dimension_numbers<[1], [1], [0], [0], [0, 0, 1, 0], [], []>} : vector<16x8xf32>, vector<16x8xf32>, vector<16x16xf32> -> vector<16x16xf32>
    %130 = arith.addf %129, %6 : vector<16x16xf32>
    %cst_38 = arith.constant dense<0xFF800000> : vector<16xf32>
    %131 = vector.multi_reduction <maximumf>, %130, %cst_38 [1] : vector<16x16xf32> to vector<16xf32>
    %132 = vector.shape_cast %131 : vector<16xf32> to vector<16x1xf32>
    %133 = vector.broadcast %132 : vector<16x1xf32> to vector<16x16xf32>
    %134 = arith.subf %130, %133 : vector<16x16xf32>
    %135 = math.exp %134 : vector<16x16xf32>
    %cst_39 = arith.constant dense<0.000000e+00> : vector<16xf32>
    %136 = vector.multi_reduction <add>, %135, %cst_39 [1] : vector<16x16xf32> to vector<16xf32>
    %137 = vector.shape_cast %136 : vector<16xf32> to vector<16x1xf32>
    %138 = tpu.reciprocal %137 {approx = true} : vector<16x1xf32> -> vector<16x1xf32>
    %139 = vector.broadcast %138 : vector<16x1xf32> to vector<16x16xf32>
    %140 = arith.mulf %135, %139 : vector<16x16xf32>
    %cst_40 = arith.constant dense<0.000000e+00> : vector<16x32xf32>
    %141 = tpu.matmul %140, %71, %cst_40 {dimension_numbers = #tpu.dot_dimension_numbers<[1], [0], [0], [1], [0, 0, 1, 1], [], []>} : vector<16x16xf32>, vector<16x32xf32>, vector<16x32xf32> -> vector<16x32xf32>
    %142 = vector.broadcast %35 : vector<1x32xf32> to vector<16x32xf32>
    %143 = arith.mulf %141, %142 : vector<16x32xf32>
    %144 = arith.addf %126, %143 : vector<16x32xf32>
    %145 = arith.truncf %144 : vector<16x32xf32> to vector<16x32xbf16>
    %c288 = arith.constant 288 : index
    %c0_41 = arith.constant 0 : index
    %146 = vector.load %arg2[%c288, %c0_41] : memref<672x128xbf16, #tpu.memory_space<vmem>>, vector<32x32xbf16>
    %cst_42 = arith.constant dense<0.000000e+00> : vector<16x32xf32>
    %147 = tpu.matmul %145, %146, %cst_42 {dimension_numbers = #tpu.dot_dimension_numbers<[1], [0], [0], [1], [0, 0, 1, 1], [], []>} : vector<16x32xbf16>, vector<32x32xbf16>, vector<16x32xf32> -> vector<16x32xf32>
    %148 = vector.broadcast %39 : vector<1x32xf32> to vector<16x32xf32>
    %149 = arith.addf %147, %148 : vector<16x32xf32>
    %150 = arith.addf %5, %149 : vector<16x32xf32>
    %cst_43 = arith.constant dense<0.000000e+00> : vector<16xf32>
    %151 = vector.multi_reduction <add>, %150, %cst_43 [1] : vector<16x32xf32> to vector<16xf32>
    %152 = vector.shape_cast %151 : vector<16xf32> to vector<16x1xf32>
    %cst_44 = arith.constant 3.200000e+01 : f32
    %153 = vector.broadcast %cst_44 : f32 to vector<16x1xf32>
    %154 = arith.divf %152, %153 : vector<16x1xf32>
    %155 = vector.broadcast %154 : vector<16x1xf32> to vector<16x32xf32>
    %156 = arith.subf %150, %155 : vector<16x32xf32>
    %157 = arith.mulf %156, %156 : vector<16x32xf32>
    %cst_45 = arith.constant dense<0.000000e+00> : vector<16xf32>
    %158 = vector.multi_reduction <add>, %157, %cst_45 [1] : vector<16x32xf32> to vector<16xf32>
    %159 = vector.shape_cast %158 : vector<16xf32> to vector<16x1xf32>
    %cst_46 = arith.constant 3.200000e+01 : f32
    %160 = vector.broadcast %cst_46 : f32 to vector<16x1xf32>
    %161 = arith.divf %159, %160 : vector<16x1xf32>
    %162 = vector.broadcast %154 : vector<16x1xf32> to vector<16x32xf32>
    %163 = arith.subf %150, %162 : vector<16x32xf32>
    %cst_47 = arith.constant 9.99999974E-6 : f32
    %164 = vector.broadcast %cst_47 : f32 to vector<16x1xf32>
    %165 = arith.addf %161, %164 : vector<16x1xf32>
    %166 = math.rsqrt %165 : vector<16x1xf32>
    %167 = vector.broadcast %166 : vector<16x1xf32> to vector<16x32xf32>
    %168 = arith.mulf %163, %167 : vector<16x32xf32>
    %169 = vector.broadcast %40 : vector<1x32xf32> to vector<16x32xf32>
    %170 = arith.mulf %168, %169 : vector<16x32xf32>
    %171 = vector.broadcast %41 : vector<1x32xf32> to vector<16x32xf32>
    %172 = arith.addf %170, %171 : vector<16x32xf32>
    %173 = arith.truncf %172 : vector<16x32xf32> to vector<16x32xbf16>
    %c320 = arith.constant 320 : index
    %c0_48 = arith.constant 0 : index
    %174 = vector.load %arg2[%c320, %c0_48] : memref<672x128xbf16, #tpu.memory_space<vmem>>, vector<32x64xbf16>
    %cst_49 = arith.constant dense<0.000000e+00> : vector<16x64xf32>
    %175 = tpu.matmul %173, %174, %cst_49 {dimension_numbers = #tpu.dot_dimension_numbers<[1], [0], [0], [1], [0, 0, 1, 1], [], []>} : vector<16x32xbf16>, vector<32x64xbf16>, vector<16x64xf32> -> vector<16x64xf32>
    %176 = vector.broadcast %42 : vector<1x64xf32> to vector<16x64xf32>
    %177 = arith.addf %175, %176 : vector<16x64xf32>
    %cst_50 = arith.constant 5.000000e-01 : f32
    %178 = vector.broadcast %cst_50 : f32 to vector<16x64xf32>
    %179 = arith.mulf %178, %177 : vector<16x64xf32>
    %cst_51 = arith.constant 0.707106769 : f32
    %180 = vector.broadcast %cst_51 : f32 to vector<16x64xf32>
    %181 = arith.mulf %177, %180 : vector<16x64xf32>
    %182 = math.erf %181 : vector<16x64xf32>
    %cst_52 = arith.constant 1.000000e+00 : f32
    %183 = vector.broadcast %cst_52 : f32 to vector<16x64xf32>
    %184 = arith.addf %183, %182 : vector<16x64xf32>
    %185 = arith.mulf %179, %184 : vector<16x64xf32>
    %186 = arith.truncf %185 : vector<16x64xf32> to vector<16x64xbf16>
    %c352 = arith.constant 352 : index
    %c0_53 = arith.constant 0 : index
    %187 = vector.load %arg2[%c352, %c0_53] : memref<672x128xbf16, #tpu.memory_space<vmem>>, vector<64x32xbf16>
    %cst_54 = arith.constant dense<0.000000e+00> : vector<16x32xf32>
    %188 = tpu.matmul %186, %187, %cst_54 {dimension_numbers = #tpu.dot_dimension_numbers<[1], [0], [0], [1], [0, 0, 1, 1], [], []>} : vector<16x64xbf16>, vector<64x32xbf16>, vector<16x32xf32> -> vector<16x32xf32>
    %189 = vector.broadcast %43 : vector<1x32xf32> to vector<16x32xf32>
    %190 = arith.addf %188, %189 : vector<16x32xf32>
    %191 = arith.addf %150, %190 : vector<16x32xf32>
    %c40 = arith.constant 40 : index
    %c0_55 = arith.constant 0 : index
    %192 = vector.load %arg3[%c40, %c0_55] : memref<56x128xf32, #tpu.memory_space<vmem>>, vector<1x32xf32>
    %c41 = arith.constant 41 : index
    %c0_56 = arith.constant 0 : index
    %193 = vector.load %arg3[%c41, %c0_56] : memref<56x128xf32, #tpu.memory_space<vmem>>, vector<1x32xf32>
    %c42 = arith.constant 42 : index
    %c0_57 = arith.constant 0 : index
    %194 = vector.load %arg3[%c42, %c0_57] : memref<56x128xf32, #tpu.memory_space<vmem>>, vector<1x96xf32>
    %c43 = arith.constant 43 : index
    %c0_58 = arith.constant 0 : index
    %195 = vector.load %arg3[%c43, %c0_58] : memref<56x128xf32, #tpu.memory_space<vmem>>, vector<1x32xf32>
    %c44 = arith.constant 44 : index
    %c0_59 = arith.constant 0 : index
    %196 = vector.load %arg3[%c44, %c0_59] : memref<56x128xf32, #tpu.memory_space<vmem>>, vector<1x32xf32>
    %c45 = arith.constant 45 : index
    %c0_60 = arith.constant 0 : index
    %197 = vector.load %arg3[%c45, %c0_60] : memref<56x128xf32, #tpu.memory_space<vmem>>, vector<1x32xf32>
    %c46 = arith.constant 46 : index
    %c0_61 = arith.constant 0 : index
    %198 = vector.load %arg3[%c46, %c0_61] : memref<56x128xf32, #tpu.memory_space<vmem>>, vector<1x64xf32>
    %c47 = arith.constant 47 : index
    %c0_62 = arith.constant 0 : index
    %199 = vector.load %arg3[%c47, %c0_62] : memref<56x128xf32, #tpu.memory_space<vmem>>, vector<1x32xf32>
    %cst_63 = arith.constant dense<0.000000e+00> : vector<16xf32>
    %200 = vector.multi_reduction <add>, %191, %cst_63 [1] : vector<16x32xf32> to vector<16xf32>
    %201 = vector.shape_cast %200 : vector<16xf32> to vector<16x1xf32>
    %cst_64 = arith.constant 3.200000e+01 : f32
    %202 = vector.broadcast %cst_64 : f32 to vector<16x1xf32>
    %203 = arith.divf %201, %202 : vector<16x1xf32>
    %204 = vector.broadcast %203 : vector<16x1xf32> to vector<16x32xf32>
    %205 = arith.subf %191, %204 : vector<16x32xf32>
    %206 = arith.mulf %205, %205 : vector<16x32xf32>
    %cst_65 = arith.constant dense<0.000000e+00> : vector<16xf32>
    %207 = vector.multi_reduction <add>, %206, %cst_65 [1] : vector<16x32xf32> to vector<16xf32>
    %208 = vector.shape_cast %207 : vector<16xf32> to vector<16x1xf32>
    %cst_66 = arith.constant 3.200000e+01 : f32
    %209 = vector.broadcast %cst_66 : f32 to vector<16x1xf32>
    %210 = arith.divf %208, %209 : vector<16x1xf32>
    %211 = vector.broadcast %203 : vector<16x1xf32> to vector<16x32xf32>
    %212 = arith.subf %191, %211 : vector<16x32xf32>
    %cst_67 = arith.constant 9.99999974E-6 : f32
    %213 = vector.broadcast %cst_67 : f32 to vector<16x1xf32>
    %214 = arith.addf %210, %213 : vector<16x1xf32>
    %215 = math.rsqrt %214 : vector<16x1xf32>
    %216 = vector.broadcast %215 : vector<16x1xf32> to vector<16x32xf32>
    %217 = arith.mulf %212, %216 : vector<16x32xf32>
    %218 = vector.broadcast %192 : vector<1x32xf32> to vector<16x32xf32>
    %219 = arith.mulf %217, %218 : vector<16x32xf32>
    %220 = vector.broadcast %193 : vector<1x32xf32> to vector<16x32xf32>
    %221 = arith.addf %219, %220 : vector<16x32xf32>
    %222 = arith.truncf %221 : vector<16x32xf32> to vector<16x32xbf16>
    %c416 = arith.constant 416 : index
    %c0_68 = arith.constant 0 : index
    %223 = vector.load %arg2[%c416, %c0_68] : memref<672x128xbf16, #tpu.memory_space<vmem>>, vector<32x96xbf16>
    %cst_69 = arith.constant dense<0.000000e+00> : vector<16x96xf32>
    %224 = tpu.matmul %222, %223, %cst_69 {dimension_numbers = #tpu.dot_dimension_numbers<[1], [0], [0], [1], [0, 0, 1, 1], [], []>} : vector<16x32xbf16>, vector<32x96xbf16>, vector<16x96xf32> -> vector<16x96xf32>
    %225 = vector.broadcast %194 : vector<1x96xf32> to vector<16x96xf32>
    %226 = arith.addf %224, %225 : vector<16x96xf32>
    %227 = vector.extract_strided_slice %226 {offsets = [0, 64], sizes = [16, 32], strides = [1, 1]} : vector<16x96xf32> to vector<16x32xf32>
    %cst_70 = arith.constant 0.000000e+00 : f32
    %228 = vector.broadcast %cst_70 : f32 to vector<16x32xf32>
    %229 = vector.extract_strided_slice %226 {offsets = [0, 0], sizes = [16, 8], strides = [1, 1]} : vector<16x96xf32> to vector<16x8xf32>
    %230 = vector.extract_strided_slice %226 {offsets = [0, 32], sizes = [16, 8], strides = [1, 1]} : vector<16x96xf32> to vector<16x8xf32>
    %cst_71 = arith.constant dense<0.000000e+00> : vector<16x16xf32>
    %231 = tpu.matmul %229, %230, %cst_71 {dimension_numbers = #tpu.dot_dimension_numbers<[1], [1], [0], [0], [0, 0, 1, 0], [], []>} : vector<16x8xf32>, vector<16x8xf32>, vector<16x16xf32> -> vector<16x16xf32>
    %232 = arith.addf %231, %6 : vector<16x16xf32>
    %cst_72 = arith.constant dense<0xFF800000> : vector<16xf32>
    %233 = vector.multi_reduction <maximumf>, %232, %cst_72 [1] : vector<16x16xf32> to vector<16xf32>
    %234 = vector.shape_cast %233 : vector<16xf32> to vector<16x1xf32>
    %235 = vector.broadcast %234 : vector<16x1xf32> to vector<16x16xf32>
    %236 = arith.subf %232, %235 : vector<16x16xf32>
    %237 = math.exp %236 : vector<16x16xf32>
    %cst_73 = arith.constant dense<0.000000e+00> : vector<16xf32>
    %238 = vector.multi_reduction <add>, %237, %cst_73 [1] : vector<16x16xf32> to vector<16xf32>
    %239 = vector.shape_cast %238 : vector<16xf32> to vector<16x1xf32>
    %240 = tpu.reciprocal %239 {approx = true} : vector<16x1xf32> -> vector<16x1xf32>
    %241 = vector.broadcast %240 : vector<16x1xf32> to vector<16x16xf32>
    %242 = arith.mulf %237, %241 : vector<16x16xf32>
    %cst_74 = arith.constant dense<0.000000e+00> : vector<16x32xf32>
    %243 = tpu.matmul %242, %227, %cst_74 {dimension_numbers = #tpu.dot_dimension_numbers<[1], [0], [0], [1], [0, 0, 1, 1], [], []>} : vector<16x16xf32>, vector<16x32xf32>, vector<16x32xf32> -> vector<16x32xf32>
    %244 = vector.broadcast %14 : vector<1x32xf32> to vector<16x32xf32>
    %245 = arith.mulf %243, %244 : vector<16x32xf32>
    %246 = arith.addf %228, %245 : vector<16x32xf32>
    %247 = vector.extract_strided_slice %226 {offsets = [0, 8], sizes = [16, 8], strides = [1, 1]} : vector<16x96xf32> to vector<16x8xf32>
    %248 = vector.extract_strided_slice %226 {offsets = [0, 40], sizes = [16, 8], strides = [1, 1]} : vector<16x96xf32> to vector<16x8xf32>
    %cst_75 = arith.constant dense<0.000000e+00> : vector<16x16xf32>
    %249 = tpu.matmul %247, %248, %cst_75 {dimension_numbers = #tpu.dot_dimension_numbers<[1], [1], [0], [0], [0, 0, 1, 0], [], []>} : vector<16x8xf32>, vector<16x8xf32>, vector<16x16xf32> -> vector<16x16xf32>
    %250 = arith.addf %249, %6 : vector<16x16xf32>
    %cst_76 = arith.constant dense<0xFF800000> : vector<16xf32>
    %251 = vector.multi_reduction <maximumf>, %250, %cst_76 [1] : vector<16x16xf32> to vector<16xf32>
    %252 = vector.shape_cast %251 : vector<16xf32> to vector<16x1xf32>
    %253 = vector.broadcast %252 : vector<16x1xf32> to vector<16x16xf32>
    %254 = arith.subf %250, %253 : vector<16x16xf32>
    %255 = math.exp %254 : vector<16x16xf32>
    %cst_77 = arith.constant dense<0.000000e+00> : vector<16xf32>
    %256 = vector.multi_reduction <add>, %255, %cst_77 [1] : vector<16x16xf32> to vector<16xf32>
    %257 = vector.shape_cast %256 : vector<16xf32> to vector<16x1xf32>
    %258 = tpu.reciprocal %257 {approx = true} : vector<16x1xf32> -> vector<16x1xf32>
    %259 = vector.broadcast %258 : vector<16x1xf32> to vector<16x16xf32>
    %260 = arith.mulf %255, %259 : vector<16x16xf32>
    %cst_78 = arith.constant dense<0.000000e+00> : vector<16x32xf32>
    %261 = tpu.matmul %260, %227, %cst_78 {dimension_numbers = #tpu.dot_dimension_numbers<[1], [0], [0], [1], [0, 0, 1, 1], [], []>} : vector<16x16xf32>, vector<16x32xf32>, vector<16x32xf32> -> vector<16x32xf32>
    %262 = vector.broadcast %21 : vector<1x32xf32> to vector<16x32xf32>
    %263 = arith.mulf %261, %262 : vector<16x32xf32>
    %264 = arith.addf %246, %263 : vector<16x32xf32>
    %265 = vector.extract_strided_slice %226 {offsets = [0, 16], sizes = [16, 8], strides = [1, 1]} : vector<16x96xf32> to vector<16x8xf32>
    %266 = vector.extract_strided_slice %226 {offsets = [0, 48], sizes = [16, 8], strides = [1, 1]} : vector<16x96xf32> to vector<16x8xf32>
    %cst_79 = arith.constant dense<0.000000e+00> : vector<16x16xf32>
    %267 = tpu.matmul %265, %266, %cst_79 {dimension_numbers = #tpu.dot_dimension_numbers<[1], [1], [0], [0], [0, 0, 1, 0], [], []>} : vector<16x8xf32>, vector<16x8xf32>, vector<16x16xf32> -> vector<16x16xf32>
    %268 = arith.addf %267, %6 : vector<16x16xf32>
    %cst_80 = arith.constant dense<0xFF800000> : vector<16xf32>
    %269 = vector.multi_reduction <maximumf>, %268, %cst_80 [1] : vector<16x16xf32> to vector<16xf32>
    %270 = vector.shape_cast %269 : vector<16xf32> to vector<16x1xf32>
    %271 = vector.broadcast %270 : vector<16x1xf32> to vector<16x16xf32>
    %272 = arith.subf %268, %271 : vector<16x16xf32>
    %273 = math.exp %272 : vector<16x16xf32>
    %cst_81 = arith.constant dense<0.000000e+00> : vector<16xf32>
    %274 = vector.multi_reduction <add>, %273, %cst_81 [1] : vector<16x16xf32> to vector<16xf32>
    %275 = vector.shape_cast %274 : vector<16xf32> to vector<16x1xf32>
    %276 = tpu.reciprocal %275 {approx = true} : vector<16x1xf32> -> vector<16x1xf32>
    %277 = vector.broadcast %276 : vector<16x1xf32> to vector<16x16xf32>
    %278 = arith.mulf %273, %277 : vector<16x16xf32>
    %cst_82 = arith.constant dense<0.000000e+00> : vector<16x32xf32>
    %279 = tpu.matmul %278, %227, %cst_82 {dimension_numbers = #tpu.dot_dimension_numbers<[1], [0], [0], [1], [0, 0, 1, 1], [], []>} : vector<16x16xf32>, vector<16x32xf32>, vector<16x32xf32> -> vector<16x32xf32>
    %280 = vector.broadcast %28 : vector<1x32xf32> to vector<16x32xf32>
    %281 = arith.mulf %279, %280 : vector<16x32xf32>
    %282 = arith.addf %264, %281 : vector<16x32xf32>
    %283 = vector.extract_strided_slice %226 {offsets = [0, 24], sizes = [16, 8], strides = [1, 1]} : vector<16x96xf32> to vector<16x8xf32>
    %284 = vector.extract_strided_slice %226 {offsets = [0, 56], sizes = [16, 8], strides = [1, 1]} : vector<16x96xf32> to vector<16x8xf32>
    %cst_83 = arith.constant dense<0.000000e+00> : vector<16x16xf32>
    %285 = tpu.matmul %283, %284, %cst_83 {dimension_numbers = #tpu.dot_dimension_numbers<[1], [1], [0], [0], [0, 0, 1, 0], [], []>} : vector<16x8xf32>, vector<16x8xf32>, vector<16x16xf32> -> vector<16x16xf32>
    %286 = arith.addf %285, %6 : vector<16x16xf32>
    %cst_84 = arith.constant dense<0xFF800000> : vector<16xf32>
    %287 = vector.multi_reduction <maximumf>, %286, %cst_84 [1] : vector<16x16xf32> to vector<16xf32>
    %288 = vector.shape_cast %287 : vector<16xf32> to vector<16x1xf32>
    %289 = vector.broadcast %288 : vector<16x1xf32> to vector<16x16xf32>
    %290 = arith.subf %286, %289 : vector<16x16xf32>
    %291 = math.exp %290 : vector<16x16xf32>
    %cst_85 = arith.constant dense<0.000000e+00> : vector<16xf32>
    %292 = vector.multi_reduction <add>, %291, %cst_85 [1] : vector<16x16xf32> to vector<16xf32>
    %293 = vector.shape_cast %292 : vector<16xf32> to vector<16x1xf32>
    %294 = tpu.reciprocal %293 {approx = true} : vector<16x1xf32> -> vector<16x1xf32>
    %295 = vector.broadcast %294 : vector<16x1xf32> to vector<16x16xf32>
    %296 = arith.mulf %291, %295 : vector<16x16xf32>
    %cst_86 = arith.constant dense<0.000000e+00> : vector<16x32xf32>
    %297 = tpu.matmul %296, %227, %cst_86 {dimension_numbers = #tpu.dot_dimension_numbers<[1], [0], [0], [1], [0, 0, 1, 1], [], []>} : vector<16x16xf32>, vector<16x32xf32>, vector<16x32xf32> -> vector<16x32xf32>
    %298 = vector.broadcast %35 : vector<1x32xf32> to vector<16x32xf32>
    %299 = arith.mulf %297, %298 : vector<16x32xf32>
    %300 = arith.addf %282, %299 : vector<16x32xf32>
    %301 = arith.truncf %300 : vector<16x32xf32> to vector<16x32xbf16>
    %c448 = arith.constant 448 : index
    %c0_87 = arith.constant 0 : index
    %302 = vector.load %arg2[%c448, %c0_87] : memref<672x128xbf16, #tpu.memory_space<vmem>>, vector<32x32xbf16>
    %cst_88 = arith.constant dense<0.000000e+00> : vector<16x32xf32>
    %303 = tpu.matmul %301, %302, %cst_88 {dimension_numbers = #tpu.dot_dimension_numbers<[1], [0], [0], [1], [0, 0, 1, 1], [], []>} : vector<16x32xbf16>, vector<32x32xbf16>, vector<16x32xf32> -> vector<16x32xf32>
    %304 = vector.broadcast %195 : vector<1x32xf32> to vector<16x32xf32>
    %305 = arith.addf %303, %304 : vector<16x32xf32>
    %306 = arith.addf %191, %305 : vector<16x32xf32>
    %cst_89 = arith.constant dense<0.000000e+00> : vector<16xf32>
    %307 = vector.multi_reduction <add>, %306, %cst_89 [1] : vector<16x32xf32> to vector<16xf32>
    %308 = vector.shape_cast %307 : vector<16xf32> to vector<16x1xf32>
    %cst_90 = arith.constant 3.200000e+01 : f32
    %309 = vector.broadcast %cst_90 : f32 to vector<16x1xf32>
    %310 = arith.divf %308, %309 : vector<16x1xf32>
    %311 = vector.broadcast %310 : vector<16x1xf32> to vector<16x32xf32>
    %312 = arith.subf %306, %311 : vector<16x32xf32>
    %313 = arith.mulf %312, %312 : vector<16x32xf32>
    %cst_91 = arith.constant dense<0.000000e+00> : vector<16xf32>
    %314 = vector.multi_reduction <add>, %313, %cst_91 [1] : vector<16x32xf32> to vector<16xf32>
    %315 = vector.shape_cast %314 : vector<16xf32> to vector<16x1xf32>
    %cst_92 = arith.constant 3.200000e+01 : f32
    %316 = vector.broadcast %cst_92 : f32 to vector<16x1xf32>
    %317 = arith.divf %315, %316 : vector<16x1xf32>
    %318 = vector.broadcast %310 : vector<16x1xf32> to vector<16x32xf32>
    %319 = arith.subf %306, %318 : vector<16x32xf32>
    %cst_93 = arith.constant 9.99999974E-6 : f32
    %320 = vector.broadcast %cst_93 : f32 to vector<16x1xf32>
    %321 = arith.addf %317, %320 : vector<16x1xf32>
    %322 = math.rsqrt %321 : vector<16x1xf32>
    %323 = vector.broadcast %322 : vector<16x1xf32> to vector<16x32xf32>
    %324 = arith.mulf %319, %323 : vector<16x32xf32>
    %325 = vector.broadcast %196 : vector<1x32xf32> to vector<16x32xf32>
    %326 = arith.mulf %324, %325 : vector<16x32xf32>
    %327 = vector.broadcast %197 : vector<1x32xf32> to vector<16x32xf32>
    %328 = arith.addf %326, %327 : vector<16x32xf32>
    %329 = arith.truncf %328 : vector<16x32xf32> to vector<16x32xbf16>
    %c480 = arith.constant 480 : index
    %c0_94 = arith.constant 0 : index
    %330 = vector.load %arg2[%c480, %c0_94] : memref<672x128xbf16, #tpu.memory_space<vmem>>, vector<32x64xbf16>
    %cst_95 = arith.constant dense<0.000000e+00> : vector<16x64xf32>
    %331 = tpu.matmul %329, %330, %cst_95 {dimension_numbers = #tpu.dot_dimension_numbers<[1], [0], [0], [1], [0, 0, 1, 1], [], []>} : vector<16x32xbf16>, vector<32x64xbf16>, vector<16x64xf32> -> vector<16x64xf32>
    %332 = vector.broadcast %198 : vector<1x64xf32> to vector<16x64xf32>
    %333 = arith.addf %331, %332 : vector<16x64xf32>
    %cst_96 = arith.constant 5.000000e-01 : f32
    %334 = vector.broadcast %cst_96 : f32 to vector<16x64xf32>
    %335 = arith.mulf %334, %333 : vector<16x64xf32>
    %cst_97 = arith.constant 0.707106769 : f32
    %336 = vector.broadcast %cst_97 : f32 to vector<16x64xf32>
    %337 = arith.mulf %333, %336 : vector<16x64xf32>
    %338 = math.erf %337 : vector<16x64xf32>
    %cst_98 = arith.constant 1.000000e+00 : f32
    %339 = vector.broadcast %cst_98 : f32 to vector<16x64xf32>
    %340 = arith.addf %339, %338 : vector<16x64xf32>
    %341 = arith.mulf %335, %340 : vector<16x64xf32>
    %342 = arith.truncf %341 : vector<16x64xf32> to vector<16x64xbf16>
    %c512 = arith.constant 512 : index
    %c0_99 = arith.constant 0 : index
    %343 = vector.load %arg2[%c512, %c0_99] : memref<672x128xbf16, #tpu.memory_space<vmem>>, vector<64x32xbf16>
    %cst_100 = arith.constant dense<0.000000e+00> : vector<16x32xf32>
    %344 = tpu.matmul %342, %343, %cst_100 {dimension_numbers = #tpu.dot_dimension_numbers<[1], [0], [0], [1], [0, 0, 1, 1], [], []>} : vector<16x64xbf16>, vector<64x32xbf16>, vector<16x32xf32> -> vector<16x32xf32>
    %345 = vector.broadcast %199 : vector<1x32xf32> to vector<16x32xf32>
    %346 = arith.addf %344, %345 : vector<16x32xf32>
    %347 = arith.addf %306, %346 : vector<16x32xf32>
    %348 = vector.extract_strided_slice %347 {offsets = [0, 0], sizes = [8, 32], strides = [1, 1]} : vector<16x32xf32> to vector<8x32xf32>
    %c48 = arith.constant 48 : index
    %c0_101 = arith.constant 0 : index
    %349 = vector.load %arg3[%c48, %c0_101] : memref<56x128xf32, #tpu.memory_space<vmem>>, vector<1x32xf32>
    %c49 = arith.constant 49 : index
    %c0_102 = arith.constant 0 : index
    %350 = vector.load %arg3[%c49, %c0_102] : memref<56x128xf32, #tpu.memory_space<vmem>>, vector<1x32xf32>
    %cst_103 = arith.constant dense<0.000000e+00> : vector<8xf32>
    %351 = vector.multi_reduction <add>, %348, %cst_103 [1] : vector<8x32xf32> to vector<8xf32>
    %352 = vector.shape_cast %351 : vector<8xf32> to vector<8x1xf32>
    %cst_104 = arith.constant 3.200000e+01 : f32
    %353 = vector.broadcast %cst_104 : f32 to vector<8x1xf32>
    %354 = arith.divf %352, %353 : vector<8x1xf32>
    %355 = vector.broadcast %354 : vector<8x1xf32> to vector<8x32xf32>
    %356 = arith.subf %348, %355 : vector<8x32xf32>
    %357 = arith.mulf %356, %356 : vector<8x32xf32>
    %cst_105 = arith.constant dense<0.000000e+00> : vector<8xf32>
    %358 = vector.multi_reduction <add>, %357, %cst_105 [1] : vector<8x32xf32> to vector<8xf32>
    %359 = vector.shape_cast %358 : vector<8xf32> to vector<8x1xf32>
    %cst_106 = arith.constant 3.200000e+01 : f32
    %360 = vector.broadcast %cst_106 : f32 to vector<8x1xf32>
    %361 = arith.divf %359, %360 : vector<8x1xf32>
    %362 = vector.broadcast %354 : vector<8x1xf32> to vector<8x32xf32>
    %363 = arith.subf %348, %362 : vector<8x32xf32>
    %cst_107 = arith.constant 9.99999974E-6 : f32
    %364 = vector.broadcast %cst_107 : f32 to vector<8x1xf32>
    %365 = arith.addf %361, %364 : vector<8x1xf32>
    %366 = math.rsqrt %365 : vector<8x1xf32>
    %367 = vector.broadcast %366 : vector<8x1xf32> to vector<8x32xf32>
    %368 = arith.mulf %363, %367 : vector<8x32xf32>
    %369 = vector.broadcast %349 : vector<1x32xf32> to vector<8x32xf32>
    %370 = arith.mulf %368, %369 : vector<8x32xf32>
    %371 = vector.broadcast %350 : vector<1x32xf32> to vector<8x32xf32>
    %372 = arith.addf %370, %371 : vector<8x32xf32>
    %373 = arith.truncf %372 : vector<8x32xf32> to vector<8x32xbf16>
    %c576 = arith.constant 576 : index
    %c0_108 = arith.constant 0 : index
    %374 = vector.load %arg2[%c576, %c0_108] : memref<672x128xbf16, #tpu.memory_space<vmem>>, vector<32x64xbf16>
    %cst_109 = arith.constant dense<0.000000e+00> : vector<8x64xf32>
    %375 = tpu.matmul %373, %374, %cst_109 {dimension_numbers = #tpu.dot_dimension_numbers<[1], [0], [0], [1], [0, 0, 1, 1], [], []>} : vector<8x32xbf16>, vector<32x64xbf16>, vector<8x64xf32> -> vector<8x64xf32>
    %c50 = arith.constant 50 : index
    %c0_110 = arith.constant 0 : index
    %376 = vector.load %arg3[%c50, %c0_110] : memref<56x128xf32, #tpu.memory_space<vmem>>, vector<1x64xf32>
    %377 = vector.broadcast %376 : vector<1x64xf32> to vector<8x64xf32>
    %378 = arith.addf %375, %377 : vector<8x64xf32>
    %cst_111 = arith.constant 5.000000e-01 : f32
    %379 = vector.broadcast %cst_111 : f32 to vector<8x64xf32>
    %380 = arith.mulf %379, %378 : vector<8x64xf32>
    %cst_112 = arith.constant 0.707106769 : f32
    %381 = vector.broadcast %cst_112 : f32 to vector<8x64xf32>
    %382 = arith.mulf %378, %381 : vector<8x64xf32>
    %383 = math.erf %382 : vector<8x64xf32>
    %cst_113 = arith.constant 1.000000e+00 : f32
    %384 = vector.broadcast %cst_113 : f32 to vector<8x64xf32>
    %385 = arith.addf %384, %383 : vector<8x64xf32>
    %386 = arith.mulf %380, %385 : vector<8x64xf32>
    %387 = arith.truncf %386 : vector<8x64xf32> to vector<8x64xbf16>
    %c608 = arith.constant 608 : index
    %c0_114 = arith.constant 0 : index
    %388 = vector.load %arg2[%c608, %c0_114] : memref<672x128xbf16, #tpu.memory_space<vmem>>, vector<64x128xbf16>
    %cst_115 = arith.constant dense<0.000000e+00> : vector<8x128xf32>
    %389 = tpu.matmul %387, %388, %cst_115 {dimension_numbers = #tpu.dot_dimension_numbers<[1], [0], [0], [1], [0, 0, 1, 1], [], []>} : vector<8x64xbf16>, vector<64x128xbf16>, vector<8x128xf32> -> vector<8x128xf32>
    %c51 = arith.constant 51 : index
    %c0_116 = arith.constant 0 : index
    %390 = vector.load %arg3[%c51, %c0_116] : memref<56x128xf32, #tpu.memory_space<vmem>>, vector<1x128xf32>
    %391 = vector.broadcast %390 : vector<1x128xf32> to vector<8x128xf32>
    %392 = arith.addf %389, %391 : vector<8x128xf32>
    %c0_117 = arith.constant 0 : index
    %c0_118 = arith.constant 0 : index
    %393 = vector.load %arg4[%c0_117, %c0_118] : memref<8x128xf32, #tpu.memory_space<vmem>>, vector<8x128xf32>
    tpu.vector_store %arg4[%c0_117, %c0_118], %392 {strides = array<i32>} : memref<8x128xf32, #tpu.memory_space<vmem>>, vector<8x128xf32>,
    return
  }
  func.func @transform_0(%arg0: i32) -> (i32, i32) {
    %c0_i32 = arith.constant 0 : i32
    %c0_i32_0 = arith.constant 0 : i32
    %c0_i32_1 = arith.constant 0 : i32
    return %c0_i32, %c0_i32_0 : i32, i32
  }
  func.func @transform_1(%arg0: i32) -> (i32, i32) {
    %c0_i32 = arith.constant 0 : i32
    %c0_i32_0 = arith.constant 0 : i32
    %c0_i32_1 = arith.constant 0 : i32
    return %c0_i32, %c0_i32_0 : i32, i32
  }
  func.func @transform_2(%arg0: i32) -> (i32, i32) {
    %c0_i32 = arith.constant 0 : i32
    %c0_i32_0 = arith.constant 0 : i32
    %c0_i32_1 = arith.constant 0 : i32
    return %c0_i32, %c0_i32_0 : i32, i32
  }
  func.func @transform_3(%arg0: i32) -> (i32, i32) {
    %c0_i32 = arith.constant 0 : i32
    %c0_i32_0 = arith.constant 0 : i32
    %c0_i32_1 = arith.constant 0 : i32
    return %c0_i32, %c0_i32_0 : i32, i32
  }
}

</mosaic_0001>

<llo_original>
// kernel: vit_forward.1
$region0: #{vit_forward.1}
  #allocation0 [shape = 'u32[]', space=smem, size = 0x4, offset = 0x4, fixed_abs, tag = 'smem constant byte address 0x4 - core index']
  #allocation1 [shape = 'u32[144,128]{1,0:T(1,128)}', space=vmem, size = 0x12000, scoped, tag = 'internal scratch']
  %s0 = inlined_call_operand.vmem [shape: f32[16,256], index: 0, kind: input, shape index: {}]
  %s1 = inlined_call_operand.vmem [shape: bf16[672,128], index: 1, kind: input, shape index: {}]
  %s2 = inlined_call_operand.vmem [shape: f32[56,128], index: 2, kind: input, shape index: {}]
  %s3 = inlined_call_operand.vmem [shape: f32[8,128], index: 3, kind: output, shape index: {}]
  %s4 = sld [smem:[#allocation0]]
  $region22: #{vit_forward.1} parent=0
    _
  %s6 = ssub.s32 1, %s4
  %s7 = scalar_select 0, %s6, %s4
  // Predicated region
  $region2: #{vit_forward.1} parent=0 // pred_check
    _
  $region3: #{vit_forward.1} parent=0 // pred_check_branch
    %9 = sbr.rel (0) target = $region5
  $region4: #{vit_forward.1} parent=0 // pred_region
    _
  $region5: #{vit_forward.1} parent=0 // pred_fallthru
    _
  // Predicated region
  $region6: #{vit_forward.1} parent=0 // pred_check
    _
  $region7: #{vit_forward.1} parent=0 // pred_check_branch
    %11 = sbr.rel (0) target = $region9
  $region8: #{vit_forward.1} parent=0 // pred_region
    _
  $region9: #{vit_forward.1} parent=0 // pred_fallthru
    _
  // Predicated region
  $region10: #{vit_forward.1} parent=0 // pred_check
    _
  $region11: #{vit_forward.1} parent=0 // pred_check_branch
    %13 = sbr.rel (0) target = $region13
  $region12: #{vit_forward.1} parent=0 // pred_region
    _
  $region13: #{vit_forward.1} parent=0 // pred_fallthru
    _
  %v15 = vld [vmem:[%s0] sm:$0xff]
  %v16 = vld [vmem:[%s0 + $0x8] sm:$0xff]
  %v17 = vld [vmem:[%s0 + $0x10] sm:$0xff]
  %v18 = vld [vmem:[%s0 + $0x18] sm:$0xff]
  %v19 = vpack.c.bf16 %v17, %v15
  %v20 = vpack.c.bf16 %v18, %v16
  %v21 = vld [vmem:[%s1] sm:$0xf]
  %v22 = vld [vmem:[%s1 + $0x4] sm:$0xf]
  %v23 = vld [vmem:[%s1 + $0x8] sm:$0xf]
  %v24 = vld [vmem:[%s1 + $0xc] sm:$0xf]
  %v25 = vld [vmem:[%s1 + $0x10] sm:$0xf]
  %v26 = vld [vmem:[%s1 + $0x14] sm:$0xf]
  %v27 = vld [vmem:[%s1 + $0x18] sm:$0xf]
  %v28 = vld [vmem:[%s1 + $0x1c] sm:$0xf]
  %v29 = vld [vmem:[%s1 + $0x20] sm:$0xf]
  %v30 = vld [vmem:[%s1 + $0x24] sm:$0xf]
  %v31 = vld [vmem:[%s1 + $0x28] sm:$0xf]
  %v32 = vld [vmem:[%s1 + $0x2c] sm:$0xf]
  %v33 = vld [vmem:[%s1 + $0x30] sm:$0xf]
  %v34 = vld [vmem:[%s1 + $0x34] sm:$0xf]
  %v35 = vld [vmem:[%s1 + $0x38] sm:$0xf]
  %v36 = vld [vmem:[%s1 + $0x3c] sm:$0xf]
  %v37 = vld [vmem:[%s1 + $0x40] sm:$0xf]
  %v38 = vld [vmem:[%s1 + $0x44] sm:$0xf]
  %v39 = vld [vmem:[%s1 + $0x48] sm:$0xf]
  %v40 = vld [vmem:[%s1 + $0x4c] sm:$0xf]
  %v41 = vld [vmem:[%s1 + $0x50] sm:$0xf]
  %v42 = vld [vmem:[%s1 + $0x54] sm:$0xf]
  %v43 = vld [vmem:[%s1 + $0x58] sm:$0xf]
  %v44 = vld [vmem:[%s1 + $0x5c] sm:$0xf]
  %v45 = vld [vmem:[%s1 + $0x60] sm:$0xf]
  %v46 = vld [vmem:[%s1 + $0x64] sm:$0xf]
  %v47 = vld [vmem:[%s1 + $0x68] sm:$0xf]
  %v48 = vld [vmem:[%s1 + $0x6c] sm:$0xf]
  %v49 = vld [vmem:[%s1 + $0x70] sm:$0xf]
  %v50 = vld [vmem:[%s1 + $0x74] sm:$0xf]
  %v51 = vld [vmem:[%s1 + $0x78] sm:$0xf]
  %v52 = vld [vmem:[%s1 + $0x7c] sm:$0xf]
  %v53 = vld [vmem:[%s2] sm:$0xff]
  %v54 = vld [vmem:[%s2 + $0x8] sm:$0xff]
  %v87 = vunpack.c.l.b16 %v21
  %v88 = vunpack.c.l.b16 %v22
  %v89 = vunpack.c.l.b16 %v23
  %v90 = vunpack.c.l.b16 %v24
  %v91 = vunpack.c.l.b16 %v25
  %v92 = vunpack.c.l.b16 %v26
  %v93 = vunpack.c.l.b16 %v27
  %v94 = vunpack.c.l.b16 %v28
  %v95 = vunpack.c.l.b16 %v29
  %v96 = vunpack.c.l.b16 %v30
  %v97 = vunpack.c.l.b16 %v31
  %v98 = vunpack.c.l.b16 %v32
  %v99 = vunpack.c.l.b16 %v33
  %v100 = vunpack.c.l.b16 %v34
  %v101 = vunpack.c.l.b16 %v35
  %v102 = vunpack.c.l.b16 %v36
  %v103 = vunpack.c.l.b16 %v37
  %v104 = vunpack.c.l.b16 %v38
  %v105 = vunpack.c.l.b16 %v39
  %v106 = vunpack.c.l.b16 %v40
  %v107 = vunpack.c.l.b16 %v41
  %v108 = vunpack.c.l.b16 %v42
  %v109 = vunpack.c.l.b16 %v43
  %v110 = vunpack.c.l.b16 %v44
  %v111 = vunpack.c.l.b16 %v45
  %v112 = vunpack.c.l.b16 %v46
  %v113 = vunpack.c.l.b16 %v47
  %v114 = vunpack.c.l.b16 %v48
  %v115 = vunpack.c.l.b16 %v49
  %v116 = vunpack.c.l.b16 %v50
  %v117 = vunpack.c.l.b16 %v51
  %v118 = vunpack.c.l.b16 %v52
  %v119 = vpack.c.b16 %v88, %v87
  %v120 = vpack.c.b16 %v90, %v89
  %v121 = vpack.c.b16 %v92, %v91
  %v122 = vpack.c.b16 %v94, %v93
  %v123 = vpack.c.b16 %v96, %v95
  %v124 = vpack.c.b16 %v98, %v97
  %v125 = vpack.c.b16 %v100, %v99
  %v126 = vpack.c.b16 %v102, %v101
  %v127 = vpack.c.b16 %v104, %v103
  %v128 = vpack.c.b16 %v106, %v105
  %v129 = vpack.c.b16 %v108, %v107
  %v130 = vpack.c.b16 %v110, %v109
  %v131 = vpack.c.b16 %v112, %v111
  %v132 = vpack.c.b16 %v114, %v113
  %v133 = vpack.c.b16 %v116, %v115
  %v134 = vpack.c.b16 %v118, %v117
  %151 = vmatprep.subr.bf16.mxu0 0
  %152 = vmatpush1.bf16.msra.mxu0 %v126
  %153 = vmatprep.subr.bf16.mxu0 0
  %154 = vmatpush1.bf16.msra.mxu0 %v125
  %155 = vmatprep.subr.bf16.mxu0 0
  %156 = vmatpush1.bf16.msra.mxu0 %v124
  %157 = vmatprep.subr.bf16.mxu0 0
  %158 = vmatpush1.bf16.msra.mxu0 %v123
  %159 = vmatprep.subr.bf16.mxu0 0
  %160 = vmatpush1.bf16.msra.mxu0 %v122
  %161 = vmatprep.subr.bf16.mxu0 0
  %162 = vmatpush1.bf16.msra.mxu0 %v121
  %163 = vmatprep.subr.bf16.mxu0 0
  %164 = vmatpush1.bf16.msra.mxu0 %v120
  %165 = vmatprep.subr.bf16.mxu0 0
  %166 = vmatpush1.bf16.msra.mxu0 %v119
  %167 = vmatprep.subr.bf16.mxu0 0
  %168 = vmatpush2.bf16.msra.mxu0 %v134
  %169 = vmatprep.subr.bf16.mxu0 0
  %170 = vmatpush2.bf16.msra.mxu0 %v133
  %171 = vmatprep.subr.bf16.mxu0 0
  %172 = vmatpush2.bf16.msra.mxu0 %v132
  %173 = vmatprep.subr.bf16.mxu0 0
  %174 = vmatpush2.bf16.msra.mxu0 %v131
  %175 = vmatprep.subr.bf16.mxu0 0
  %176 = vmatpush2.bf16.msra.mxu0 %v130
  %177 = vmatprep.subr.bf16.mxu0 0
  %178 = vmatpush2.bf16.msra.mxu0 %v129
  %179 = vmatprep.subr.bf16.mxu0 0
  %180 = vmatpush2.bf16.msra.mxu0 %v128
  %181 = vmatprep.subr.bf16.mxu0 0
  %182 = vmatpush2.bf16.msra.mxu0 %v127
  %183 = vmatprep.mubr.bf16.mxu0 %v20
  %184 = vmatmul.mubr.bf16.gmra.mxu0 %v19
  %v185 = vpop.f32.mrf.mxu0
  %v186 = vadd.f32 %v53, %v185
  %v187 = vpop.f32.mrf.mxu0
  %v188 = vpop.f32.mrf.mxu0
  %v189 = vadd.f32 %v54, %v188
  %v190 = vpop.f32.mrf.mxu0
  %191 = vdwg.mxu0
  %v192 = vld [vmem:[%s2 + $0x10] sm:$0xff]
  %v193 = vld [vmem:[%s2 + $0x18] sm:$0xff]
  %v194 = vlaneseq
  %v195 = vand.u32 %v194, 127
  %vm196 = vcmp.ge.s32.totalorder %v195, 0
  %vm197 = vcmp.lt.s32.totalorder %v195, 8
  %vm198 = vmand %vm196, %vm197
  %v199 = vsel %vm198, 1, 0
  %v200 = vcvt.s32.f32 %v199
  %vm201 = vcmp.ge.s32.totalorder %v195, 8
  %vm202 = vcmp.lt.s32.totalorder %v195, 16
  %vm203 = vmand %vm201, %vm202
  %v204 = vsel %vm203, 1, 0
  %v205 = vcvt.s32.f32 %v204
  %vm206 = vcmp.ge.s32.totalorder %v195, 16
  %vm207 = vcmp.lt.s32.totalorder %v195, 24
  %vm208 = vmand %vm206, %vm207
  %v209 = vsel %vm208, 1, 0
  %v210 = vcvt.s32.f32 %v209
  %vm211 = vcmp.ge.s32.totalorder %v195, 24
  %vm212 = vcmp.lt.s32.totalorder %v195, 32
  %vm213 = vmand %vm211, %vm212
  %v214 = vsel %vm213, 1, 0
  %v215 = vcvt.s32.f32 %v214
  %v216 = vld [vmem:[%s2 + $0x20] sm:$0x1]
  %v217 = vld [vmem:[%s2 + $0x21] sm:$0x1]
  %v218 = vld [vmem:[%s2 + $0x22] sm:$0x1]
  %v219 = vld [vmem:[%s2 + $0x23] sm:$0x1]
  %v220 = vld [vmem:[%s2 + $0x24] sm:$0x1]
  %v221 = vld [vmem:[%s2 + $0x25] sm:$0x1]
  %v222 = vld [vmem:[%s2 + $0x26] sm:$0x1]
  %v223 = vld [vmem:[%s2 + $0x27] sm:$0x1]
  %vm224 = vcmask 261120
  %v225 = vsel %vm224, %v186, 0.0
  %226 = vadd.xlane.f32.xlu0 %v225
  %v227 = vpop.xlane.xlu0 %226
  %v228 = vsel %vm224, %v189, 0.0
  %229 = vadd.xlane.f32.xlu0 %v228
  %v230 = vpop.xlane.xlu0 %229
  %v231 = vrcp.pop 32.0
  %v232 = vmul.f32 %v227, %v231
  %v233 = vmul.f32 %v230, %v231
  %v234 = vsub.f32 %v186, %v232
  %v235 = vsub.f32 %v189, %v233
  %v236 = vmul.f32 %v234, %v234
  %v237 = vmul.f32 %v235, %v235
  %v238 = vsel %vm224, %v236, 0.0
  %239 = vadd.xlane.f32.xlu0 %v238
  %v240 = vpop.xlane.xlu0 %239
  %v241 = vsel %vm224, %v237, 0.0
  %242 = vadd.xlane.f32.xlu0 %v241
  %v243 = vpop.xlane.xlu0 %242
  %v244 = vmul.f32 %v240, %v231
  %v245 = vmul.f32 %v243, %v231
  %v246 = vadd.f32 %v244, 1e-05
  %v247 = vadd.f32 %v245, 1e-05
  %v248 = vrsqrt.pop %v246
  %v249 = vrsqrt.pop %v247
  %v250 = vmul.f32 %v234, %v248
  %v251 = vmul.f32 %v235, %v249
  %v252 = vlaneseq
  %v253 = vshrl.u32 %v252, 7
  %v254 = vsub.s32 0, %v253
  %v255 = vrot.slane %v216, %v254
  %v256 = vmul.f32 %v250, %v255
  %v257 = vmul.f32 %v251, %v255
  %v258 = vlaneseq
  %v259 = vshrl.u32 %v258, 7
  %v260 = vsub.s32 0, %v259
  %v261 = vrot.slane %v217, %v260
  %v262 = vadd.f32 %v256, %v261
  %v263 = vadd.f32 %v257, %v261
  %v264 = vpack.c.bf16 %v263, %v262
  %v265 = vld [vmem:[%s1 + $0x80] sm:$0xf]
  %v266 = vld [vmem:[%s1 + $0x84] sm:$0xf]
  %v267 = vld [vmem:[%s1 + $0x88] sm:$0xf]
  %v268 = vld [vmem:[%s1 + $0x8c] sm:$0xf]
  %v269 = vlaneseq
  %v270 = vshrl.u32 %v269, 7
  %v271 = vsub.s32 0, %v270
  %v272 = vrot.slane %v218, %v271
  %v277 = vunpack.c.l.b16 %v265
  %v278 = vunpack.c.l.b16 %v266
  %v279 = vunpack.c.l.b16 %v267
  %v280 = vunpack.c.l.b16 %v268
  %v281 = vpack.c.b16 %v278, %v277
  %v282 = vpack.c.b16 %v280, %v279
  %v286 = vsel %vm224, %v264, 0
  %288 = vmatprep.subr.bf16.mxu0 0
  %289 = vmatpush1.bf16.msra.mxu0 0
  %290 = vmatprep.subr.bf16.mxu0 0
  %291 = vmatpush1.bf16.msra.mxu0 0
  %292 = vmatprep.subr.bf16.mxu0 0
  %293 = vmatpush1.bf16.msra.mxu0 0
  %294 = vmatprep.subr.bf16.mxu0 0
  %295 = vmatpush1.bf16.msra.mxu0 0
  %296 = vmatprep.subr.bf16.mxu0 0
  %297 = vmatpush1.bf16.msra.mxu0 0
  %298 = vmatprep.subr.bf16.mxu0 0
  %299 = vmatpush1.bf16.msra.mxu0 0
  %300 = vmatprep.subr.bf16.mxu0 0
  %301 = vmatpush1.bf16.msra.mxu0 %v282
  %302 = vmatprep.subr.bf16.mxu0 0
  %303 = vmatpush1.bf16.msra.mxu0 %v281
  %304 = vmatprep.subr.bf16.mxu0 0
  %305 = vmatpush2.bf16.msra.mxu0 0
  %306 = vmatprep.subr.bf16.mxu0 0
  %307 = vmatpush2.bf16.msra.mxu0 0
  %308 = vmatprep.subr.bf16.mxu0 0
  %309 = vmatpush2.bf16.msra.mxu0 0
  %310 = vmatprep.subr.bf16.mxu0 0
  %311 = vmatpush2.bf16.msra.mxu0 0
  %312 = vmatprep.subr.bf16.mxu0 0
  %313 = vmatpush2.bf16.msra.mxu0 0
  %314 = vmatprep.subr.bf16.mxu0 0
  %315 = vmatpush2.bf16.msra.mxu0 0
  %316 = vmatprep.subr.bf16.mxu0 0
  %317 = vmatpush2.bf16.msra.mxu0 0
  %318 = vmatprep.subr.bf16.mxu0 0
  %319 = vmatpush2.bf16.msra.mxu0 0
  %320 = vmatprep.mubr.bf16.mxu0 0
  %321 = vmatmul.mubr.bf16.gmra.mxu0 %v286
  %v322 = vpop.f32.mrf.mxu0
  %v323 = vadd.f32 %v272, %v322
  %v324 = vpop.f32.mrf.mxu0
  %v325 = vpop.f32.mrf.mxu0
  %v326 = vadd.f32 %v272, %v325
  %v327 = vpop.f32.mrf.mxu0
  %328 = vdwg.mxu0
  %331 = vrot.lane.b32.xlu0 %v323, 96
  %v332 = vpop.permute.xlu0 %331
  %333 = vrot.lane.b32.xlu0 %v326, 96
  %v334 = vpop.permute.xlu0 %333
  %vm335 = vcmask 64512
  %v336 = vsel %vm335, %v323, 0
  %v338 = vsel %vm335, %v326, 0
  %v340 = vsel %vm335, %v332, 0
  %v342 = vsel %vm335, %v334, 0
  %344 = vmatprep.subr.mxu0 0.0
  %345 = vmatpush1.xpose.msra.mxu0 0.0
  %346 = vmatprep.subr.mxu0 0.0
  %347 = vmatpush1.xpose.msra.mxu0 0.0
  %348 = vmatprep.subr.mxu0 0.0
  %349 = vmatpush1.xpose.msra.mxu0 0.0
  %350 = vmatprep.subr.mxu0 0.0
  %351 = vmatpush1.xpose.msra.mxu0 0.0
  %352 = vmatprep.subr.mxu0 0.0
  %353 = vmatpush1.xpose.msra.mxu0 0.0
  %354 = vmatprep.subr.mxu0 0.0
  %355 = vmatpush1.xpose.msra.mxu0 0.0
  %356 = vmatprep.subr.mxu0 0.0
  %357 = vmatpush1.xpose.msra.mxu0 0.0
  %358 = vmatprep.subr.mxu0 0.0
  %359 = vmatpush1.xpose.msra.mxu0 0.0
  %360 = vmatprep.subr.mxu0 0.0
  %361 = vmatpush1.xpose.msra.mxu0 0.0
  %362 = vmatprep.subr.mxu0 0.0
  %363 = vmatpush1.xpose.msra.mxu0 0.0
  %364 = vmatprep.subr.mxu0 0.0
  %365 = vmatpush1.xpose.msra.mxu0 0.0
  %366 = vmatprep.subr.mxu0 0.0
  %367 = vmatpush1.xpose.msra.mxu0 0.0
  %368 = vmatprep.subr.mxu0 0.0
  %369 = vmatpush1.xpose.msra.mxu0 0.0
  %370 = vmatprep.subr.mxu0 0.0
  %371 = vmatpush1.xpose.msra.mxu0 0.0
  %372 = vmatprep.subr.mxu0 0.0
  %373 = vmatpush1.xpose.msra.mxu0 %v342
  %374 = vmatprep.subr.mxu0 0.0
  %375 = vmatpush1.xpose.msra.mxu0 %v340
  %376 = vmatprep.subr.mxu0 0.0
  %377 = vmatpush2.xpose.msra.mxu0 0.0
  %378 = vmatprep.subr.mxu0 0.0
  %379 = vmatpush2.xpose.msra.mxu0 0.0
  %380 = vmatprep.subr.mxu0 0.0
  %381 = vmatpush2.xpose.msra.mxu0 0.0
  %382 = vmatprep.subr.mxu0 0.0
  %383 = vmatpush2.xpose.msra.mxu0 0.0
  %384 = vmatprep.subr.mxu0 0.0
  %385 = vmatpush2.xpose.msra.mxu0 0.0
  %386 = vmatprep.subr.mxu0 0.0
  %387 = vmatpush2.xpose.msra.mxu0 0.0
  %388 = vmatprep.subr.mxu0 0.0
  %389 = vmatpush2.xpose.msra.mxu0 0.0
  %390 = vmatprep.subr.mxu0 0.0
  %391 = vmatpush2.xpose.msra.mxu0 0.0
  %392 = vmatprep.subr.mxu0 0.0
  %393 = vmatpush2.xpose.msra.mxu0 0.0
  %394 = vmatprep.subr.mxu0 0.0
  %395 = vmatpush2.xpose.msra.mxu0 0.0
  %396 = vmatprep.subr.mxu0 0.0
  %397 = vmatpush2.xpose.msra.mxu0 0.0
  %398 = vmatprep.subr.mxu0 0.0
  %399 = vmatpush2.xpose.msra.mxu0 0.0
  %400 = vmatprep.subr.mxu0 0.0
  %401 = vmatpush2.xpose.msra.mxu0 0.0
  %402 = vmatprep.subr.mxu0 0.0
  %403 = vmatpush2.xpose.msra.mxu0 0.0
  %404 = vmatprep.subr.mxu0 0.0
  %405 = vmatpush2.xpose.msra.mxu0 0.0
  %406 = vmatprep.subr.mxu0 0.0
  %407 = vmatpush2.xpose.msra.mxu0 0.0
  %408 = vmatprep.mubr.f32.mxu0 0.0
  %409 = vmatmul.mubr.f32.gmra.mxu0 %v336
  %v410 = vpop.f32.mrf.mxu0
  %v411 = vadd.f32 %v192, %v410
  %v412 = vpop.f32.mrf.mxu0
  %413 = vmatprep.mubr.f32.mxu0 0.0
  %414 = vmatmul.mubr.f32.gmra.mxu0 %v338
  %v415 = vpop.f32.mrf.mxu0
  %v416 = vadd.f32 %v193, %v415
  %v417 = vpop.f32.mrf.mxu0
  %418 = vdwg.mxu0
  %vm419 = vcmask 130048
  %v420 = vsel %vm419, %v411, -inf
  %421 = vmax.xlane.f32.xlu0 %v420
  %v422 = vpop.xlane.xlu0 %421
  %v423 = vsel %vm419, %v416, -inf
  %424 = vmax.xlane.f32.xlu0 %v423
  %v425 = vpop.xlane.xlu0 %424
  %v426 = vsub.f32 %v411, %v422
  %v427 = vsub.f32 %v416, %v425
  %v428 = vmul.f32 %v426, 1.442695
  %v429 = vpow.pop %v428
  %v430 = vmul.f32 %v427, 1.442695
  %v431 = vpow.pop %v430
  %v432 = vsel %vm419, %v429, 0.0
  %433 = vadd.xlane.f32.xlu0 %v432
  %v434 = vpop.xlane.xlu0 %433
  %v435 = vsel %vm419, %v431, 0.0
  %436 = vadd.xlane.f32.xlu0 %v435
  %v437 = vpop.xlane.xlu0 %436
  %v438 = vrcp.pop %v434
  %v439 = vrcp.pop %v437
  %v440 = vmul.f32 %v429, %v438
  %v441 = vmul.f32 %v431, %v439
  %442 = vrot.lane.b32.xlu0 %v323, 64
  %v443 = vpop.permute.xlu0 %442
  %444 = vrot.lane.b32.xlu0 %v326, 64
  %v445 = vpop.permute.xlu0 %444
  %v449 = vsel %vm419, %v440, 0
  %v452 = vsel %vm419, %v441, 0
  %454 = vmatprep.subr.mxu0 0.0
  %455 = vmatpush1.msra.mxu0 0.0
  %456 = vmatprep.subr.mxu0 0.0
  %457 = vmatpush1.msra.mxu0 0.0
  %458 = vmatprep.subr.mxu0 0.0
  %459 = vmatpush1.msra.mxu0 0.0
  %460 = vmatprep.subr.mxu0 0.0
  %461 = vmatpush1.msra.mxu0 0.0
  %462 = vmatprep.subr.mxu0 0.0
  %463 = vmatpush1.msra.mxu0 0.0
  %464 = vmatprep.subr.mxu0 0.0
  %465 = vmatpush1.msra.mxu0 0.0
  %466 = vmatprep.subr.mxu0 0.0
  %467 = vmatpush1.msra.mxu0 0.0
  %468 = vmatprep.subr.mxu0 0.0
  %469 = vmatpush1.msra.mxu0 0.0
  %470 = vmatprep.subr.mxu0 0.0
  %471 = vmatpush1.msra.mxu0 0.0
  %472 = vmatprep.subr.mxu0 0.0
  %473 = vmatpush1.msra.mxu0 0.0
  %474 = vmatprep.subr.mxu0 0.0
  %475 = vmatpush1.msra.mxu0 0.0
  %476 = vmatprep.subr.mxu0 0.0
  %477 = vmatpush1.msra.mxu0 0.0
  %478 = vmatprep.subr.mxu0 0.0
  %479 = vmatpush1.msra.mxu0 0.0
  %480 = vmatprep.subr.mxu0 0.0
  %481 = vmatpush1.msra.mxu0 0.0
  %482 = vmatprep.subr.mxu0 0.0
  %483 = vmatpush1.msra.mxu0 %v445
  %484 = vmatprep.subr.mxu0 0.0
  %485 = vmatpush1.msra.mxu0 %v443
  %486 = vmatprep.subr.mxu0 0.0
  %487 = vmatpush2.msra.mxu0 0.0
  %488 = vmatprep.subr.mxu0 0.0
  %489 = vmatpush2.msra.mxu0 0.0
  %490 = vmatprep.subr.mxu0 0.0
  %491 = vmatpush2.msra.mxu0 0.0
  %492 = vmatprep.subr.mxu0 0.0
  %493 = vmatpush2.msra.mxu0 0.0
  %494 = vmatprep.subr.mxu0 0.0
  %495 = vmatpush2.msra.mxu0 0.0
  %496 = vmatprep.subr.mxu0 0.0
  %497 = vmatpush2.msra.mxu0 0.0
  %498 = vmatprep.subr.mxu0 0.0
  %499 = vmatpush2.msra.mxu0 0.0
  %500 = vmatprep.subr.mxu0 0.0
  %501 = vmatpush2.msra.mxu0 0.0
  %502 = vmatprep.subr.mxu0 0.0
  %503 = vmatpush2.msra.mxu0 0.0
  %504 = vmatprep.subr.mxu0 0.0
  %505 = vmatpush2.msra.mxu0 0.0
  %506 = vmatprep.subr.mxu0 0.0
  %507 = vmatpush2.msra.mxu0 0.0
  %508 = vmatprep.subr.mxu0 0.0
  %509 = vmatpush2.msra.mxu0 0.0
  %510 = vmatprep.subr.mxu0 0.0
  %511 = vmatpush2.msra.mxu0 0.0
  %512 = vmatprep.subr.mxu0 0.0
  %513 = vmatpush2.msra.mxu0 0.0
  %514 = vmatprep.subr.mxu0 0.0
  %515 = vmatpush2.msra.mxu0 0.0
  %516 = vmatprep.subr.mxu0 0.0
  %517 = vmatpush2.msra.mxu0 0.0
  %518 = vmatprep.mubr.f32.mxu0 0.0
  %519 = vmatmul.mubr.f32.gmra.mxu0 %v449
  %v520 = vpop.f32.mrf.mxu0
  %v521 = vadd.f32 0.0, %v520
  %v522 = vpop.f32.mrf.mxu0
  %523 = vmatprep.mubr.f32.mxu0 0.0
  %524 = vmatmul.mubr.f32.gmra.mxu0 %v452
  %v525 = vpop.f32.mrf.mxu0
  %v526 = vadd.f32 0.0, %v525
  %v527 = vpop.f32.mrf.mxu0
  %528 = vdwg.mxu0
  %v529 = vmul.f32 %v521, %v200
  %v530 = vmul.f32 %v526, %v200
  %v531 = vadd.f32 %v529, 0.0
  %v532 = vadd.f32 %v530, 0.0
  %533 = vrot.lane.b32.xlu0 %v323, 120
  %v534 = vpop.permute.xlu0 %533
  %535 = vrot.lane.b32.xlu0 %v326, 120
  %v536 = vpop.permute.xlu0 %535
  %537 = vrot.lane.b32.xlu0 %v323, 88
  %v538 = vpop.permute.xlu0 %537
  %539 = vrot.lane.b32.xlu0 %v326, 88
  %v540 = vpop.permute.xlu0 %539
  %v541 = vsel %vm335, %v534, 0
  %v543 = vsel %vm335, %v536, 0
  %v545 = vsel %vm335, %v538, 0
  %v547 = vsel %vm335, %v540, 0
  %549 = vmatprep.subr.mxu0 0.0
  %550 = vmatpush1.xpose.msra.mxu0 0.0
  %551 = vmatprep.subr.mxu0 0.0
  %552 = vmatpush1.xpose.msra.mxu0 0.0
  %553 = vmatprep.subr.mxu0 0.0
  %554 = vmatpush1.xpose.msra.mxu0 0.0
  %555 = vmatprep.subr.mxu0 0.0
  %556 = vmatpush1.xpose.msra.mxu0 0.0
  %557 = vmatprep.subr.mxu0 0.0
  %558 = vmatpush1.xpose.msra.mxu0 0.0
  %559 = vmatprep.subr.mxu0 0.0
  %560 = vmatpush1.xpose.msra.mxu0 0.0
  %561 = vmatprep.subr.mxu0 0.0
  %562 = vmatpush1.xpose.msra.mxu0 0.0
  %563 = vmatprep.subr.mxu0 0.0
  %564 = vmatpush1.xpose.msra.mxu0 0.0
  %565 = vmatprep.subr.mxu0 0.0
  %566 = vmatpush1.xpose.msra.mxu0 0.0
  %567 = vmatprep.subr.mxu0 0.0
  %568 = vmatpush1.xpose.msra.mxu0 0.0
  %569 = vmatprep.subr.mxu0 0.0
  %570 = vmatpush1.xpose.msra.mxu0 0.0
  %571 = vmatprep.subr.mxu0 0.0
  %572 = vmatpush1.xpose.msra.mxu0 0.0
  %573 = vmatprep.subr.mxu0 0.0
  %574 = vmatpush1.xpose.msra.mxu0 0.0
  %575 = vmatprep.subr.mxu0 0.0
  %576 = vmatpush1.xpose.msra.mxu0 0.0
  %577 = vmatprep.subr.mxu0 0.0
  %578 = vmatpush1.xpose.msra.mxu0 %v547
  %579 = vmatprep.subr.mxu0 0.0
  %580 = vmatpush1.xpose.msra.mxu0 %v545
  %581 = vmatprep.subr.mxu0 0.0
  %582 = vmatpush2.xpose.msra.mxu0 0.0
  %583 = vmatprep.subr.mxu0 0.0
  %584 = vmatpush2.xpose.msra.mxu0 0.0
  %585 = vmatprep.subr.mxu0 0.0
  %586 = vmatpush2.xpose.msra.mxu0 0.0
  %587 = vmatprep.subr.mxu0 0.0
  %588 = vmatpush2.xpose.msra.mxu0 0.0
  %589 = vmatprep.subr.mxu0 0.0
  %590 = vmatpush2.xpose.msra.mxu0 0.0
  %591 = vmatprep.subr.mxu0 0.0
  %592 = vmatpush2.xpose.msra.mxu0 0.0
  %593 = vmatprep.subr.mxu0 0.0
  %594 = vmatpush2.xpose.msra.mxu0 0.0
  %595 = vmatprep.subr.mxu0 0.0
  %596 = vmatpush2.xpose.msra.mxu0 0.0
  %597 = vmatprep.subr.mxu0 0.0
  %598 = vmatpush2.xpose.msra.mxu0 0.0
  %599 = vmatprep.subr.mxu0 0.0
  %600 = vmatpush2.xpose.msra.mxu0 0.0
  %601 = vmatprep.subr.mxu0 0.0
  %602 = vmatpush2.xpose.msra.mxu0 0.0
  %603 = vmatprep.subr.mxu0 0.0
  %604 = vmatpush2.xpose.msra.mxu0 0.0
  %605 = vmatprep.subr.mxu0 0.0
  %606 = vmatpush2.xpose.msra.mxu0 0.0
  %607 = vmatprep.subr.mxu0 0.0
  %608 = vmatpush2.xpose.msra.mxu0 0.0
  %609 = vmatprep.subr.mxu0 0.0
  %610 = vmatpush2.xpose.msra.mxu0 0.0
  %611 = vmatprep.subr.mxu0 0.0
  %612 = vmatpush2.xpose.msra.mxu0 0.0
  %613 = vmatprep.mubr.f32.mxu0 0.0
  %614 = vmatmul.mubr.f32.gmra.mxu0 %v541
  %v615 = vpop.f32.mrf.mxu0
  %v616 = vadd.f32 %v192, %v615
  %v617 = vpop.f32.mrf.mxu0
  %618 = vmatprep.mubr.f32.mxu0 0.0
  %619 = vmatmul.mubr.f32.gmra.mxu0 %v543
  %v620 = vpop.f32.mrf.mxu0
  %v621 = vadd.f32 %v193, %v620
  %v622 = vpop.f32.mrf.mxu0
  %623 = vdwg.mxu0
  %v624 = vsel %vm419, %v616, -inf
  %625 = vmax.xlane.f32.xlu0 %v624
  %v626 = vpop.xlane.xlu0 %625
  %v627 = vsel %vm419, %v621, -inf
  %628 = vmax.xlane.f32.xlu0 %v627
  %v629 = vpop.xlane.xlu0 %628
  %v630 = vsub.f32 %v616, %v626
  %v631 = vsub.f32 %v621, %v629
  %v632 = vmul.f32 %v630, 1.442695
  %v633 = vpow.pop %v632
  %v634 = vmul.f32 %v631, 1.442695
  %v635 = vpow.pop %v634
  %v636 = vsel %vm419, %v633, 0.0
  %637 = vadd.xlane.f32.xlu0 %v636
  %v638 = vpop.xlane.xlu0 %637
  %v639 = vsel %vm419, %v635, 0.0
  %640 = vadd.xlane.f32.xlu0 %v639
  %v641 = vpop.xlane.xlu0 %640
  %v642 = vrcp.pop %v638
  %v643 = vrcp.pop %v641
  %v644 = vmul.f32 %v633, %v642
  %v645 = vmul.f32 %v635, %v643
  %v647 = vsel %vm419, %v644, 0
  %v650 = vsel %vm419, %v645, 0
  %652 = vmatprep.subr.mxu0 0.0
  %653 = vmatpush1.msra.mxu0 0.0
  %654 = vmatprep.subr.mxu0 0.0
  %655 = vmatpush1.msra.mxu0 0.0
  %656 = vmatprep.subr.mxu0 0.0
  %657 = vmatpush1.msra.mxu0 0.0
  %658 = vmatprep.subr.mxu0 0.0
  %659 = vmatpush1.msra.mxu0 0.0
  %660 = vmatprep.subr.mxu0 0.0
  %661 = vmatpush1.msra.mxu0 0.0
  %662 = vmatprep.subr.mxu0 0.0
  %663 = vmatpush1.msra.mxu0 0.0
  %664 = vmatprep.subr.mxu0 0.0
  %665 = vmatpush1.msra.mxu0 0.0
  %666 = vmatprep.subr.mxu0 0.0
  %667 = vmatpush1.msra.mxu0 0.0
  %668 = vmatprep.subr.mxu0 0.0
  %669 = vmatpush1.msra.mxu0 0.0
  %670 = vmatprep.subr.mxu0 0.0
  %671 = vmatpush1.msra.mxu0 0.0
  %672 = vmatprep.subr.mxu0 0.0
  %673 = vmatpush1.msra.mxu0 0.0
  %674 = vmatprep.subr.mxu0 0.0
  %675 = vmatpush1.msra.mxu0 0.0
  %676 = vmatprep.subr.mxu0 0.0
  %677 = vmatpush1.msra.mxu0 0.0
  %678 = vmatprep.subr.mxu0 0.0
  %679 = vmatpush1.msra.mxu0 0.0
  %680 = vmatprep.subr.mxu0 0.0
  %681 = vmatpush1.msra.mxu0 %v445
  %682 = vmatprep.subr.mxu0 0.0
  %683 = vmatpush1.msra.mxu0 %v443
  %684 = vmatprep.subr.mxu0 0.0
  %685 = vmatpush2.msra.mxu0 0.0
  %686 = vmatprep.subr.mxu0 0.0
  %687 = vmatpush2.msra.mxu0 0.0
  %688 = vmatprep.subr.mxu0 0.0
  %689 = vmatpush2.msra.mxu0 0.0
  %690 = vmatprep.subr.mxu0 0.0
  %691 = vmatpush2.msra.mxu0 0.0
  %692 = vmatprep.subr.mxu0 0.0
  %693 = vmatpush2.msra.mxu0 0.0
  %694 = vmatprep.subr.mxu0 0.0
  %695 = vmatpush2.msra.mxu0 0.0
  %696 = vmatprep.subr.mxu0 0.0
  %697 = vmatpush2.msra.mxu0 0.0
  %698 = vmatprep.subr.mxu0 0.0
  %699 = vmatpush2.msra.mxu0 0.0
  %700 = vmatprep.subr.mxu0 0.0
  %701 = vmatpush2.msra.mxu0 0.0
  %702 = vmatprep.subr.mxu0 0.0
  %703 = vmatpush2.msra.mxu0 0.0
  %704 = vmatprep.subr.mxu0 0.0
  %705 = vmatpush2.msra.mxu0 0.0
  %706 = vmatprep.subr.mxu0 0.0
  %707 = vmatpush2.msra.mxu0 0.0
  %708 = vmatprep.subr.mxu0 0.0
  %709 = vmatpush2.msra.mxu0 0.0
  %710 = vmatprep.subr.mxu0 0.0
  %711 = vmatpush2.msra.mxu0 0.0
  %712 = vmatprep.subr.mxu0 0.0
  %713 = vmatpush2.msra.mxu0 0.0
  %714 = vmatprep.subr.mxu0 0.0
  %715 = vmatpush2.msra.mxu0 0.0
  %716 = vmatprep.mubr.f32.mxu0 0.0
  %717 = vmatmul.mubr.f32.gmra.mxu0 %v647
  %v718 = vpop.f32.mrf.mxu0
  %v719 = vadd.f32 0.0, %v718
  %v720 = vpop.f32.mrf.mxu0
  %721 = vmatprep.mubr.f32.mxu0 0.0
  %722 = vmatmul.mubr.f32.gmra.mxu0 %v650
  %v723 = vpop.f32.mrf.mxu0
  %v724 = vadd.f32 0.0, %v723
  %v725 = vpop.f32.mrf.mxu0
  %726 = vdwg.mxu0
  %v727 = vmul.f32 %v719, %v205
  %v728 = vmul.f32 %v724, %v205
  %v729 = vadd.f32 %v531, %v727
  %v730 = vadd.f32 %v532, %v728
  %731 = vrot.lane.b32.xlu0 %v323, 112
  %v732 = vpop.permute.xlu0 %731
  %733 = vrot.lane.b32.xlu0 %v326, 112
  %v734 = vpop.permute.xlu0 %733
  %735 = vrot.lane.b32.xlu0 %v323, 80
  %v736 = vpop.permute.xlu0 %735
  %737 = vrot.lane.b32.xlu0 %v326, 80
  %v738 = vpop.permute.xlu0 %737
  %v739 = vsel %vm335, %v732, 0
  %v741 = vsel %vm335, %v734, 0
  %v743 = vsel %vm335, %v736, 0
  %v745 = vsel %vm335, %v738, 0
  %747 = vmatprep.subr.mxu0 0.0
  %748 = vmatpush1.xpose.msra.mxu0 0.0
  %749 = vmatprep.subr.mxu0 0.0
  %750 = vmatpush1.xpose.msra.mxu0 0.0
  %751 = vmatprep.subr.mxu0 0.0
  %752 = vmatpush1.xpose.msra.mxu0 0.0
  %753 = vmatprep.subr.mxu0 0.0
  %754 = vmatpush1.xpose.msra.mxu0 0.0
  %755 = vmatprep.subr.mxu0 0.0
  %756 = vmatpush1.xpose.msra.mxu0 0.0
  %757 = vmatprep.subr.mxu0 0.0
  %758 = vmatpush1.xpose.msra.mxu0 0.0
  %759 = vmatprep.subr.mxu0 0.0
  %760 = vmatpush1.xpose.msra.mxu0 0.0
  %761 = vmatprep.subr.mxu0 0.0
  %762 = vmatpush1.xpose.msra.mxu0 0.0
  %763 = vmatprep.subr.mxu0 0.0
  %764 = vmatpush1.xpose.msra.mxu0 0.0
  %765 = vmatprep.subr.mxu0 0.0
  %766 = vmatpush1.xpose.msra.mxu0 0.0
  %767 = vmatprep.subr.mxu0 0.0
  %768 = vmatpush1.xpose.msra.mxu0 0.0
  %769 = vmatprep.subr.mxu0 0.0
  %770 = vmatpush1.xpose.msra.mxu0 0.0
  %771 = vmatprep.subr.mxu0 0.0
  %772 = vmatpush1.xpose.msra.mxu0 0.0
  %773 = vmatprep.subr.mxu0 0.0
  %774 = vmatpush1.xpose.msra.mxu0 0.0
  %775 = vmatprep.subr.mxu0 0.0
  %776 = vmatpush1.xpose.msra.mxu0 %v745
  %777 = vmatprep.subr.mxu0 0.0
  %778 = vmatpush1.xpose.msra.mxu0 %v743
  %779 = vmatprep.subr.mxu0 0.0
  %780 = vmatpush2.xpose.msra.mxu0 0.0
  %781 = vmatprep.subr.mxu0 0.0
  %782 = vmatpush2.xpose.msra.mxu0 0.0
  %783 = vmatprep.subr.mxu0 0.0
  %784 = vmatpush2.xpose.msra.mxu0 0.0
  %785 = vmatprep.subr.mxu0 0.0
  %786 = vmatpush2.xpose.msra.mxu0 0.0
  %787 = vmatprep.subr.mxu0 0.0
  %788 = vmatpush2.xpose.msra.mxu0 0.0
  %789 = vmatprep.subr.mxu0 0.0
  %790 = vmatpush2.xpose.msra.mxu0 0.0
  %791 = vmatprep.subr.mxu0 0.0
  %792 = vmatpush2.xpose.msra.mxu0 0.0
  %793 = vmatprep.subr.mxu0 0.0
  %794 = vmatpush2.xpose.msra.mxu0 0.0
  %795 = vmatprep.subr.mxu0 0.0
  %796 = vmatpush2.xpose.msra.mxu0 0.0
  %797 = vmatprep.subr.mxu0 0.0
  %798 = vmatpush2.xpose.msra.mxu0 0.0
  %799 = vmatprep.subr.mxu0 0.0
  %800 = vmatpush2.xpose.msra.mxu0 0.0
  %801 = vmatprep.subr.mxu0 0.0
  %802 = vmatpush2.xpose.msra.mxu0 0.0
  %803 = vmatprep.subr.mxu0 0.0
  %804 = vmatpush2.xpose.msra.mxu0 0.0
  %805 = vmatprep.subr.mxu0 0.0
  %806 = vmatpush2.xpose.msra.mxu0 0.0
  %807 = vmatprep.subr.mxu0 0.0
  %808 = vmatpush2.xpose.msra.mxu0 0.0
  %809 = vmatprep.subr.mxu0 0.0
  %810 = vmatpush2.xpose.msra.mxu0 0.0
  %811 = vmatprep.mubr.f32.mxu0 0.0
  %812 = vmatmul.mubr.f32.gmra.mxu0 %v739
  %v813 = vpop.f32.mrf.mxu0
  %v814 = vadd.f32 %v192, %v813
  %v815 = vpop.f32.mrf.mxu0
  %816 = vmatprep.mubr.f32.mxu0 0.0
  %817 = vmatmul.mubr.f32.gmra.mxu0 %v741
  %v818 = vpop.f32.mrf.mxu0
  %v819 = vadd.f32 %v193, %v818
  %v820 = vpop.f32.mrf.mxu0
  %821 = vdwg.mxu0
  %v822 = vsel %vm419, %v814, -inf
  %823 = vmax.xlane.f32.xlu0 %v822
  %v824 = vpop.xlane.xlu0 %823
  %v825 = vsel %vm419, %v819, -inf
  %826 = vmax.xlane.f32.xlu0 %v825
  %v827 = vpop.xlane.xlu0 %826
  %v828 = vsub.f32 %v814, %v824
  %v829 = vsub.f32 %v819, %v827
  %v830 = vmul.f32 %v828, 1.442695
  %v831 = vpow.pop %v830
  %v832 = vmul.f32 %v829, 1.442695
  %v833 = vpow.pop %v832
  %v834 = vsel %vm419, %v831, 0.0
  %835 = vadd.xlane.f32.xlu0 %v834
  %v836 = vpop.xlane.xlu0 %835
  %v837 = vsel %vm419, %v833, 0.0
  %838 = vadd.xlane.f32.xlu0 %v837
  %v839 = vpop.xlane.xlu0 %838
  %v840 = vrcp.pop %v836
  %v841 = vrcp.pop %v839
  %v842 = vmul.f32 %v831, %v840
  %v843 = vmul.f32 %v833, %v841
  %v845 = vsel %vm419, %v842, 0
  %v848 = vsel %vm419, %v843, 0
  %850 = vmatprep.subr.mxu0 0.0
  %851 = vmatpush1.msra.mxu0 0.0
  %852 = vmatprep.subr.mxu0 0.0
  %853 = vmatpush1.msra.mxu0 0.0
  %854 = vmatprep.subr.mxu0 0.0
  %855 = vmatpush1.msra.mxu0 0.0
  %856 = vmatprep.subr.mxu0 0.0
  %857 = vmatpush1.msra.mxu0 0.0
  %858 = vmatprep.subr.mxu0 0.0
  %859 = vmatpush1.msra.mxu0 0.0
  %860 = vmatprep.subr.mxu0 0.0
  %861 = vmatpush1.msra.mxu0 0.0
  %862 = vmatprep.subr.mxu0 0.0
  %863 = vmatpush1.msra.mxu0 0.0
  %864 = vmatprep.subr.mxu0 0.0
  %865 = vmatpush1.msra.mxu0 0.0
  %866 = vmatprep.subr.mxu0 0.0
  %867 = vmatpush1.msra.mxu0 0.0
  %868 = vmatprep.subr.mxu0 0.0
  %869 = vmatpush1.msra.mxu0 0.0
  %870 = vmatprep.subr.mxu0 0.0
  %871 = vmatpush1.msra.mxu0 0.0
  %872 = vmatprep.subr.mxu0 0.0
  %873 = vmatpush1.msra.mxu0 0.0
  %874 = vmatprep.subr.mxu0 0.0
  %875 = vmatpush1.msra.mxu0 0.0
  %876 = vmatprep.subr.mxu0 0.0
  %877 = vmatpush1.msra.mxu0 0.0
  %878 = vmatprep.subr.mxu0 0.0
  %879 = vmatpush1.msra.mxu0 %v445
  %880 = vmatprep.subr.mxu0 0.0
  %881 = vmatpush1.msra.mxu0 %v443
  %882 = vmatprep.subr.mxu0 0.0
  %883 = vmatpush2.msra.mxu0 0.0
  %884 = vmatprep.subr.mxu0 0.0
  %885 = vmatpush2.msra.mxu0 0.0
  %886 = vmatprep.subr.mxu0 0.0
  %887 = vmatpush2.msra.mxu0 0.0
  %888 = vmatprep.subr.mxu0 0.0
  %889 = vmatpush2.msra.mxu0 0.0
  %890 = vmatprep.subr.mxu0 0.0
  %891 = vmatpush2.msra.mxu0 0.0
  %892 = vmatprep.subr.mxu0 0.0
  %893 = vmatpush2.msra.mxu0 0.0
  %894 = vmatprep.subr.mxu0 0.0
  %895 = vmatpush2.msra.mxu0 0.0
  %896 = vmatprep.subr.mxu0 0.0
  %897 = vmatpush2.msra.mxu0 0.0
  %898 = vmatprep.subr.mxu0 0.0
  %899 = vmatpush2.msra.mxu0 0.0
  %900 = vmatprep.subr.mxu0 0.0
  %901 = vmatpush2.msra.mxu0 0.0
  %902 = vmatprep.subr.mxu0 0.0
  %903 = vmatpush2.msra.mxu0 0.0
  %904 = vmatprep.subr.mxu0 0.0
  %905 = vmatpush2.msra.mxu0 0.0
  %906 = vmatprep.subr.mxu0 0.0
  %907 = vmatpush2.msra.mxu0 0.0
  %908 = vmatprep.subr.mxu0 0.0
  %909 = vmatpush2.msra.mxu0 0.0
  %910 = vmatprep.subr.mxu0 0.0
  %911 = vmatpush2.msra.mxu0 0.0
  %912 = vmatprep.subr.mxu0 0.0
  %913 = vmatpush2.msra.mxu0 0.0
  %914 = vmatprep.mubr.f32.mxu0 0.0
  %915 = vmatmul.mubr.f32.gmra.mxu0 %v845
  %v916 = vpop.f32.mrf.mxu0
  %v917 = vadd.f32 0.0, %v916
  %v918 = vpop.f32.mrf.mxu0
  %919 = vmatprep.mubr.f32.mxu0 0.0
  %920 = vmatmul.mubr.f32.gmra.mxu0 %v848
  %v921 = vpop.f32.mrf.mxu0
  %v922 = vadd.f32 0.0, %v921
  %v923 = vpop.f32.mrf.mxu0
  %924 = vdwg.mxu0
  %v925 = vmul.f32 %v917, %v210
  %v926 = vmul.f32 %v922, %v210
  %v927 = vadd.f32 %v729, %v925
  %v928 = vadd.f32 %v730, %v926
  %929 = vrot.lane.b32.xlu0 %v323, 104
  %v930 = vpop.permute.xlu0 %929
  %931 = vrot.lane.b32.xlu0 %v326, 104
  %v932 = vpop.permute.xlu0 %931
  %933 = vrot.lane.b32.xlu0 %v323, 72
  %v934 = vpop.permute.xlu0 %933
  %935 = vrot.lane.b32.xlu0 %v326, 72
  %v936 = vpop.permute.xlu0 %935
  %v937 = vsel %vm335, %v930, 0
  %v939 = vsel %vm335, %v932, 0
  %v941 = vsel %vm335, %v934, 0
  %v943 = vsel %vm335, %v936, 0
  %945 = vmatprep.subr.mxu0 0.0
  %946 = vmatpush1.xpose.msra.mxu0 0.0
  %947 = vmatprep.subr.mxu0 0.0
  %948 = vmatpush1.xpose.msra.mxu0 0.0
  %949 = vmatprep.subr.mxu0 0.0
  %950 = vmatpush1.xpose.msra.mxu0 0.0
  %951 = vmatprep.subr.mxu0 0.0
  %952 = vmatpush1.xpose.msra.mxu0 0.0
  %953 = vmatprep.subr.mxu0 0.0
  %954 = vmatpush1.xpose.msra.mxu0 0.0
  %955 = vmatprep.subr.mxu0 0.0
  %956 = vmatpush1.xpose.msra.mxu0 0.0
  %957 = vmatprep.subr.mxu0 0.0
  %958 = vmatpush1.xpose.msra.mxu0 0.0
  %959 = vmatprep.subr.mxu0 0.0
  %960 = vmatpush1.xpose.msra.mxu0 0.0
  %961 = vmatprep.subr.mxu0 0.0
  %962 = vmatpush1.xpose.msra.mxu0 0.0
  %963 = vmatprep.subr.mxu0 0.0
  %964 = vmatpush1.xpose.msra.mxu0 0.0
  %965 = vmatprep.subr.mxu0 0.0
  %966 = vmatpush1.xpose.msra.mxu0 0.0
  %967 = vmatprep.subr.mxu0 0.0
  %968 = vmatpush1.xpose.msra.mxu0 0.0
  %969 = vmatprep.subr.mxu0 0.0
  %970 = vmatpush1.xpose.msra.mxu0 0.0
  %971 = vmatprep.subr.mxu0 0.0
  %972 = vmatpush1.xpose.msra.mxu0 0.0
  %973 = vmatprep.subr.mxu0 0.0
  %974 = vmatpush1.xpose.msra.mxu0 %v943
  %975 = vmatprep.subr.mxu0 0.0
  %976 = vmatpush1.xpose.msra.mxu0 %v941
  %977 = vmatprep.subr.mxu0 0.0
  %978 = vmatpush2.xpose.msra.mxu0 0.0
  %979 = vmatprep.subr.mxu0 0.0
  %980 = vmatpush2.xpose.msra.mxu0 0.0
  %981 = vmatprep.subr.mxu0 0.0
  %982 = vmatpush2.xpose.msra.mxu0 0.0
  %983 = vmatprep.subr.mxu0 0.0
  %984 = vmatpush2.xpose.msra.mxu0 0.0
  %985 = vmatprep.subr.mxu0 0.0
  %986 = vmatpush2.xpose.msra.mxu0 0.0
  %987 = vmatprep.subr.mxu0 0.0
  %988 = vmatpush2.xpose.msra.mxu0 0.0
  %989 = vmatprep.subr.mxu0 0.0
  %990 = vmatpush2.xpose.msra.mxu0 0.0
  %991 = vmatprep.subr.mxu0 0.0
  %992 = vmatpush2.xpose.msra.mxu0 0.0
  %993 = vmatprep.subr.mxu0 0.0
  %994 = vmatpush2.xpose.msra.mxu0 0.0
  %995 = vmatprep.subr.mxu0 0.0
  %996 = vmatpush2.xpose.msra.mxu0 0.0
  %997 = vmatprep.subr.mxu0 0.0
  %998 = vmatpush2.xpose.msra.mxu0 0.0
  %999 = vmatprep.subr.mxu0 0.0
  %1000 = vmatpush2.xpose.msra.mxu0 0.0
  %1001 = vmatprep.subr.mxu0 0.0
  %1002 = vmatpush2.xpose.msra.mxu0 0.0
  %1003 = vmatprep.subr.mxu0 0.0
  %1004 = vmatpush2.xpose.msra.mxu0 0.0
  %1005 = vmatprep.subr.mxu0 0.0
  %1006 = vmatpush2.xpose.msra.mxu0 0.0
  %1007 = vmatprep.subr.mxu0 0.0
  %1008 = vmatpush2.xpose.msra.mxu0 0.0
  %1009 = vmatprep.mubr.f32.mxu0 0.0
  %1010 = vmatmul.mubr.f32.gmra.mxu0 %v937
  %v1011 = vpop.f32.mrf.mxu0
  %v1012 = vadd.f32 %v192, %v1011
  %v1013 = vpop.f32.mrf.mxu0
  %1014 = vmatprep.mubr.f32.mxu0 0.0
  %1015 = vmatmul.mubr.f32.gmra.mxu0 %v939
  %v1016 = vpop.f32.mrf.mxu0
  %v1017 = vadd.f32 %v193, %v1016
  %v1018 = vpop.f32.mrf.mxu0
  %1019 = vdwg.mxu0
  %v1020 = vsel %vm419, %v1012, -inf
  %1021 = vmax.xlane.f32.xlu0 %v1020
  %v1022 = vpop.xlane.xlu0 %1021
  %v1023 = vsel %vm419, %v1017, -inf
  %1024 = vmax.xlane.f32.xlu0 %v1023
  %v1025 = vpop.xlane.xlu0 %1024
  %v1026 = vsub.f32 %v1012, %v1022
  %v1027 = vsub.f32 %v1017, %v1025
  %v1028 = vmul.f32 %v1026, 1.442695
  %v1029 = vpow.pop %v1028
  %v1030 = vmul.f32 %v1027, 1.442695
  %v1031 = vpow.pop %v1030
  %v1032 = vsel %vm419, %v1029, 0.0
  %1033 = vadd.xlane.f32.xlu0 %v1032
  %v1034 = vpop.xlane.xlu0 %1033
  %v1035 = vsel %vm419, %v1031, 0.0
  %1036 = vadd.xlane.f32.xlu0 %v1035
  %v1037 = vpop.xlane.xlu0 %1036
  %v1038 = vrcp.pop %v1034
  %v1039 = vrcp.pop %v1037
  %v1040 = vmul.f32 %v1029, %v1038
  %v1041 = vmul.f32 %v1031, %v1039
  %v1043 = vsel %vm419, %v1040, 0
  %v1046 = vsel %vm419, %v1041, 0
  %1048 = vmatprep.subr.mxu0 0.0
  %1049 = vmatpush1.msra.mxu0 0.0
  %1050 = vmatprep.subr.mxu0 0.0
  %1051 = vmatpush1.msra.mxu0 0.0
  %1052 = vmatprep.subr.mxu0 0.0
  %1053 = vmatpush1.msra.mxu0 0.0
  %1054 = vmatprep.subr.mxu0 0.0
  %1055 = vmatpush1.msra.mxu0 0.0
  %1056 = vmatprep.subr.mxu0 0.0
  %1057 = vmatpush1.msra.mxu0 0.0
  %1058 = vmatprep.subr.mxu0 0.0
  %1059 = vmatpush1.msra.mxu0 0.0
  %1060 = vmatprep.subr.mxu0 0.0
  %1061 = vmatpush1.msra.mxu0 0.0
  %1062 = vmatprep.subr.mxu0 0.0
  %1063 = vmatpush1.msra.mxu0 0.0
  %1064 = vmatprep.subr.mxu0 0.0
  %1065 = vmatpush1.msra.mxu0 0.0
  %1066 = vmatprep.subr.mxu0 0.0
  %1067 = vmatpush1.msra.mxu0 0.0
  %1068 = vmatprep.subr.mxu0 0.0
  %1069 = vmatpush1.msra.mxu0 0.0
  %1070 = vmatprep.subr.mxu0 0.0
  %1071 = vmatpush1.msra.mxu0 0.0
  %1072 = vmatprep.subr.mxu0 0.0
  %1073 = vmatpush1.msra.mxu0 0.0
  %1074 = vmatprep.subr.mxu0 0.0
  %1075 = vmatpush1.msra.mxu0 0.0
  %1076 = vmatprep.subr.mxu0 0.0
  %1077 = vmatpush1.msra.mxu0 %v445
  %1078 = vmatprep.subr.mxu0 0.0
  %1079 = vmatpush1.msra.mxu0 %v443
  %1080 = vmatprep.subr.mxu0 0.0
  %1081 = vmatpush2.msra.mxu0 0.0
  %1082 = vmatprep.subr.mxu0 0.0
  %1083 = vmatpush2.msra.mxu0 0.0
  %1084 = vmatprep.subr.mxu0 0.0
  %1085 = vmatpush2.msra.mxu0 0.0
  %1086 = vmatprep.subr.mxu0 0.0
  %1087 = vmatpush2.msra.mxu0 0.0
  %1088 = vmatprep.subr.mxu0 0.0
  %1089 = vmatpush2.msra.mxu0 0.0
  %1090 = vmatprep.subr.mxu0 0.0
  %1091 = vmatpush2.msra.mxu0 0.0
  %1092 = vmatprep.subr.mxu0 0.0
  %1093 = vmatpush2.msra.mxu0 0.0
  %1094 = vmatprep.subr.mxu0 0.0
  %1095 = vmatpush2.msra.mxu0 0.0
  %1096 = vmatprep.subr.mxu0 0.0
  %1097 = vmatpush2.msra.mxu0 0.0
  %1098 = vmatprep.subr.mxu0 0.0
  %1099 = vmatpush2.msra.mxu0 0.0
  %1100 = vmatprep.subr.mxu0 0.0
  %1101 = vmatpush2.msra.mxu0 0.0
  %1102 = vmatprep.subr.mxu0 0.0
  %1103 = vmatpush2.msra.mxu0 0.0
  %1104 = vmatprep.subr.mxu0 0.0
  %1105 = vmatpush2.msra.mxu0 0.0
  %1106 = vmatprep.subr.mxu0 0.0
  %1107 = vmatpush2.msra.mxu0 0.0
  %1108 = vmatprep.subr.mxu0 0.0
  %1109 = vmatpush2.msra.mxu0 0.0
  %1110 = vmatprep.subr.mxu0 0.0
  %1111 = vmatpush2.msra.mxu0 0.0
  %1112 = vmatprep.mubr.f32.mxu0 0.0
  %1113 = vmatmul.mubr.f32.gmra.mxu0 %v1043
  %v1114 = vpop.f32.mrf.mxu0
  %v1115 = vadd.f32 0.0, %v1114
  %v1116 = vpop.f32.mrf.mxu0
  %1117 = vmatprep.mubr.f32.mxu0 0.0
  %1118 = vmatmul.mubr.f32.gmra.mxu0 %v1046
  %v1119 = vpop.f32.mrf.mxu0
  %v1120 = vadd.f32 0.0, %v1119
  %v1121 = vpop.f32.mrf.mxu0
  %1122 = vdwg.mxu0
  %v1123 = vmul.f32 %v1115, %v215
  %v1124 = vmul.f32 %v1120, %v215
  %v1125 = vadd.f32 %v927, %v1123
  %v1126 = vadd.f32 %v928, %v1124
  %v1127 = vpack.c.bf16 %v1126, %v1125
  %v1128 = vld [vmem:[%s1 + $0x90] sm:$0xf]
  %v1129 = vld [vmem:[%s1 + $0x94] sm:$0xf]
  %v1130 = vld [vmem:[%s1 + $0x98] sm:$0xf]
  %v1131 = vld [vmem:[%s1 + $0x9c] sm:$0xf]
  %v1132 = vlaneseq
  %v1133 = vshrl.u32 %v1132, 7
  %v1134 = vsub.s32 0, %v1133
  %v1135 = vrot.slane %v219, %v1134
  %v1140 = vunpack.c.l.b16 %v1128
  %v1141 = vunpack.c.l.b16 %v1129
  %v1142 = vunpack.c.l.b16 %v1130
  %v1143 = vunpack.c.l.b16 %v1131
  %v1144 = vpack.c.b16 %v1141, %v1140
  %v1145 = vpack.c.b16 %v1143, %v1142
  %v1149 = vsel %vm224, %v1127, 0
  %1151 = vmatprep.subr.bf16.mxu0 0
  %1152 = vmatpush1.bf16.msra.mxu0 0
  %1153 = vmatprep.subr.bf16.mxu0 0
  %1154 = vmatpush1.bf16.msra.mxu0 0
  %1155 = vmatprep.subr.bf16.mxu0 0
  %1156 = vmatpush1.bf16.msra.mxu0 0
  %1157 = vmatprep.subr.bf16.mxu0 0
  %1158 = vmatpush1.bf16.msra.mxu0 0
  %1159 = vmatprep.subr.bf16.mxu0 0
  %1160 = vmatpush1.bf16.msra.mxu0 0
  %1161 = vmatprep.subr.bf16.mxu0 0
  %1162 = vmatpush1.bf16.msra.mxu0 0
  %1163 = vmatprep.subr.bf16.mxu0 0
  %1164 = vmatpush1.bf16.msra.mxu0 %v1145
  %1165 = vmatprep.subr.bf16.mxu0 0
  %1166 = vmatpush1.bf16.msra.mxu0 %v1144
  %1167 = vmatprep.subr.bf16.mxu0 0
  %1168 = vmatpush2.bf16.msra.mxu0 0
  %1169 = vmatprep.subr.bf16.mxu0 0
  %1170 = vmatpush2.bf16.msra.mxu0 0
  %1171 = vmatprep.subr.bf16.mxu0 0
  %1172 = vmatpush2.bf16.msra.mxu0 0
  %1173 = vmatprep.subr.bf16.mxu0 0
  %1174 = vmatpush2.bf16.msra.mxu0 0
  %1175 = vmatprep.subr.bf16.mxu0 0
  %1176 = vmatpush2.bf16.msra.mxu0 0
  %1177 = vmatprep.subr.bf16.mxu0 0
  %1178 = vmatpush2.bf16.msra.mxu0 0
  %1179 = vmatprep.subr.bf16.mxu0 0
  %1180 = vmatpush2.bf16.msra.mxu0 0
  %1181 = vmatprep.subr.bf16.mxu0 0
  %1182 = vmatpush2.bf16.msra.mxu0 0
  %1183 = vmatprep.mubr.bf16.mxu0 0
  %1184 = vmatmul.mubr.bf16.gmra.mxu0 %v1149
  %v1185 = vpop.f32.mrf.mxu0
  %v1186 = vadd.f32 %v1135, %v1185
  %v1187 = vpop.f32.mrf.mxu0
  %v1188 = vpop.f32.mrf.mxu0
  %v1189 = vadd.f32 %v1135, %v1188
  %v1190 = vpop.f32.mrf.mxu0
  %1191 = vdwg.mxu0
  %v1192 = vadd.f32 %v186, %v1186
  %v1193 = vadd.f32 %v189, %v1189
  %v1194 = vsel %vm224, %v1192, 0.0
  %1195 = vadd.xlane.f32.xlu0 %v1194
  %v1196 = vpop.xlane.xlu0 %1195
  %v1197 = vsel %vm224, %v1193, 0.0
  %1198 = vadd.xlane.f32.xlu0 %v1197
  %v1199 = vpop.xlane.xlu0 %1198
  %v1200 = vmul.f32 %v1196, %v231
  %v1201 = vmul.f32 %v1199, %v231
  %v1202 = vsub.f32 %v1192, %v1200
  %v1203 = vsub.f32 %v1193, %v1201
  %v1204 = vmul.f32 %v1202, %v1202
  %v1205 = vmul.f32 %v1203, %v1203
  %v1206 = vsel %vm224, %v1204, 0.0
  %1207 = vadd.xlane.f32.xlu0 %v1206
  %v1208 = vpop.xlane.xlu0 %1207
  %v1209 = vsel %vm224, %v1205, 0.0
  %1210 = vadd.xlane.f32.xlu0 %v1209
  %v1211 = vpop.xlane.xlu0 %1210
  %v1212 = vmul.f32 %v1208, %v231
  %v1213 = vmul.f32 %v1211, %v231
  %v1214 = vadd.f32 %v1212, 1e-05
  %v1215 = vadd.f32 %v1213, 1e-05
  %v1216 = vrsqrt.pop %v1214
  %v1217 = vrsqrt.pop %v1215
  %v1218 = vmul.f32 %v1202, %v1216
  %v1219 = vmul.f32 %v1203, %v1217
  %v1220 = vlaneseq
  %v1221 = vshrl.u32 %v1220, 7
  %v1222 = vsub.s32 0, %v1221
  %v1223 = vrot.slane %v220, %v1222
  %v1224 = vmul.f32 %v1218, %v1223
  %v1225 = vmul.f32 %v1219, %v1223
  %v1226 = vlaneseq
  %v1227 = vshrl.u32 %v1226, 7
  %v1228 = vsub.s32 0, %v1227
  %v1229 = vrot.slane %v221, %v1228
  %v1230 = vadd.f32 %v1224, %v1229
  %v1231 = vadd.f32 %v1225, %v1229
  %v1232 = vpack.c.bf16 %v1231, %v1230
  %v1233 = vld [vmem:[%s1 + $0xa0] sm:$0xf]
  %v1234 = vld [vmem:[%s1 + $0xa4] sm:$0xf]
  %v1235 = vld [vmem:[%s1 + $0xa8] sm:$0xf]
  %v1236 = vld [vmem:[%s1 + $0xac] sm:$0xf]
  %v1237 = vlaneseq
  %v1238 = vshrl.u32 %v1237, 7
  %v1239 = vsub.s32 0, %v1238
  %v1240 = vrot.slane %v222, %v1239
  %v1245 = vunpack.c.l.b16 %v1233
  %v1246 = vunpack.c.l.b16 %v1234
  %v1247 = vunpack.c.l.b16 %v1235
  %v1248 = vunpack.c.l.b16 %v1236
  %v1249 = vpack.c.b16 %v1246, %v1245
  %v1250 = vpack.c.b16 %v1248, %v1247
  %v1254 = vsel %vm224, %v1232, 0
  %1256 = vmatprep.subr.bf16.mxu0 0
  %1257 = vmatpush1.bf16.msra.mxu0 0
  %1258 = vmatprep.subr.bf16.mxu0 0
  %1259 = vmatpush1.bf16.msra.mxu0 0
  %1260 = vmatprep.subr.bf16.mxu0 0
  %1261 = vmatpush1.bf16.msra.mxu0 0
  %1262 = vmatprep.subr.bf16.mxu0 0
  %1263 = vmatpush1.bf16.msra.mxu0 0
  %1264 = vmatprep.subr.bf16.mxu0 0
  %1265 = vmatpush1.bf16.msra.mxu0 0
  %1266 = vmatprep.subr.bf16.mxu0 0
  %1267 = vmatpush1.bf16.msra.mxu0 0
  %1268 = vmatprep.subr.bf16.mxu0 0
  %1269 = vmatpush1.bf16.msra.mxu0 %v1250
  %1270 = vmatprep.subr.bf16.mxu0 0
  %1271 = vmatpush1.bf16.msra.mxu0 %v1249
  %1272 = vmatprep.subr.bf16.mxu0 0
  %1273 = vmatpush2.bf16.msra.mxu0 0
  %1274 = vmatprep.subr.bf16.mxu0 0
  %1275 = vmatpush2.bf16.msra.mxu0 0
  %1276 = vmatprep.subr.bf16.mxu0 0
  %1277 = vmatpush2.bf16.msra.mxu0 0
  %1278 = vmatprep.subr.bf16.mxu0 0
  %1279 = vmatpush2.bf16.msra.mxu0 0
  %1280 = vmatprep.subr.bf16.mxu0 0
  %1281 = vmatpush2.bf16.msra.mxu0 0
  %1282 = vmatprep.subr.bf16.mxu0 0
  %1283 = vmatpush2.bf16.msra.mxu0 0
  %1284 = vmatprep.subr.bf16.mxu0 0
  %1285 = vmatpush2.bf16.msra.mxu0 0
  %1286 = vmatprep.subr.bf16.mxu0 0
  %1287 = vmatpush2.bf16.msra.mxu0 0
  %1288 = vmatprep.mubr.bf16.mxu0 0
  %1289 = vmatmul.mubr.bf16.gmra.mxu0 %v1254
  %v1290 = vpop.f32.mrf.mxu0
  %v1291 = vadd.f32 %v1240, %v1290
  %v1292 = vpop.f32.mrf.mxu0
  %v1293 = vpop.f32.mrf.mxu0
  %v1294 = vadd.f32 %v1240, %v1293
  %v1295 = vpop.f32.mrf.mxu0
  %1296 = vdwg.mxu0
  %v1297 = vmul.f32 %v1291, 0.5
  %v1298 = vmul.f32 %v1294, 0.5
  %v1299 = vmul.f32 %v1291, 0.70710677
  %v1300 = vmul.f32 %v1294, 0.70710677
  %v1301 = verf.f32.pop %v1299
  %v1302 = verf.f32.pop %v1300
  %v1303 = vadd.f32 %v1301, 1.0
  %v1304 = vadd.f32 %v1302, 1.0
  %v1305 = vmul.f32 %v1297, %v1303
  %v1306 = vmul.f32 %v1298, %v1304
  %v1307 = vpack.c.bf16 %v1306, %v1305
  %v1308 = vld [vmem:[%s1 + $0xb0] sm:$0xf]
  %v1309 = vld [vmem:[%s1 + $0xb4] sm:$0xf]
  %v1310 = vld [vmem:[%s1 + $0xb8] sm:$0xf]
  %v1311 = vld [vmem:[%s1 + $0xbc] sm:$0xf]
  %v1312 = vld [vmem:[%s1 + $0xc0] sm:$0xf]
  %v1313 = vld [vmem:[%s1 + $0xc4] sm:$0xf]
  %v1314 = vld [vmem:[%s1 + $0xc8] sm:$0xf]
  %v1315 = vld [vmem:[%s1 + $0xcc] sm:$0xf]
  %v1316 = vlaneseq
  %v1317 = vshrl.u32 %v1316, 7
  %v1318 = vsub.s32 0, %v1317
  %v1319 = vrot.slane %v223, %v1318
  %v1328 = vunpack.c.l.b16 %v1308
  %v1329 = vunpack.c.l.b16 %v1309
  %v1330 = vunpack.c.l.b16 %v1310
  %v1331 = vunpack.c.l.b16 %v1311
  %v1332 = vunpack.c.l.b16 %v1312
  %v1333 = vunpack.c.l.b16 %v1313
  %v1334 = vunpack.c.l.b16 %v1314
  %v1335 = vunpack.c.l.b16 %v1315
  %v1336 = vpack.c.b16 %v1329, %v1328
  %v1337 = vpack.c.b16 %v1331, %v1330
  %v1338 = vpack.c.b16 %v1333, %v1332
  %v1339 = vpack.c.b16 %v1335, %v1334
  %vm1344 = vcmask 523264
  %v1346 = vsel %vm1344, %v1307, 0
  %1348 = vmatprep.subr.bf16.mxu0 0
  %1349 = vmatpush1.bf16.msra.mxu0 0
  %1350 = vmatprep.subr.bf16.mxu0 0
  %1351 = vmatpush1.bf16.msra.mxu0 0
  %1352 = vmatprep.subr.bf16.mxu0 0
  %1353 = vmatpush1.bf16.msra.mxu0 0
  %1354 = vmatprep.subr.bf16.mxu0 0
  %1355 = vmatpush1.bf16.msra.mxu0 0
  %1356 = vmatprep.subr.bf16.mxu0 0
  %1357 = vmatpush1.bf16.msra.mxu0 %v1339
  %1358 = vmatprep.subr.bf16.mxu0 0
  %1359 = vmatpush1.bf16.msra.mxu0 %v1338
  %1360 = vmatprep.subr.bf16.mxu0 0
  %1361 = vmatpush1.bf16.msra.mxu0 %v1337
  %1362 = vmatprep.subr.bf16.mxu0 0
  %1363 = vmatpush1.bf16.msra.mxu0 %v1336
  %1364 = vmatprep.subr.bf16.mxu0 0
  %1365 = vmatpush2.bf16.msra.mxu0 0
  %1366 = vmatprep.subr.bf16.mxu0 0
  %1367 = vmatpush2.bf16.msra.mxu0 0
  %1368 = vmatprep.subr.bf16.mxu0 0
  %1369 = vmatpush2.bf16.msra.mxu0 0
  %1370 = vmatprep.subr.bf16.mxu0 0
  %1371 = vmatpush2.bf16.msra.mxu0 0
  %1372 = vmatprep.subr.bf16.mxu0 0
  %1373 = vmatpush2.bf16.msra.mxu0 0
  %1374 = vmatprep.subr.bf16.mxu0 0
  %1375 = vmatpush2.bf16.msra.mxu0 0
  %1376 = vmatprep.subr.bf16.mxu0 0
  %1377 = vmatpush2.bf16.msra.mxu0 0
  %1378 = vmatprep.subr.bf16.mxu0 0
  %1379 = vmatpush2.bf16.msra.mxu0 0
  %1380 = vmatprep.mubr.bf16.mxu0 0
  %1381 = vmatmul.mubr.bf16.gmra.mxu0 %v1346
  %v1382 = vpop.f32.mrf.mxu0
  %v1383 = vadd.f32 %v1319, %v1382
  %v1384 = vpop.f32.mrf.mxu0
  %v1385 = vpop.f32.mrf.mxu0
  %v1386 = vadd.f32 %v1319, %v1385
  %v1387 = vpop.f32.mrf.mxu0
  %1388 = vdwg.mxu0
  %v1389 = vadd.f32 %v1192, %v1383
  %v1390 = vadd.f32 %v1193, %v1386
  %v1391 = vld [vmem:[%s2 + $0x28] sm:$0x1]
  %v1392 = vld [vmem:[%s2 + $0x29] sm:$0x1]
  %v1393 = vld [vmem:[%s2 + $0x2a] sm:$0x1]
  %v1394 = vld [vmem:[%s2 + $0x2b] sm:$0x1]
  %v1395 = vld [vmem:[%s2 + $0x2c] sm:$0x1]
  %v1396 = vld [vmem:[%s2 + $0x2d] sm:$0x1]
  %v1397 = vld [vmem:[%s2 + $0x2e] sm:$0x1]
  %v1398 = vld [vmem:[%s2 + $0x2f] sm:$0x1]
  %v1399 = vsel %vm224, %v1389, 0.0
  %1400 = vadd.xlane.f32.xlu0 %v1399
  %v1401 = vpop.xlane.xlu0 %1400
  %v1402 = vsel %vm224, %v1390, 0.0
  %1403 = vadd.xlane.f32.xlu0 %v1402
  %v1404 = vpop.xlane.xlu0 %1403
  %v1405 = vmul.f32 %v1401, %v231
  %v1406 = vmul.f32 %v1404, %v231
  %v1407 = vsub.f32 %v1389, %v1405
  %v1408 = vsub.f32 %v1390, %v1406
  %v1409 = vmul.f32 %v1407, %v1407
  %v1410 = vmul.f32 %v1408, %v1408
  %v1411 = vsel %vm224, %v1409, 0.0
  %1412 = vadd.xlane.f32.xlu0 %v1411
  %v1413 = vpop.xlane.xlu0 %1412
  %v1414 = vsel %vm224, %v1410, 0.0
  %1415 = vadd.xlane.f32.xlu0 %v1414
  %v1416 = vpop.xlane.xlu0 %1415
  %v1417 = vmul.f32 %v1413, %v231
  %v1418 = vmul.f32 %v1416, %v231
  %v1419 = vadd.f32 %v1417, 1e-05
  %v1420 = vadd.f32 %v1418, 1e-05
  %v1421 = vrsqrt.pop %v1419
  %v1422 = vrsqrt.pop %v1420
  %v1423 = vmul.f32 %v1407, %v1421
  %v1424 = vmul.f32 %v1408, %v1422
  %v1425 = vlaneseq
  %v1426 = vshrl.u32 %v1425, 7
  %v1427 = vsub.s32 0, %v1426
  %v1428 = vrot.slane %v1391, %v1427
  %v1429 = vmul.f32 %v1423, %v1428
  %v1430 = vmul.f32 %v1424, %v1428
  %v1431 = vlaneseq
  %v1432 = vshrl.u32 %v1431, 7
  %v1433 = vsub.s32 0, %v1432
  %v1434 = vrot.slane %v1392, %v1433
  %v1435 = vadd.f32 %v1429, %v1434
  %v1436 = vadd.f32 %v1430, %v1434
  %v1437 = vpack.c.bf16 %v1436, %v1435
  %v1438 = vld [vmem:[%s1 + $0xd0] sm:$0xf]
  %v1439 = vld [vmem:[%s1 + $0xd4] sm:$0xf]
  %v1440 = vld [vmem:[%s1 + $0xd8] sm:$0xf]
  %v1441 = vld [vmem:[%s1 + $0xdc] sm:$0xf]
  %v1442 = vlaneseq
  %v1443 = vshrl.u32 %v1442, 7
  %v1444 = vsub.s32 0, %v1443
  %v1445 = vrot.slane %v1393, %v1444
  %v1450 = vunpack.c.l.b16 %v1438
  %v1451 = vunpack.c.l.b16 %v1439
  %v1452 = vunpack.c.l.b16 %v1440
  %v1453 = vunpack.c.l.b16 %v1441
  %v1454 = vpack.c.b16 %v1451, %v1450
  %v1455 = vpack.c.b16 %v1453, %v1452
  %v1459 = vsel %vm224, %v1437, 0
  %1461 = vmatprep.subr.bf16.mxu0 0
  %1462 = vmatpush1.bf16.msra.mxu0 0
  %1463 = vmatprep.subr.bf16.mxu0 0
  %1464 = vmatpush1.bf16.msra.mxu0 0
  %1465 = vmatprep.subr.bf16.mxu0 0
  %1466 = vmatpush1.bf16.msra.mxu0 0
  %1467 = vmatprep.subr.bf16.mxu0 0
  %1468 = vmatpush1.bf16.msra.mxu0 0
  %1469 = vmatprep.subr.bf16.mxu0 0
  %1470 = vmatpush1.bf16.msra.mxu0 0
  %1471 = vmatprep.subr.bf16.mxu0 0
  %1472 = vmatpush1.bf16.msra.mxu0 0
  %1473 = vmatprep.subr.bf16.mxu0 0
  %1474 = vmatpush1.bf16.msra.mxu0 %v1455
  %1475 = vmatprep.subr.bf16.mxu0 0
  %1476 = vmatpush1.bf16.msra.mxu0 %v1454
  %1477 = vmatprep.subr.bf16.mxu0 0
  %1478 = vmatpush2.bf16.msra.mxu0 0
  %1479 = vmatprep.subr.bf16.mxu0 0
  %1480 = vmatpush2.bf16.msra.mxu0 0
  %1481 = vmatprep.subr.bf16.mxu0 0
  %1482 = vmatpush2.bf16.msra.mxu0 0
  %1483 = vmatprep.subr.bf16.mxu0 0
  %1484 = vmatpush2.bf16.msra.mxu0 0
  %1485 = vmatprep.subr.bf16.mxu0 0
  %1486 = vmatpush2.bf16.msra.mxu0 0
  %1487 = vmatprep.subr.bf16.mxu0 0
  %1488 = vmatpush2.bf16.msra.mxu0 0
  %1489 = vmatprep.subr.bf16.mxu0 0
  %1490 = vmatpush2.bf16.msra.mxu0 0
  %1491 = vmatprep.subr.bf16.mxu0 0
  %1492 = vmatpush2.bf16.msra.mxu0 0
  %1493 = vmatprep.mubr.bf16.mxu0 0
  %1494 = vmatmul.mubr.bf16.gmra.mxu0 %v1459
  %v1495 = vpop.f32.mrf.mxu0
  %v1496 = vadd.f32 %v1445, %v1495
  %v1497 = vpop.f32.mrf.mxu0
  %v1498 = vpop.f32.mrf.mxu0
  %v1499 = vadd.f32 %v1445, %v1498
  %v1500 = vpop.f32.mrf.mxu0
  %1501 = vdwg.mxu0
  %1504 = vrot.lane.b32.xlu0 %v1496, 96
  %v1505 = vpop.permute.xlu0 %1504
  %1506 = vrot.lane.b32.xlu0 %v1499, 96
  %v1507 = vpop.permute.xlu0 %1506
  %v1508 = vsel %vm335, %v1496, 0
  %v1510 = vsel %vm335, %v1499, 0
  %v1512 = vsel %vm335, %v1505, 0
  %v1514 = vsel %vm335, %v1507, 0
  %1516 = vmatprep.subr.mxu0 0.0
  %1517 = vmatpush1.xpose.msra.mxu0 0.0
  %1518 = vmatprep.subr.mxu0 0.0
  %1519 = vmatpush1.xpose.msra.mxu0 0.0
  %1520 = vmatprep.subr.mxu0 0.0
  %1521 = vmatpush1.xpose.msra.mxu0 0.0
  %1522 = vmatprep.subr.mxu0 0.0
  %1523 = vmatpush1.xpose.msra.mxu0 0.0
  %1524 = vmatprep.subr.mxu0 0.0
  %1525 = vmatpush1.xpose.msra.mxu0 0.0
  %1526 = vmatprep.subr.mxu0 0.0
  %1527 = vmatpush1.xpose.msra.mxu0 0.0
  %1528 = vmatprep.subr.mxu0 0.0
  %1529 = vmatpush1.xpose.msra.mxu0 0.0
  %1530 = vmatprep.subr.mxu0 0.0
  %1531 = vmatpush1.xpose.msra.mxu0 0.0
  %1532 = vmatprep.subr.mxu0 0.0
  %1533 = vmatpush1.xpose.msra.mxu0 0.0
  %1534 = vmatprep.subr.mxu0 0.0
  %1535 = vmatpush1.xpose.msra.mxu0 0.0
  %1536 = vmatprep.subr.mxu0 0.0
  %1537 = vmatpush1.xpose.msra.mxu0 0.0
  %1538 = vmatprep.subr.mxu0 0.0
  %1539 = vmatpush1.xpose.msra.mxu0 0.0
  %1540 = vmatprep.subr.mxu0 0.0
  %1541 = vmatpush1.xpose.msra.mxu0 0.0
  %1542 = vmatprep.subr.mxu0 0.0
  %1543 = vmatpush1.xpose.msra.mxu0 0.0
  %1544 = vmatprep.subr.mxu0 0.0
  %1545 = vmatpush1.xpose.msra.mxu0 %v1514
  %1546 = vmatprep.subr.mxu0 0.0
  %1547 = vmatpush1.xpose.msra.mxu0 %v1512
  %1548 = vmatprep.subr.mxu0 0.0
  %1549 = vmatpush2.xpose.msra.mxu0 0.0
  %1550 = vmatprep.subr.mxu0 0.0
  %1551 = vmatpush2.xpose.msra.mxu0 0.0
  %1552 = vmatprep.subr.mxu0 0.0
  %1553 = vmatpush2.xpose.msra.mxu0 0.0
  %1554 = vmatprep.subr.mxu0 0.0
  %1555 = vmatpush2.xpose.msra.mxu0 0.0
  %1556 = vmatprep.subr.mxu0 0.0
  %1557 = vmatpush2.xpose.msra.mxu0 0.0
  %1558 = vmatprep.subr.mxu0 0.0
  %1559 = vmatpush2.xpose.msra.mxu0 0.0
  %1560 = vmatprep.subr.mxu0 0.0
  %1561 = vmatpush2.xpose.msra.mxu0 0.0
  %1562 = vmatprep.subr.mxu0 0.0
  %1563 = vmatpush2.xpose.msra.mxu0 0.0
  %1564 = vmatprep.subr.mxu0 0.0
  %1565 = vmatpush2.xpose.msra.mxu0 0.0
  %1566 = vmatprep.subr.mxu0 0.0
  %1567 = vmatpush2.xpose.msra.mxu0 0.0
  %1568 = vmatprep.subr.mxu0 0.0
  %1569 = vmatpush2.xpose.msra.mxu0 0.0
  %1570 = vmatprep.subr.mxu0 0.0
  %1571 = vmatpush2.xpose.msra.mxu0 0.0
  %1572 = vmatprep.subr.mxu0 0.0
  %1573 = vmatpush2.xpose.msra.mxu0 0.0
  %1574 = vmatprep.subr.mxu0 0.0
  %1575 = vmatpush2.xpose.msra.mxu0 0.0
  %1576 = vmatprep.subr.mxu0 0.0
  %1577 = vmatpush2.xpose.msra.mxu0 0.0
  %1578 = vmatprep.subr.mxu0 0.0
  %1579 = vmatpush2.xpose.msra.mxu0 0.0
  %1580 = vmatprep.mubr.f32.mxu0 0.0
  %1581 = vmatmul.mubr.f32.gmra.mxu0 %v1508
  %v1582 = vpop.f32.mrf.mxu0
  %v1583 = vadd.f32 %v192, %v1582
  %v1584 = vpop.f32.mrf.mxu0
  %1585 = vmatprep.mubr.f32.mxu0 0.0
  %1586 = vmatmul.mubr.f32.gmra.mxu0 %v1510
  %v1587 = vpop.f32.mrf.mxu0
  %v1588 = vadd.f32 %v193, %v1587
  %v1589 = vpop.f32.mrf.mxu0
  %1590 = vdwg.mxu0
  %v1591 = vsel %vm419, %v1583, -inf
  %1592 = vmax.xlane.f32.xlu0 %v1591
  %v1593 = vpop.xlane.xlu0 %1592
  %v1594 = vsel %vm419, %v1588, -inf
  %1595 = vmax.xlane.f32.xlu0 %v1594
  %v1596 = vpop.xlane.xlu0 %1595
  %v1597 = vsub.f32 %v1583, %v1593
  %v1598 = vsub.f32 %v1588, %v1596
  %v1599 = vmul.f32 %v1597, 1.442695
  %v1600 = vpow.pop %v1599
  %v1601 = vmul.f32 %v1598, 1.442695
  %v1602 = vpow.pop %v1601
  %v1603 = vsel %vm419, %v1600, 0.0
  %1604 = vadd.xlane.f32.xlu0 %v1603
  %v1605 = vpop.xlane.xlu0 %1604
  %v1606 = vsel %vm419, %v1602, 0.0
  %1607 = vadd.xlane.f32.xlu0 %v1606
  %v1608 = vpop.xlane.xlu0 %1607
  %v1609 = vrcp.pop %v1605
  %v1610 = vrcp.pop %v1608
  %v1611 = vmul.f32 %v1600, %v1609
  %v1612 = vmul.f32 %v1602, %v1610
  %1613 = vrot.lane.b32.xlu0 %v1496, 64
  %v1614 = vpop.permute.xlu0 %1613
  %1615 = vrot.lane.b32.xlu0 %v1499, 64
  %v1616 = vpop.permute.xlu0 %1615
  %v1620 = vsel %vm419, %v1611, 0
  %v1623 = vsel %vm419, %v1612, 0
  %1625 = vmatprep.subr.mxu0 0.0
  %1626 = vmatpush1.msra.mxu0 0.0
  %1627 = vmatprep.subr.mxu0 0.0
  %1628 = vmatpush1.msra.mxu0 0.0
  %1629 = vmatprep.subr.mxu0 0.0
  %1630 = vmatpush1.msra.mxu0 0.0
  %1631 = vmatprep.subr.mxu0 0.0
  %1632 = vmatpush1.msra.mxu0 0.0
  %1633 = vmatprep.subr.mxu0 0.0
  %1634 = vmatpush1.msra.mxu0 0.0
  %1635 = vmatprep.subr.mxu0 0.0
  %1636 = vmatpush1.msra.mxu0 0.0
  %1637 = vmatprep.subr.mxu0 0.0
  %1638 = vmatpush1.msra.mxu0 0.0
  %1639 = vmatprep.subr.mxu0 0.0
  %1640 = vmatpush1.msra.mxu0 0.0
  %1641 = vmatprep.subr.mxu0 0.0
  %1642 = vmatpush1.msra.mxu0 0.0
  %1643 = vmatprep.subr.mxu0 0.0
  %1644 = vmatpush1.msra.mxu0 0.0
  %1645 = vmatprep.subr.mxu0 0.0
  %1646 = vmatpush1.msra.mxu0 0.0
  %1647 = vmatprep.subr.mxu0 0.0
  %1648 = vmatpush1.msra.mxu0 0.0
  %1649 = vmatprep.subr.mxu0 0.0
  %1650 = vmatpush1.msra.mxu0 0.0
  %1651 = vmatprep.subr.mxu0 0.0
  %1652 = vmatpush1.msra.mxu0 0.0
  %1653 = vmatprep.subr.mxu0 0.0
  %1654 = vmatpush1.msra.mxu0 %v1616
  %1655 = vmatprep.subr.mxu0 0.0
  %1656 = vmatpush1.msra.mxu0 %v1614
  %1657 = vmatprep.subr.mxu0 0.0
  %1658 = vmatpush2.msra.mxu0 0.0
  %1659 = vmatprep.subr.mxu0 0.0
  %1660 = vmatpush2.msra.mxu0 0.0
  %1661 = vmatprep.subr.mxu0 0.0
  %1662 = vmatpush2.msra.mxu0 0.0
  %1663 = vmatprep.subr.mxu0 0.0
  %1664 = vmatpush2.msra.mxu0 0.0
  %1665 = vmatprep.subr.mxu0 0.0
  %1666 = vmatpush2.msra.mxu0 0.0
  %1667 = vmatprep.subr.mxu0 0.0
  %1668 = vmatpush2.msra.mxu0 0.0
  %1669 = vmatprep.subr.mxu0 0.0
  %1670 = vmatpush2.msra.mxu0 0.0
  %1671 = vmatprep.subr.mxu0 0.0
  %1672 = vmatpush2.msra.mxu0 0.0
  %1673 = vmatprep.subr.mxu0 0.0
  %1674 = vmatpush2.msra.mxu0 0.0
  %1675 = vmatprep.subr.mxu0 0.0
  %1676 = vmatpush2.msra.mxu0 0.0
  %1677 = vmatprep.subr.mxu0 0.0
  %1678 = vmatpush2.msra.mxu0 0.0
  %1679 = vmatprep.subr.mxu0 0.0
  %1680 = vmatpush2.msra.mxu0 0.0
  %1681 = vmatprep.subr.mxu0 0.0
  %1682 = vmatpush2.msra.mxu0 0.0
  %1683 = vmatprep.subr.mxu0 0.0
  %1684 = vmatpush2.msra.mxu0 0.0
  %1685 = vmatprep.subr.mxu0 0.0
  %1686 = vmatpush2.msra.mxu0 0.0
  %1687 = vmatprep.subr.mxu0 0.0
  %1688 = vmatpush2.msra.mxu0 0.0
  %1689 = vmatprep.mubr.f32.mxu0 0.0
  %1690 = vmatmul.mubr.f32.gmra.mxu0 %v1620
  %v1691 = vpop.f32.mrf.mxu0
  %v1692 = vadd.f32 0.0, %v1691
  %v1693 = vpop.f32.mrf.mxu0
  %1694 = vmatprep.mubr.f32.mxu0 0.0
  %1695 = vmatmul.mubr.f32.gmra.mxu0 %v1623
  %v1696 = vpop.f32.mrf.mxu0
  %v1697 = vadd.f32 0.0, %v1696
  %v1698 = vpop.f32.mrf.mxu0
  %1699 = vdwg.mxu0
  %v1700 = vmul.f32 %v1692, %v200
  %v1701 = vmul.f32 %v1697, %v200
  %v1702 = vadd.f32 %v1700, 0.0
  %v1703 = vadd.f32 %v1701, 0.0
  %1704 = vrot.lane.b32.xlu0 %v1496, 120
  %v1705 = vpop.permute.xlu0 %1704
  %1706 = vrot.lane.b32.xlu0 %v1499, 120
  %v1707 = vpop.permute.xlu0 %1706
  %1708 = vrot.lane.b32.xlu0 %v1496, 88
  %v1709 = vpop.permute.xlu0 %1708
  %1710 = vrot.lane.b32.xlu0 %v1499, 88
  %v1711 = vpop.permute.xlu0 %1710
  %v1712 = vsel %vm335, %v1705, 0
  %v1714 = vsel %vm335, %v1707, 0
  %v1716 = vsel %vm335, %v1709, 0
  %v1718 = vsel %vm335, %v1711, 0
  %1720 = vmatprep.subr.mxu0 0.0
  %1721 = vmatpush1.xpose.msra.mxu0 0.0
  %1722 = vmatprep.subr.mxu0 0.0
  %1723 = vmatpush1.xpose.msra.mxu0 0.0
  %1724 = vmatprep.subr.mxu0 0.0
  %1725 = vmatpush1.xpose.msra.mxu0 0.0
  %1726 = vmatprep.subr.mxu0 0.0
  %1727 = vmatpush1.xpose.msra.mxu0 0.0
  %1728 = vmatprep.subr.mxu0 0.0
  %1729 = vmatpush1.xpose.msra.mxu0 0.0
  %1730 = vmatprep.subr.mxu0 0.0
  %1731 = vmatpush1.xpose.msra.mxu0 0.0
  %1732 = vmatprep.subr.mxu0 0.0
  %1733 = vmatpush1.xpose.msra.mxu0 0.0
  %1734 = vmatprep.subr.mxu0 0.0
  %1735 = vmatpush1.xpose.msra.mxu0 0.0
  %1736 = vmatprep.subr.mxu0 0.0
  %1737 = vmatpush1.xpose.msra.mxu0 0.0
  %1738 = vmatprep.subr.mxu0 0.0
  %1739 = vmatpush1.xpose.msra.mxu0 0.0
  %1740 = vmatprep.subr.mxu0 0.0
  %1741 = vmatpush1.xpose.msra.mxu0 0.0
  %1742 = vmatprep.subr.mxu0 0.0
  %1743 = vmatpush1.xpose.msra.mxu0 0.0
  %1744 = vmatprep.subr.mxu0 0.0
  %1745 = vmatpush1.xpose.msra.mxu0 0.0
  %1746 = vmatprep.subr.mxu0 0.0
  %1747 = vmatpush1.xpose.msra.mxu0 0.0
  %1748 = vmatprep.subr.mxu0 0.0
  %1749 = vmatpush1.xpose.msra.mxu0 %v1718
  %1750 = vmatprep.subr.mxu0 0.0
  %1751 = vmatpush1.xpose.msra.mxu0 %v1716
  %1752 = vmatprep.subr.mxu0 0.0
  %1753 = vmatpush2.xpose.msra.mxu0 0.0
  %1754 = vmatprep.subr.mxu0 0.0
  %1755 = vmatpush2.xpose.msra.mxu0 0.0
  %1756 = vmatprep.subr.mxu0 0.0
  %1757 = vmatpush2.xpose.msra.mxu0 0.0
  %1758 = vmatprep.subr.mxu0 0.0
  %1759 = vmatpush2.xpose.msra.mxu0 0.0
  %1760 = vmatprep.subr.mxu0 0.0
  %1761 = vmatpush2.xpose.msra.mxu0 0.0
  %1762 = vmatprep.subr.mxu0 0.0
  %1763 = vmatpush2.xpose.msra.mxu0 0.0
  %1764 = vmatprep.subr.mxu0 0.0
  %1765 = vmatpush2.xpose.msra.mxu0 0.0
  %1766 = vmatprep.subr.mxu0 0.0
  %1767 = vmatpush2.xpose.msra.mxu0 0.0
  %1768 = vmatprep.subr.mxu0 0.0
  %1769 = vmatpush2.xpose.msra.mxu0 0.0
  %1770 = vmatprep.subr.mxu0 0.0
  %1771 = vmatpush2.xpose.msra.mxu0 0.0
  %1772 = vmatprep.subr.mxu0 0.0
  %1773 = vmatpush2.xpose.msra.mxu0 0.0
  %1774 = vmatprep.subr.mxu0 0.0
  %1775 = vmatpush2.xpose.msra.mxu0 0.0
  %1776 = vmatprep.subr.mxu0 0.0
  %1777 = vmatpush2.xpose.msra.mxu0 0.0
  %1778 = vmatprep.subr.mxu0 0.0
  %1779 = vmatpush2.xpose.msra.mxu0 0.0
  %1780 = vmatprep.subr.mxu0 0.0
  %1781 = vmatpush2.xpose.msra.mxu0 0.0
  %1782 = vmatprep.subr.mxu0 0.0
  %1783 = vmatpush2.xpose.msra.mxu0 0.0
  %1784 = vmatprep.mubr.f32.mxu0 0.0
  %1785 = vmatmul.mubr.f32.gmra.mxu0 %v1712
  %v1786 = vpop.f32.mrf.mxu0
  %v1787 = vadd.f32 %v192, %v1786
  %v1788 = vpop.f32.mrf.mxu0
  %1789 = vmatprep.mubr.f32.mxu0 0.0
  %1790 = vmatmul.mubr.f32.gmra.mxu0 %v1714
  %v1791 = vpop.f32.mrf.mxu0
  %v1792 = vadd.f32 %v193, %v1791
  %v1793 = vpop.f32.mrf.mxu0
  %1794 = vdwg.mxu0
  %v1795 = vsel %vm419, %v1787, -inf
  %1796 = vmax.xlane.f32.xlu0 %v1795
  %v1797 = vpop.xlane.xlu0 %1796
  %v1798 = vsel %vm419, %v1792, -inf
  %1799 = vmax.xlane.f32.xlu0 %v1798
  %v1800 = vpop.xlane.xlu0 %1799
  %v1801 = vsub.f32 %v1787, %v1797
  %v1802 = vsub.f32 %v1792, %v1800
  %v1803 = vmul.f32 %v1801, 1.442695
  %v1804 = vpow.pop %v1803
  %v1805 = vmul.f32 %v1802, 1.442695
  %v1806 = vpow.pop %v1805
  %v1807 = vsel %vm419, %v1804, 0.0
  %1808 = vadd.xlane.f32.xlu0 %v1807
  %v1809 = vpop.xlane.xlu0 %1808
  %v1810 = vsel %vm419, %v1806, 0.0
  %1811 = vadd.xlane.f32.xlu0 %v1810
  %v1812 = vpop.xlane.xlu0 %1811
  %v1813 = vrcp.pop %v1809
  %v1814 = vrcp.pop %v1812
  %v1815 = vmul.f32 %v1804, %v1813
  %v1816 = vmul.f32 %v1806, %v1814
  %v1818 = vsel %vm419, %v1815, 0
  %v1821 = vsel %vm419, %v1816, 0
  %1823 = vmatprep.subr.mxu0 0.0
  %1824 = vmatpush1.msra.mxu0 0.0
  %1825 = vmatprep.subr.mxu0 0.0
  %1826 = vmatpush1.msra.mxu0 0.0
  %1827 = vmatprep.subr.mxu0 0.0
  %1828 = vmatpush1.msra.mxu0 0.0
  %1829 = vmatprep.subr.mxu0 0.0
  %1830 = vmatpush1.msra.mxu0 0.0
  %1831 = vmatprep.subr.mxu0 0.0
  %1832 = vmatpush1.msra.mxu0 0.0
  %1833 = vmatprep.subr.mxu0 0.0
  %1834 = vmatpush1.msra.mxu0 0.0
  %1835 = vmatprep.subr.mxu0 0.0
  %1836 = vmatpush1.msra.mxu0 0.0
  %1837 = vmatprep.subr.mxu0 0.0
  %1838 = vmatpush1.msra.mxu0 0.0
  %1839 = vmatprep.subr.mxu0 0.0
  %1840 = vmatpush1.msra.mxu0 0.0
  %1841 = vmatprep.subr.mxu0 0.0
  %1842 = vmatpush1.msra.mxu0 0.0
  %1843 = vmatprep.subr.mxu0 0.0
  %1844 = vmatpush1.msra.mxu0 0.0
  %1845 = vmatprep.subr.mxu0 0.0
  %1846 = vmatpush1.msra.mxu0 0.0
  %1847 = vmatprep.subr.mxu0 0.0
  %1848 = vmatpush1.msra.mxu0 0.0
  %1849 = vmatprep.subr.mxu0 0.0
  %1850 = vmatpush1.msra.mxu0 0.0
  %1851 = vmatprep.subr.mxu0 0.0
  %1852 = vmatpush1.msra.mxu0 %v1616
  %1853 = vmatprep.subr.mxu0 0.0
  %1854 = vmatpush1.msra.mxu0 %v1614
  %1855 = vmatprep.subr.mxu0 0.0
  %1856 = vmatpush2.msra.mxu0 0.0
  %1857 = vmatprep.subr.mxu0 0.0
  %1858 = vmatpush2.msra.mxu0 0.0
  %1859 = vmatprep.subr.mxu0 0.0
  %1860 = vmatpush2.msra.mxu0 0.0
  %1861 = vmatprep.subr.mxu0 0.0
  %1862 = vmatpush2.msra.mxu0 0.0
  %1863 = vmatprep.subr.mxu0 0.0
  %1864 = vmatpush2.msra.mxu0 0.0
  %1865 = vmatprep.subr.mxu0 0.0
  %1866 = vmatpush2.msra.mxu0 0.0
  %1867 = vmatprep.subr.mxu0 0.0
  %1868 = vmatpush2.msra.mxu0 0.0
  %1869 = vmatprep.subr.mxu0 0.0
  %1870 = vmatpush2.msra.mxu0 0.0
  %1871 = vmatprep.subr.mxu0 0.0
  %1872 = vmatpush2.msra.mxu0 0.0
  %1873 = vmatprep.subr.mxu0 0.0
  %1874 = vmatpush2.msra.mxu0 0.0
  %1875 = vmatprep.subr.mxu0 0.0
  %1876 = vmatpush2.msra.mxu0 0.0
  %1877 = vmatprep.subr.mxu0 0.0
  %1878 = vmatpush2.msra.mxu0 0.0
  %1879 = vmatprep.subr.mxu0 0.0
  %1880 = vmatpush2.msra.mxu0 0.0
  %1881 = vmatprep.subr.mxu0 0.0
  %1882 = vmatpush2.msra.mxu0 0.0
  %1883 = vmatprep.subr.mxu0 0.0
  %1884 = vmatpush2.msra.mxu0 0.0
  %1885 = vmatprep.subr.mxu0 0.0
  %1886 = vmatpush2.msra.mxu0 0.0
  %1887 = vmatprep.mubr.f32.mxu0 0.0
  %1888 = vmatmul.mubr.f32.gmra.mxu0 %v1818
  %v1889 = vpop.f32.mrf.mxu0
  %v1890 = vadd.f32 0.0, %v1889
  %v1891 = vpop.f32.mrf.mxu0
  %1892 = vmatprep.mubr.f32.mxu0 0.0
  %1893 = vmatmul.mubr.f32.gmra.mxu0 %v1821
  %v1894 = vpop.f32.mrf.mxu0
  %v1895 = vadd.f32 0.0, %v1894
  %v1896 = vpop.f32.mrf.mxu0
  %1897 = vdwg.mxu0
  %v1898 = vmul.f32 %v1890, %v205
  %v1899 = vmul.f32 %v1895, %v205
  %v1900 = vadd.f32 %v1702, %v1898
  %v1901 = vadd.f32 %v1703, %v1899
  %1902 = vrot.lane.b32.xlu0 %v1496, 112
  %v1903 = vpop.permute.xlu0 %1902
  %1904 = vrot.lane.b32.xlu0 %v1499, 112
  %v1905 = vpop.permute.xlu0 %1904
  %1906 = vrot.lane.b32.xlu0 %v1496, 80
  %v1907 = vpop.permute.xlu0 %1906
  %1908 = vrot.lane.b32.xlu0 %v1499, 80
  %v1909 = vpop.permute.xlu0 %1908
  %v1910 = vsel %vm335, %v1903, 0
  %v1912 = vsel %vm335, %v1905, 0
  %v1914 = vsel %vm335, %v1907, 0
  %v1916 = vsel %vm335, %v1909, 0
  %1918 = vmatprep.subr.mxu0 0.0
  %1919 = vmatpush1.xpose.msra.mxu0 0.0
  %1920 = vmatprep.subr.mxu0 0.0
  %1921 = vmatpush1.xpose.msra.mxu0 0.0
  %1922 = vmatprep.subr.mxu0 0.0
  %1923 = vmatpush1.xpose.msra.mxu0 0.0
  %1924 = vmatprep.subr.mxu0 0.0
  %1925 = vmatpush1.xpose.msra.mxu0 0.0
  %1926 = vmatprep.subr.mxu0 0.0
  %1927 = vmatpush1.xpose.msra.mxu0 0.0
  %1928 = vmatprep.subr.mxu0 0.0
  %1929 = vmatpush1.xpose.msra.mxu0 0.0
  %1930 = vmatprep.subr.mxu0 0.0
  %1931 = vmatpush1.xpose.msra.mxu0 0.0
  %1932 = vmatprep.subr.mxu0 0.0
  %1933 = vmatpush1.xpose.msra.mxu0 0.0
  %1934 = vmatprep.subr.mxu0 0.0
  %1935 = vmatpush1.xpose.msra.mxu0 0.0
  %1936 = vmatprep.subr.mxu0 0.0
  %1937 = vmatpush1.xpose.msra.mxu0 0.0
  %1938 = vmatprep.subr.mxu0 0.0
  %1939 = vmatpush1.xpose.msra.mxu0 0.0
  %1940 = vmatprep.subr.mxu0 0.0
  %1941 = vmatpush1.xpose.msra.mxu0 0.0
  %1942 = vmatprep.subr.mxu0 0.0
  %1943 = vmatpush1.xpose.msra.mxu0 0.0
  %1944 = vmatprep.subr.mxu0 0.0
  %1945 = vmatpush1.xpose.msra.mxu0 0.0
  %1946 = vmatprep.subr.mxu0 0.0
  %1947 = vmatpush1.xpose.msra.mxu0 %v1916
  %1948 = vmatprep.subr.mxu0 0.0
  %1949 = vmatpush1.xpose.msra.mxu0 %v1914
  %1950 = vmatprep.subr.mxu0 0.0
  %1951 = vmatpush2.xpose.msra.mxu0 0.0
  %1952 = vmatprep.subr.mxu0 0.0
  %1953 = vmatpush2.xpose.msra.mxu0 0.0
  %1954 = vmatprep.subr.mxu0 0.0
  %1955 = vmatpush2.xpose.msra.mxu0 0.0
  %1956 = vmatprep.subr.mxu0 0.0
  %1957 = vmatpush2.xpose.msra.mxu0 0.0
  %1958 = vmatprep.subr.mxu0 0.0
  %1959 = vmatpush2.xpose.msra.mxu0 0.0
  %1960 = vmatprep.subr.mxu0 0.0
  %1961 = vmatpush2.xpose.msra.mxu0 0.0
  %1962 = vmatprep.subr.mxu0 0.0
  %1963 = vmatpush2.xpose.msra.mxu0 0.0
  %1964 = vmatprep.subr.mxu0 0.0
  %1965 = vmatpush2.xpose.msra.mxu0 0.0
  %1966 = vmatprep.subr.mxu0 0.0
  %1967 = vmatpush2.xpose.msra.mxu0 0.0
  %1968 = vmatprep.subr.mxu0 0.0
  %1969 = vmatpush2.xpose.msra.mxu0 0.0
  %1970 = vmatprep.subr.mxu0 0.0
  %1971 = vmatpush2.xpose.msra.mxu0 0.0
  %1972 = vmatprep.subr.mxu0 0.0
  %1973 = vmatpush2.xpose.msra.mxu0 0.0
  %1974 = vmatprep.subr.mxu0 0.0
  %1975 = vmatpush2.xpose.msra.mxu0 0.0
  %1976 = vmatprep.subr.mxu0 0.0
  %1977 = vmatpush2.xpose.msra.mxu0 0.0
  %1978 = vmatprep.subr.mxu0 0.0
  %1979 = vmatpush2.xpose.msra.mxu0 0.0
  %1980 = vmatprep.subr.mxu0 0.0
  %1981 = vmatpush2.xpose.msra.mxu0 0.0
  %1982 = vmatprep.mubr.f32.mxu0 0.0
  %1983 = vmatmul.mubr.f32.gmra.mxu0 %v1910
  %v1984 = vpop.f32.mrf.mxu0
  %v1985 = vadd.f32 %v192, %v1984
  %v1986 = vpop.f32.mrf.mxu0
  %1987 = vmatprep.mubr.f32.mxu0 0.0
  %1988 = vmatmul.mubr.f32.gmra.mxu0 %v1912
  %v1989 = vpop.f32.mrf.mxu0
  %v1990 = vadd.f32 %v193, %v1989
  %v1991 = vpop.f32.mrf.mxu0
  %1992 = vdwg.mxu0
  %v1993 = vsel %vm419, %v1985, -inf
  %1994 = vmax.xlane.f32.xlu0 %v1993
  %v1995 = vpop.xlane.xlu0 %1994
  %v1996 = vsel %vm419, %v1990, -inf
  %1997 = vmax.xlane.f32.xlu0 %v1996
  %v1998 = vpop.xlane.xlu0 %1997
  %v1999 = vsub.f32 %v1985, %v1995
  %v2000 = vsub.f32 %v1990, %v1998
  %v2001 = vmul.f32 %v1999, 1.442695
  %v2002 = vpow.pop %v2001
  %v2003 = vmul.f32 %v2000, 1.442695
  %v2004 = vpow.pop %v2003
  %v2005 = vsel %vm419, %v2002, 0.0
  %2006 = vadd.xlane.f32.xlu0 %v2005
  %v2007 = vpop.xlane.xlu0 %2006
  %v2008 = vsel %vm419, %v2004, 0.0
  %2009 = vadd.xlane.f32.xlu0 %v2008
  %v2010 = vpop.xlane.xlu0 %2009
  %v2011 = vrcp.pop %v2007
  %v2012 = vrcp.pop %v2010
  %v2013 = vmul.f32 %v2002, %v2011
  %v2014 = vmul.f32 %v2004, %v2012
  %v2016 = vsel %vm419, %v2013, 0
  %v2019 = vsel %vm419, %v2014, 0
  %2021 = vmatprep.subr.mxu0 0.0
  %2022 = vmatpush1.msra.mxu0 0.0
  %2023 = vmatprep.subr.mxu0 0.0
  %2024 = vmatpush1.msra.mxu0 0.0
  %2025 = vmatprep.subr.mxu0 0.0
  %2026 = vmatpush1.msra.mxu0 0.0
  %2027 = vmatprep.subr.mxu0 0.0
  %2028 = vmatpush1.msra.mxu0 0.0
  %2029 = vmatprep.subr.mxu0 0.0
  %2030 = vmatpush1.msra.mxu0 0.0
  %2031 = vmatprep.subr.mxu0 0.0
  %2032 = vmatpush1.msra.mxu0 0.0
  %2033 = vmatprep.subr.mxu0 0.0
  %2034 = vmatpush1.msra.mxu0 0.0
  %2035 = vmatprep.subr.mxu0 0.0
  %2036 = vmatpush1.msra.mxu0 0.0
  %2037 = vmatprep.subr.mxu0 0.0
  %2038 = vmatpush1.msra.mxu0 0.0
  %2039 = vmatprep.subr.mxu0 0.0
  %2040 = vmatpush1.msra.mxu0 0.0
  %2041 = vmatprep.subr.mxu0 0.0
  %2042 = vmatpush1.msra.mxu0 0.0
  %2043 = vmatprep.subr.mxu0 0.0
  %2044 = vmatpush1.msra.mxu0 0.0
  %2045 = vmatprep.subr.mxu0 0.0
  %2046 = vmatpush1.msra.mxu0 0.0
  %2047 = vmatprep.subr.mxu0 0.0
  %2048 = vmatpush1.msra.mxu0 0.0
  %2049 = vmatprep.subr.mxu0 0.0
  %2050 = vmatpush1.msra.mxu0 %v1616
  %2051 = vmatprep.subr.mxu0 0.0
  %2052 = vmatpush1.msra.mxu0 %v1614
  %2053 = vmatprep.subr.mxu0 0.0
  %2054 = vmatpush2.msra.mxu0 0.0
  %2055 = vmatprep.subr.mxu0 0.0
  %2056 = vmatpush2.msra.mxu0 0.0
  %2057 = vmatprep.subr.mxu0 0.0
  %2058 = vmatpush2.msra.mxu0 0.0
  %2059 = vmatprep.subr.mxu0 0.0
  %2060 = vmatpush2.msra.mxu0 0.0
  %2061 = vmatprep.subr.mxu0 0.0
  %2062 = vmatpush2.msra.mxu0 0.0
  %2063 = vmatprep.subr.mxu0 0.0
  %2064 = vmatpush2.msra.mxu0 0.0
  %2065 = vmatprep.subr.mxu0 0.0
  %2066 = vmatpush2.msra.mxu0 0.0
  %2067 = vmatprep.subr.mxu0 0.0
  %2068 = vmatpush2.msra.mxu0 0.0
  %2069 = vmatprep.subr.mxu0 0.0
  %2070 = vmatpush2.msra.mxu0 0.0
  %2071 = vmatprep.subr.mxu0 0.0
  %2072 = vmatpush2.msra.mxu0 0.0
  %2073 = vmatprep.subr.mxu0 0.0
  %2074 = vmatpush2.msra.mxu0 0.0
  %2075 = vmatprep.subr.mxu0 0.0
  %2076 = vmatpush2.msra.mxu0 0.0
  %2077 = vmatprep.subr.mxu0 0.0
  %2078 = vmatpush2.msra.mxu0 0.0
  %2079 = vmatprep.subr.mxu0 0.0
  %2080 = vmatpush2.msra.mxu0 0.0
  %2081 = vmatprep.subr.mxu0 0.0
  %2082 = vmatpush2.msra.mxu0 0.0
  %2083 = vmatprep.subr.mxu0 0.0
  %2084 = vmatpush2.msra.mxu0 0.0
  %2085 = vmatprep.mubr.f32.mxu0 0.0
  %2086 = vmatmul.mubr.f32.gmra.mxu0 %v2016
  %v2087 = vpop.f32.mrf.mxu0
  %v2088 = vadd.f32 0.0, %v2087
  %v2089 = vpop.f32.mrf.mxu0
  %2090 = vmatprep.mubr.f32.mxu0 0.0
  %2091 = vmatmul.mubr.f32.gmra.mxu0 %v2019
  %v2092 = vpop.f32.mrf.mxu0
  %v2093 = vadd.f32 0.0, %v2092
  %v2094 = vpop.f32.mrf.mxu0
  %2095 = vdwg.mxu0
  %v2096 = vmul.f32 %v2088, %v210
  %v2097 = vmul.f32 %v2093, %v210
  %v2098 = vadd.f32 %v1900, %v2096
  %v2099 = vadd.f32 %v1901, %v2097
  %2100 = vrot.lane.b32.xlu0 %v1496, 104
  %v2101 = vpop.permute.xlu0 %2100
  %2102 = vrot.lane.b32.xlu0 %v1499, 104
  %v2103 = vpop.permute.xlu0 %2102
  %2104 = vrot.lane.b32.xlu0 %v1496, 72
  %v2105 = vpop.permute.xlu0 %2104
  %2106 = vrot.lane.b32.xlu0 %v1499, 72
  %v2107 = vpop.permute.xlu0 %2106
  %v2108 = vsel %vm335, %v2101, 0
  %v2110 = vsel %vm335, %v2103, 0
  %v2112 = vsel %vm335, %v2105, 0
  %v2114 = vsel %vm335, %v2107, 0
  %2116 = vmatprep.subr.mxu0 0.0
  %2117 = vmatpush1.xpose.msra.mxu0 0.0
  %2118 = vmatprep.subr.mxu0 0.0
  %2119 = vmatpush1.xpose.msra.mxu0 0.0
  %2120 = vmatprep.subr.mxu0 0.0
  %2121 = vmatpush1.xpose.msra.mxu0 0.0
  %2122 = vmatprep.subr.mxu0 0.0
  %2123 = vmatpush1.xpose.msra.mxu0 0.0
  %2124 = vmatprep.subr.mxu0 0.0
  %2125 = vmatpush1.xpose.msra.mxu0 0.0
  %2126 = vmatprep.subr.mxu0 0.0
  %2127 = vmatpush1.xpose.msra.mxu0 0.0
  %2128 = vmatprep.subr.mxu0 0.0
  %2129 = vmatpush1.xpose.msra.mxu0 0.0
  %2130 = vmatprep.subr.mxu0 0.0
  %2131 = vmatpush1.xpose.msra.mxu0 0.0
  %2132 = vmatprep.subr.mxu0 0.0
  %2133 = vmatpush1.xpose.msra.mxu0 0.0
  %2134 = vmatprep.subr.mxu0 0.0
  %2135 = vmatpush1.xpose.msra.mxu0 0.0
  %2136 = vmatprep.subr.mxu0 0.0
  %2137 = vmatpush1.xpose.msra.mxu0 0.0
  %2138 = vmatprep.subr.mxu0 0.0
  %2139 = vmatpush1.xpose.msra.mxu0 0.0
  %2140 = vmatprep.subr.mxu0 0.0
  %2141 = vmatpush1.xpose.msra.mxu0 0.0
  %2142 = vmatprep.subr.mxu0 0.0
  %2143 = vmatpush1.xpose.msra.mxu0 0.0
  %2144 = vmatprep.subr.mxu0 0.0
  %2145 = vmatpush1.xpose.msra.mxu0 %v2114
  %2146 = vmatprep.subr.mxu0 0.0
  %2147 = vmatpush1.xpose.msra.mxu0 %v2112
  %2148 = vmatprep.subr.mxu0 0.0
  %2149 = vmatpush2.xpose.msra.mxu0 0.0
  %2150 = vmatprep.subr.mxu0 0.0
  %2151 = vmatpush2.xpose.msra.mxu0 0.0
  %2152 = vmatprep.subr.mxu0 0.0
  %2153 = vmatpush2.xpose.msra.mxu0 0.0
  %2154 = vmatprep.subr.mxu0 0.0
  %2155 = vmatpush2.xpose.msra.mxu0 0.0
  %2156 = vmatprep.subr.mxu0 0.0
  %2157 = vmatpush2.xpose.msra.mxu0 0.0
  %2158 = vmatprep.subr.mxu0 0.0
  %2159 = vmatpush2.xpose.msra.mxu0 0.0
  %2160 = vmatprep.subr.mxu0 0.0
  %2161 = vmatpush2.xpose.msra.mxu0 0.0
  %2162 = vmatprep.subr.mxu0 0.0
  %2163 = vmatpush2.xpose.msra.mxu0 0.0
  %2164 = vmatprep.subr.mxu0 0.0
  %2165 = vmatpush2.xpose.msra.mxu0 0.0
  %2166 = vmatprep.subr.mxu0 0.0
  %2167 = vmatpush2.xpose.msra.mxu0 0.0
  %2168 = vmatprep.subr.mxu0 0.0
  %2169 = vmatpush2.xpose.msra.mxu0 0.0
  %2170 = vmatprep.subr.mxu0 0.0
  %2171 = vmatpush2.xpose.msra.mxu0 0.0
  %2172 = vmatprep.subr.mxu0 0.0
  %2173 = vmatpush2.xpose.msra.mxu0 0.0
  %2174 = vmatprep.subr.mxu0 0.0
  %2175 = vmatpush2.xpose.msra.mxu0 0.0
  %2176 = vmatprep.subr.mxu0 0.0
  %2177 = vmatpush2.xpose.msra.mxu0 0.0
  %2178 = vmatprep.subr.mxu0 0.0
  %2179 = vmatpush2.xpose.msra.mxu0 0.0
  %2180 = vmatprep.mubr.f32.mxu0 0.0
  %2181 = vmatmul.mubr.f32.gmra.mxu0 %v2108
  %v2182 = vpop.f32.mrf.mxu0
  %v2183 = vadd.f32 %v192, %v2182
  %v2184 = vpop.f32.mrf.mxu0
  %2185 = vmatprep.mubr.f32.mxu0 0.0
  %2186 = vmatmul.mubr.f32.gmra.mxu0 %v2110
  %v2187 = vpop.f32.mrf.mxu0
  %v2188 = vadd.f32 %v193, %v2187
  %v2189 = vpop.f32.mrf.mxu0
  %2190 = vdwg.mxu0
  %v2191 = vsel %vm419, %v2183, -inf
  %2192 = vmax.xlane.f32.xlu0 %v2191
  %v2193 = vpop.xlane.xlu0 %2192
  %v2194 = vsel %vm419, %v2188, -inf
  %2195 = vmax.xlane.f32.xlu0 %v2194
  %v2196 = vpop.xlane.xlu0 %2195
  %v2197 = vsub.f32 %v2183, %v2193
  %v2198 = vsub.f32 %v2188, %v2196
  %v2199 = vmul.f32 %v2197, 1.442695
  %v2200 = vpow.pop %v2199
  %v2201 = vmul.f32 %v2198, 1.442695
  %v2202 = vpow.pop %v2201
  %v2203 = vsel %vm419, %v2200, 0.0
  %2204 = vadd.xlane.f32.xlu0 %v2203
  %v2205 = vpop.xlane.xlu0 %2204
  %v2206 = vsel %vm419, %v2202, 0.0
  %2207 = vadd.xlane.f32.xlu0 %v2206
  %v2208 = vpop.xlane.xlu0 %2207
  %v2209 = vrcp.pop %v2205
  %v2210 = vrcp.pop %v2208
  %v2211 = vmul.f32 %v2200, %v2209
  %v2212 = vmul.f32 %v2202, %v2210
  %v2214 = vsel %vm419, %v2211, 0
  %v2217 = vsel %vm419, %v2212, 0
  %2219 = vmatprep.subr.mxu0 0.0
  %2220 = vmatpush1.msra.mxu0 0.0
  %2221 = vmatprep.subr.mxu0 0.0
  %2222 = vmatpush1.msra.mxu0 0.0
  %2223 = vmatprep.subr.mxu0 0.0
  %2224 = vmatpush1.msra.mxu0 0.0
  %2225 = vmatprep.subr.mxu0 0.0
  %2226 = vmatpush1.msra.mxu0 0.0
  %2227 = vmatprep.subr.mxu0 0.0
  %2228 = vmatpush1.msra.mxu0 0.0
  %2229 = vmatprep.subr.mxu0 0.0
  %2230 = vmatpush1.msra.mxu0 0.0
  %2231 = vmatprep.subr.mxu0 0.0
  %2232 = vmatpush1.msra.mxu0 0.0
  %2233 = vmatprep.subr.mxu0 0.0
  %2234 = vmatpush1.msra.mxu0 0.0
  %2235 = vmatprep.subr.mxu0 0.0
  %2236 = vmatpush1.msra.mxu0 0.0
  %2237 = vmatprep.subr.mxu0 0.0
  %2238 = vmatpush1.msra.mxu0 0.0
  %2239 = vmatprep.subr.mxu0 0.0
  %2240 = vmatpush1.msra.mxu0 0.0
  %2241 = vmatprep.subr.mxu0 0.0
  %2242 = vmatpush1.msra.mxu0 0.0
  %2243 = vmatprep.subr.mxu0 0.0
  %2244 = vmatpush1.msra.mxu0 0.0
  %2245 = vmatprep.subr.mxu0 0.0
  %2246 = vmatpush1.msra.mxu0 0.0
  %2247 = vmatprep.subr.mxu0 0.0
  %2248 = vmatpush1.msra.mxu0 %v1616
  %2249 = vmatprep.subr.mxu0 0.0
  %2250 = vmatpush1.msra.mxu0 %v1614
  %2251 = vmatprep.subr.mxu0 0.0
  %2252 = vmatpush2.msra.mxu0 0.0
  %2253 = vmatprep.subr.mxu0 0.0
  %2254 = vmatpush2.msra.mxu0 0.0
  %2255 = vmatprep.subr.mxu0 0.0
  %2256 = vmatpush2.msra.mxu0 0.0
  %2257 = vmatprep.subr.mxu0 0.0
  %2258 = vmatpush2.msra.mxu0 0.0
  %2259 = vmatprep.subr.mxu0 0.0
  %2260 = vmatpush2.msra.mxu0 0.0
  %2261 = vmatprep.subr.mxu0 0.0
  %2262 = vmatpush2.msra.mxu0 0.0
  %2263 = vmatprep.subr.mxu0 0.0
  %2264 = vmatpush2.msra.mxu0 0.0
  %2265 = vmatprep.subr.mxu0 0.0
  %2266 = vmatpush2.msra.mxu0 0.0
  %2267 = vmatprep.subr.mxu0 0.0
  %2268 = vmatpush2.msra.mxu0 0.0
  %2269 = vmatprep.subr.mxu0 0.0
  %2270 = vmatpush2.msra.mxu0 0.0
  %2271 = vmatprep.subr.mxu0 0.0
  %2272 = vmatpush2.msra.mxu0 0.0
  %2273 = vmatprep.subr.mxu0 0.0
  %2274 = vmatpush2.msra.mxu0 0.0
  %2275 = vmatprep.subr.mxu0 0.0
  %2276 = vmatpush2.msra.mxu0 0.0
  %2277 = vmatprep.subr.mxu0 0.0
  %2278 = vmatpush2.msra.mxu0 0.0
  %2279 = vmatprep.subr.mxu0 0.0
  %2280 = vmatpush2.msra.mxu0 0.0
  %2281 = vmatprep.subr.mxu0 0.0
  %2282 = vmatpush2.msra.mxu0 0.0
  %2283 = vmatprep.mubr.f32.mxu0 0.0
  %2284 = vmatmul.mubr.f32.gmra.mxu0 %v2214
  %v2285 = vpop.f32.mrf.mxu0
  %v2286 = vadd.f32 0.0, %v2285
  %v2287 = vpop.f32.mrf.mxu0
  %2288 = vmatprep.mubr.f32.mxu0 0.0
  %2289 = vmatmul.mubr.f32.gmra.mxu0 %v2217
  %v2290 = vpop.f32.mrf.mxu0
  %v2291 = vadd.f32 0.0, %v2290
  %v2292 = vpop.f32.mrf.mxu0
  %2293 = vdwg.mxu0
  %v2294 = vmul.f32 %v2286, %v215
  %v2295 = vmul.f32 %v2291, %v215
  %v2296 = vadd.f32 %v2098, %v2294
  %v2297 = vadd.f32 %v2099, %v2295
  %v2298 = vpack.c.bf16 %v2297, %v2296
  %v2299 = vld [vmem:[%s1 + $0xe0] sm:$0xf]
  %v2300 = vld [vmem:[%s1 + $0xe4] sm:$0xf]
  %v2301 = vld [vmem:[%s1 + $0xe8] sm:$0xf]
  %v2302 = vld [vmem:[%s1 + $0xec] sm:$0xf]
  %v2303 = vlaneseq
  %v2304 = vshrl.u32 %v2303, 7
  %v2305 = vsub.s32 0, %v2304
  %v2306 = vrot.slane %v1394, %v2305
  %v2311 = vunpack.c.l.b16 %v2299
  %v2312 = vunpack.c.l.b16 %v2300
  %v2313 = vunpack.c.l.b16 %v2301
  %v2314 = vunpack.c.l.b16 %v2302
  %v2315 = vpack.c.b16 %v2312, %v2311
  %v2316 = vpack.c.b16 %v2314, %v2313
  %v2320 = vsel %vm224, %v2298, 0
  %2322 = vmatprep.subr.bf16.mxu0 0
  %2323 = vmatpush1.bf16.msra.mxu0 0
  %2324 = vmatprep.subr.bf16.mxu0 0
  %2325 = vmatpush1.bf16.msra.mxu0 0
  %2326 = vmatprep.subr.bf16.mxu0 0
  %2327 = vmatpush1.bf16.msra.mxu0 0
  %2328 = vmatprep.subr.bf16.mxu0 0
  %2329 = vmatpush1.bf16.msra.mxu0 0
  %2330 = vmatprep.subr.bf16.mxu0 0
  %2331 = vmatpush1.bf16.msra.mxu0 0
  %2332 = vmatprep.subr.bf16.mxu0 0
  %2333 = vmatpush1.bf16.msra.mxu0 0
  %2334 = vmatprep.subr.bf16.mxu0 0
  %2335 = vmatpush1.bf16.msra.mxu0 %v2316
  %2336 = vmatprep.subr.bf16.mxu0 0
  %2337 = vmatpush1.bf16.msra.mxu0 %v2315
  %2338 = vmatprep.subr.bf16.mxu0 0
  %2339 = vmatpush2.bf16.msra.mxu0 0
  %2340 = vmatprep.subr.bf16.mxu0 0
  %2341 = vmatpush2.bf16.msra.mxu0 0
  %2342 = vmatprep.subr.bf16.mxu0 0
  %2343 = vmatpush2.bf16.msra.mxu0 0
  %2344 = vmatprep.subr.bf16.mxu0 0
  %2345 = vmatpush2.bf16.msra.mxu0 0
  %2346 = vmatprep.subr.bf16.mxu0 0
  %2347 = vmatpush2.bf16.msra.mxu0 0
  %2348 = vmatprep.subr.bf16.mxu0 0
  %2349 = vmatpush2.bf16.msra.mxu0 0
  %2350 = vmatprep.subr.bf16.mxu0 0
  %2351 = vmatpush2.bf16.msra.mxu0 0
  %2352 = vmatprep.subr.bf16.mxu0 0
  %2353 = vmatpush2.bf16.msra.mxu0 0
  %2354 = vmatprep.mubr.bf16.mxu0 0
  %2355 = vmatmul.mubr.bf16.gmra.mxu0 %v2320
  %v2356 = vpop.f32.mrf.mxu0
  %v2357 = vadd.f32 %v2306, %v2356
  %v2358 = vpop.f32.mrf.mxu0
  %v2359 = vpop.f32.mrf.mxu0
  %v2360 = vadd.f32 %v2306, %v2359
  %v2361 = vpop.f32.mrf.mxu0
  %2362 = vdwg.mxu0
  %v2363 = vadd.f32 %v1389, %v2357
  %v2364 = vadd.f32 %v1390, %v2360
  %v2365 = vsel %vm224, %v2363, 0.0
  %2366 = vadd.xlane.f32.xlu0 %v2365
  %v2367 = vpop.xlane.xlu0 %2366
  %v2368 = vsel %vm224, %v2364, 0.0
  %2369 = vadd.xlane.f32.xlu0 %v2368
  %v2370 = vpop.xlane.xlu0 %2369
  %v2371 = vmul.f32 %v2367, %v231
  %v2372 = vmul.f32 %v2370, %v231
  %v2373 = vsub.f32 %v2363, %v2371
  %v2374 = vsub.f32 %v2364, %v2372
  %v2375 = vmul.f32 %v2373, %v2373
  %v2376 = vmul.f32 %v2374, %v2374
  %v2377 = vsel %vm224, %v2375, 0.0
  %2378 = vadd.xlane.f32.xlu0 %v2377
  %v2379 = vpop.xlane.xlu0 %2378
  %v2380 = vsel %vm224, %v2376, 0.0
  %2381 = vadd.xlane.f32.xlu0 %v2380
  %v2382 = vpop.xlane.xlu0 %2381
  %v2383 = vmul.f32 %v2379, %v231
  %v2384 = vmul.f32 %v2382, %v231
  %v2385 = vadd.f32 %v2383, 1e-05
  %v2386 = vadd.f32 %v2384, 1e-05
  %v2387 = vrsqrt.pop %v2385
  %v2388 = vrsqrt.pop %v2386
  %v2389 = vmul.f32 %v2373, %v2387
  %v2390 = vmul.f32 %v2374, %v2388
  %v2391 = vlaneseq
  %v2392 = vshrl.u32 %v2391, 7
  %v2393 = vsub.s32 0, %v2392
  %v2394 = vrot.slane %v1395, %v2393
  %v2395 = vmul.f32 %v2389, %v2394
  %v2396 = vmul.f32 %v2390, %v2394
  %v2397 = vlaneseq
  %v2398 = vshrl.u32 %v2397, 7
  %v2399 = vsub.s32 0, %v2398
  %v2400 = vrot.slane %v1396, %v2399
  %v2401 = vadd.f32 %v2395, %v2400
  %v2402 = vadd.f32 %v2396, %v2400
  %v2403 = vpack.c.bf16 %v2402, %v2401
  %v2404 = vld [vmem:[%s1 + $0xf0] sm:$0xf]
  %v2405 = vld [vmem:[%s1 + $0xf4] sm:$0xf]
  %v2406 = vld [vmem:[%s1 + $0xf8] sm:$0xf]
  %v2407 = vld [vmem:[%s1 + $0xfc] sm:$0xf]
  %v2408 = vlaneseq
  %v2409 = vshrl.u32 %v2408, 7
  %v2410 = vsub.s32 0, %v2409
  %v2411 = vrot.slane %v1397, %v2410
  %v2416 = vunpack.c.l.b16 %v2404
  %v2417 = vunpack.c.l.b16 %v2405
  %v2418 = vunpack.c.l.b16 %v2406
  %v2419 = vunpack.c.l.b16 %v2407
  %v2420 = vpack.c.b16 %v2417, %v2416
  %v2421 = vpack.c.b16 %v2419, %v2418
  %v2425 = vsel %vm224, %v2403, 0
  %2427 = vmatprep.subr.bf16.mxu0 0
  %2428 = vmatpush1.bf16.msra.mxu0 0
  %2429 = vmatprep.subr.bf16.mxu0 0
  %2430 = vmatpush1.bf16.msra.mxu0 0
  %2431 = vmatprep.subr.bf16.mxu0 0
  %2432 = vmatpush1.bf16.msra.mxu0 0
  %2433 = vmatprep.subr.bf16.mxu0 0
  %2434 = vmatpush1.bf16.msra.mxu0 0
  %2435 = vmatprep.subr.bf16.mxu0 0
  %2436 = vmatpush1.bf16.msra.mxu0 0
  %2437 = vmatprep.subr.bf16.mxu0 0
  %2438 = vmatpush1.bf16.msra.mxu0 0
  %2439 = vmatprep.subr.bf16.mxu0 0
  %2440 = vmatpush1.bf16.msra.mxu0 %v2421
  %2441 = vmatprep.subr.bf16.mxu0 0
  %2442 = vmatpush1.bf16.msra.mxu0 %v2420
  %2443 = vmatprep.subr.bf16.mxu0 0
  %2444 = vmatpush2.bf16.msra.mxu0 0
  %2445 = vmatprep.subr.bf16.mxu0 0
  %2446 = vmatpush2.bf16.msra.mxu0 0
  %2447 = vmatprep.subr.bf16.mxu0 0
  %2448 = vmatpush2.bf16.msra.mxu0 0
  %2449 = vmatprep.subr.bf16.mxu0 0
  %2450 = vmatpush2.bf16.msra.mxu0 0
  %2451 = vmatprep.subr.bf16.mxu0 0
  %2452 = vmatpush2.bf16.msra.mxu0 0
  %2453 = vmatprep.subr.bf16.mxu0 0
  %2454 = vmatpush2.bf16.msra.mxu0 0
  %2455 = vmatprep.subr.bf16.mxu0 0
  %2456 = vmatpush2.bf16.msra.mxu0 0
  %2457 = vmatprep.subr.bf16.mxu0 0
  %2458 = vmatpush2.bf16.msra.mxu0 0
  %2459 = vmatprep.mubr.bf16.mxu0 0
  %2460 = vmatmul.mubr.bf16.gmra.mxu0 %v2425
  %v2461 = vpop.f32.mrf.mxu0
  %v2462 = vadd.f32 %v2411, %v2461
  %v2463 = vpop.f32.mrf.mxu0
  %v2464 = vpop.f32.mrf.mxu0
  %v2465 = vadd.f32 %v2411, %v2464
  %v2466 = vpop.f32.mrf.mxu0
  %2467 = vdwg.mxu0
  %v2468 = vmul.f32 %v2462, 0.5
  %v2469 = vmul.f32 %v2465, 0.5
  %v2470 = vmul.f32 %v2462, 0.70710677
  %v2471 = vmul.f32 %v2465, 0.70710677
  %v2472 = verf.f32.pop %v2470
  %v2473 = verf.f32.pop %v2471
  %v2474 = vadd.f32 %v2472, 1.0
  %v2475 = vadd.f32 %v2473, 1.0
  %v2476 = vmul.f32 %v2468, %v2474
  %v2477 = vmul.f32 %v2469, %v2475
  %v2478 = vpack.c.bf16 %v2477, %v2476
  %v2479 = vld [vmem:[%s1 + $0x100] sm:$0xf]
  %v2480 = vld [vmem:[%s1 + $0x104] sm:$0xf]
  %v2481 = vld [vmem:[%s1 + $0x108] sm:$0xf]
  %v2482 = vld [vmem:[%s1 + $0x10c] sm:$0xf]
  %v2483 = vld [vmem:[%s1 + $0x110] sm:$0xf]
  %v2484 = vld [vmem:[%s1 + $0x114] sm:$0xf]
  %v2485 = vld [vmem:[%s1 + $0x118] sm:$0xf]
  %v2486 = vld [vmem:[%s1 + $0x11c] sm:$0xf]
  %v2487 = vlaneseq
  %v2488 = vshrl.u32 %v2487, 7
  %v2489 = vsub.s32 0, %v2488
  %v2490 = vrot.slane %v1398, %v2489
  %v2499 = vunpack.c.l.b16 %v2479
  %v2500 = vunpack.c.l.b16 %v2480
  %v2501 = vunpack.c.l.b16 %v2481
  %v2502 = vunpack.c.l.b16 %v2482
  %v2503 = vunpack.c.l.b16 %v2483
  %v2504 = vunpack.c.l.b16 %v2484
  %v2505 = vunpack.c.l.b16 %v2485
  %v2506 = vunpack.c.l.b16 %v2486
  %v2507 = vpack.c.b16 %v2500, %v2499
  %v2508 = vpack.c.b16 %v2502, %v2501
  %v2509 = vpack.c.b16 %v2504, %v2503
  %v2510 = vpack.c.b16 %v2506, %v2505
  %v2516 = vsel %vm1344, %v2478, 0
  %2518 = vmatprep.subr.bf16.mxu0 0
  %2519 = vmatpush1.bf16.msra.mxu0 0
  %2520 = vmatprep.subr.bf16.mxu0 0
  %2521 = vmatpush1.bf16.msra.mxu0 0
  %2522 = vmatprep.subr.bf16.mxu0 0
  %2523 = vmatpush1.bf16.msra.mxu0 0
  %2524 = vmatprep.subr.bf16.mxu0 0
  %2525 = vmatpush1.bf16.msra.mxu0 0
  %2526 = vmatprep.subr.bf16.mxu0 0
  %2527 = vmatpush1.bf16.msra.mxu0 %v2510
  %2528 = vmatprep.subr.bf16.mxu0 0
  %2529 = vmatpush1.bf16.msra.mxu0 %v2509
  %2530 = vmatprep.subr.bf16.mxu0 0
  %2531 = vmatpush1.bf16.msra.mxu0 %v2508
  %2532 = vmatprep.subr.bf16.mxu0 0
  %2533 = vmatpush1.bf16.msra.mxu0 %v2507
  %2534 = vmatprep.subr.bf16.mxu0 0
  %2535 = vmatpush2.bf16.msra.mxu0 0
  %2536 = vmatprep.subr.bf16.mxu0 0
  %2537 = vmatpush2.bf16.msra.mxu0 0
  %2538 = vmatprep.subr.bf16.mxu0 0
  %2539 = vmatpush2.bf16.msra.mxu0 0
  %2540 = vmatprep.subr.bf16.mxu0 0
  %2541 = vmatpush2.bf16.msra.mxu0 0
  %2542 = vmatprep.subr.bf16.mxu0 0
  %2543 = vmatpush2.bf16.msra.mxu0 0
  %2544 = vmatprep.subr.bf16.mxu0 0
  %2545 = vmatpush2.bf16.msra.mxu0 0
  %2546 = vmatprep.subr.bf16.mxu0 0
  %2547 = vmatpush2.bf16.msra.mxu0 0
  %2548 = vmatprep.subr.bf16.mxu0 0
  %2549 = vmatpush2.bf16.msra.mxu0 0
  %2550 = vmatprep.mubr.bf16.mxu0 0
  %2551 = vmatmul.mubr.bf16.gmra.mxu0 %v2516
  %v2552 = vpop.f32.mrf.mxu0
  %v2553 = vadd.f32 %v2490, %v2552
  %v2554 = vpop.f32.mrf.mxu0
  %v2555 = vpop.f32.mrf.mxu0
  %v2556 = vpop.f32.mrf.mxu0
  %2557 = vdwg.mxu0
  %v2558 = vadd.f32 %v2363, %v2553
  %v2559 = vld [vmem:[%s2 + $0x30] sm:$0x1]
  %v2560 = vld [vmem:[%s2 + $0x31] sm:$0x1]
  %v2561 = vsel %vm224, %v2558, 0.0
  %2562 = vadd.xlane.f32.xlu0 %v2561
  %v2563 = vpop.xlane.xlu0 %2562
  %v2564 = vmul.f32 %v2563, %v231
  %v2565 = vsub.f32 %v2558, %v2564
  %v2566 = vmul.f32 %v2565, %v2565
  %v2567 = vsel %vm224, %v2566, 0.0
  %2568 = vadd.xlane.f32.xlu0 %v2567
  %v2569 = vpop.xlane.xlu0 %2568
  %v2570 = vmul.f32 %v2569, %v231
  %v2571 = vadd.f32 %v2570, 1e-05
  %v2572 = vrsqrt.pop %v2571
  %v2573 = vmul.f32 %v2565, %v2572
  %v2574 = vlaneseq
  %v2575 = vshrl.u32 %v2574, 7
  %v2576 = vsub.s32 0, %v2575
  %v2577 = vrot.slane %v2559, %v2576
  %v2578 = vmul.f32 %v2573, %v2577
  %v2579 = vlaneseq
  %v2580 = vshrl.u32 %v2579, 7
  %v2581 = vsub.s32 0, %v2580
  %v2582 = vrot.slane %v2560, %v2581
  %v2583 = vadd.f32 %v2578, %v2582
  %v2584 = vpack.c.bf16 %v2583, %v2583
  %v2585 = vld [vmem:[%s1 + $0x120] sm:$0xf]
  %v2586 = vld [vmem:[%s1 + $0x124] sm:$0xf]
  %v2587 = vld [vmem:[%s1 + $0x128] sm:$0xf]
  %v2588 = vld [vmem:[%s1 + $0x12c] sm:$0xf]
  %v2589 = vld [vmem:[%s2 + $0x32] sm:$0x1]
  %v2590 = vlaneseq
  %v2591 = vshrl.u32 %v2590, 7
  %v2592 = vsub.s32 0, %v2591
  %v2593 = vrot.slane %v2589, %v2592
  %v2598 = vunpack.c.l.b16 %v2585
  %v2599 = vunpack.c.l.b16 %v2586
  %v2600 = vunpack.c.l.b16 %v2587
  %v2601 = vunpack.c.l.b16 %v2588
  %v2602 = vpack.c.b16 %v2599, %v2598
  %v2603 = vpack.c.b16 %v2601, %v2600
  %v2607 = vsel %vm224, %v2584, 0
  %2609 = vmatprep.subr.bf16.mxu0 0
  %2610 = vmatpush1.bf16.msra.mxu0 0
  %2611 = vmatprep.subr.bf16.mxu0 0
  %2612 = vmatpush1.bf16.msra.mxu0 0
  %2613 = vmatprep.subr.bf16.mxu0 0
  %2614 = vmatpush1.bf16.msra.mxu0 0
  %2615 = vmatprep.subr.bf16.mxu0 0
  %2616 = vmatpush1.bf16.msra.mxu0 0
  %2617 = vmatprep.subr.bf16.mxu0 0
  %2618 = vmatpush1.bf16.msra.mxu0 0
  %2619 = vmatprep.subr.bf16.mxu0 0
  %2620 = vmatpush1.bf16.msra.mxu0 0
  %2621 = vmatprep.subr.bf16.mxu0 0
  %2622 = vmatpush1.bf16.msra.mxu0 %v2603
  %2623 = vmatprep.subr.bf16.mxu0 0
  %2624 = vmatpush1.bf16.msra.mxu0 %v2602
  %2625 = vmatprep.subr.bf16.mxu0 0
  %2626 = vmatpush2.bf16.msra.mxu0 0
  %2627 = vmatprep.subr.bf16.mxu0 0
  %2628 = vmatpush2.bf16.msra.mxu0 0
  %2629 = vmatprep.subr.bf16.mxu0 0
  %2630 = vmatpush2.bf16.msra.mxu0 0
  %2631 = vmatprep.subr.bf16.mxu0 0
  %2632 = vmatpush2.bf16.msra.mxu0 0
  %2633 = vmatprep.subr.bf16.mxu0 0
  %2634 = vmatpush2.bf16.msra.mxu0 0
  %2635 = vmatprep.subr.bf16.mxu0 0
  %2636 = vmatpush2.bf16.msra.mxu0 0
  %2637 = vmatprep.subr.bf16.mxu0 0
  %2638 = vmatpush2.bf16.msra.mxu0 0
  %2639 = vmatprep.subr.bf16.mxu0 0
  %2640 = vmatpush2.bf16.msra.mxu0 0
  %2641 = vmatprep.mubr.bf16.mxu0 0
  %2642 = vmatmul.mubr.bf16.gmra.mxu0 %v2607
  %v2643 = vpop.f32.mrf.mxu0
  %v2644 = vadd.f32 %v2593, %v2643
  %v2645 = vpop.f32.mrf.mxu0
  %v2646 = vpop.f32.mrf.mxu0
  %v2647 = vpop.f32.mrf.mxu0
  %2648 = vdwg.mxu0
  %v2649 = vmul.f32 %v2644, 0.5
  %v2650 = vmul.f32 %v2644, 0.70710677
  %v2651 = verf.f32.pop %v2650
  %v2652 = vadd.f32 %v2651, 1.0
  %v2653 = vmul.f32 %v2649, %v2652
  %v2654 = vpack.c.bf16 %v2653, %v2653
  %v2655 = vld [vmem:[%s1 + $0x130] sm:$0xf]
  %v2656 = vld [vmem:[%s1 + $0x134] sm:$0xf]
  %v2657 = vld [vmem:[%s1 + $0x138] sm:$0xf]
  %v2658 = vld [vmem:[%s1 + $0x13c] sm:$0xf]
  %v2659 = vld [vmem:[%s1 + $0x140] sm:$0xf]
  %v2660 = vld [vmem:[%s1 + $0x144] sm:$0xf]
  %v2661 = vld [vmem:[%s1 + $0x148] sm:$0xf]
  %v2662 = vld [vmem:[%s1 + $0x14c] sm:$0xf]
  %v2663 = vld [vmem:[%s2 + $0x33] sm:$0x1]
  %v2664 = vlaneseq
  %v2665 = vshrl.u32 %v2664, 7
  %v2666 = vsub.s32 0, %v2665
  %v2667 = vrot.slane %v2663, %v2666
  %v2676 = vunpack.c.l.b16 %v2655
  %v2677 = vunpack.c.l.b16 %v2656
  %v2678 = vunpack.c.l.b16 %v2657
  %v2679 = vunpack.c.l.b16 %v2658
  %v2680 = vunpack.c.l.b16 %v2659
  %v2681 = vunpack.c.l.b16 %v2660
  %v2682 = vunpack.c.l.b16 %v2661
  %v2683 = vunpack.c.l.b16 %v2662
  %v2684 = vpack.c.b16 %v2677, %v2676
  %v2685 = vpack.c.b16 %v2679, %v2678
  %v2686 = vpack.c.b16 %v2681, %v2680
  %v2687 = vpack.c.b16 %v2683, %v2682
  %v2693 = vsel %vm1344, %v2654, 0
  %2695 = vmatprep.subr.bf16.mxu0 0
  %2696 = vmatpush1.bf16.msra.mxu0 0
  %2697 = vmatprep.subr.bf16.mxu0 0
  %2698 = vmatpush1.bf16.msra.mxu0 0
  %2699 = vmatprep.subr.bf16.mxu0 0
  %2700 = vmatpush1.bf16.msra.mxu0 0
  %2701 = vmatprep.subr.bf16.mxu0 0
  %2702 = vmatpush1.bf16.msra.mxu0 0
  %2703 = vmatprep.subr.bf16.mxu0 0
  %2704 = vmatpush1.bf16.msra.mxu0 %v2687
  %2705 = vmatprep.subr.bf16.mxu0 0
  %2706 = vmatpush1.bf16.msra.mxu0 %v2686
  %2707 = vmatprep.subr.bf16.mxu0 0
  %2708 = vmatpush1.bf16.msra.mxu0 %v2685
  %2709 = vmatprep.subr.bf16.mxu0 0
  %2710 = vmatpush1.bf16.msra.mxu0 %v2684
  %2711 = vmatprep.subr.bf16.mxu0 0
  %2712 = vmatpush2.bf16.msra.mxu0 0
  %2713 = vmatprep.subr.bf16.mxu0 0
  %2714 = vmatpush2.bf16.msra.mxu0 0
  %2715 = vmatprep.subr.bf16.mxu0 0
  %2716 = vmatpush2.bf16.msra.mxu0 0
  %2717 = vmatprep.subr.bf16.mxu0 0
  %2718 = vmatpush2.bf16.msra.mxu0 0
  %2719 = vmatprep.subr.bf16.mxu0 0
  %2720 = vmatpush2.bf16.msra.mxu0 0
  %2721 = vmatprep.subr.bf16.mxu0 0
  %2722 = vmatpush2.bf16.msra.mxu0 0
  %2723 = vmatprep.subr.bf16.mxu0 0
  %2724 = vmatpush2.bf16.msra.mxu0 0
  %2725 = vmatprep.subr.bf16.mxu0 0
  %2726 = vmatpush2.bf16.msra.mxu0 0
  %2727 = vmatprep.mubr.bf16.mxu0 0
  %2728 = vmatmul.mubr.bf16.gmra.mxu0 %v2693
  %v2729 = vpop.f32.mrf.mxu0
  %v2730 = vadd.f32 %v2667, %v2729
  %v2731 = vpop.f32.mrf.mxu0
  %v2732 = vpop.f32.mrf.mxu0
  %v2733 = vpop.f32.mrf.mxu0
  %2734 = vdwg.mxu0
  %2735 = vst [vmem:[%s3] sm:$0xff] %v2730
  // Predicated region
  $region14: #{vit_forward.1} parent=0 // pred_check
    _
  $region15: #{vit_forward.1} parent=0 // pred_check_branch
    %2737 = sbr.rel (0) target = $region17
  $region16: #{vit_forward.1} parent=0 // pred_region
    _
  $region17: #{vit_forward.1} parent=0 // pred_fallthru
    _
  // Predicated region
  $region18: #{vit_forward.1} parent=0 // pred_check
    _
  $region19: #{vit_forward.1} parent=0 // pred_check_branch
    %2739 = sbr.rel (0) target = $region21
  $region20: #{vit_forward.1} parent=0 // pred_region
    _
  $region21: #{vit_forward.1} parent=0 // pred_fallthru
    _

</llo_original>
